<compile_context>
chip_gen: v6e
topology: v6e:2x2x1
jax: 0.10.0
libtpu: 0.0.40
codegen_flags: <defaults>
</compile_context>

<pallas_src>
import functools

import jax
import jax.numpy as jnp
from jax import lax
from jax.experimental import pallas as pl
from jax.experimental.pallas import tpu as pltpu


def _round_up(x, m):
    return (x + m - 1) // m * m


def _style_vectorizer_kernel(x_ref,
                             w1_ref, b1_ref,
                             w2_ref, b2_ref,
                             w3_ref, b3_ref,
                             o_ref):
    """Fused 3-layer MLP: (Linear -> LeakyReLU(0.2)) x 3, all in VMEM.

    Weights arrive in the original nn.Linear (out, in) layout as bf16. Each
    layer contracts the activation feature axis with W's `in` axis (an NT
    matmul, lowered natively on the MXU) with f32 accumulation. Bias add and
    LeakyReLU stay in f32.
    """
    h = x_ref[...].astype(jnp.float32)
    for w_ref, b_ref in ((w1_ref, b1_ref), (w2_ref, b2_ref), (w3_ref, b3_ref)):
        # y = h @ W.T : contract h's dim 1 with W's dim 1 (W is (out, in)).
        y = lax.dot_general(
            h.astype(jnp.bfloat16), w_ref[...],
            dimension_numbers=(((1,), (1,)), ((), ())),
            preferred_element_type=jnp.float32)
        h = y + b_ref[...]                     # (1, E) f32 broadcasts over rows
        h = jnp.where(h > 0.0, h, 0.2 * h)     # LeakyReLU(negative_slope=0.2)
    o_ref[...] = h.astype(o_ref.dtype)


@functools.partial(jax.jit, static_argnames=("block_b",))
def style_vectorizer(x, params, *, block_b=256):
    """x: (B, E) float32. params: list of 3 (W, b), W (E, E) in (out,in) layout, b (E,)."""
    B, E = x.shape

    # Alignment: feature dim -> multiple of 128 (lane-dense output stores),
    # batch dim -> multiple of the batch tile (multiple of 8 sublanes).
    E_pad = _round_up(E, 128)
    bb = _round_up(min(block_b, _round_up(B, 8)), 8)
    B_pad = _round_up(B, bb)

    x_p = x
    if (B_pad, E_pad) != (B, E):
        x_p = jnp.pad(x, ((0, B_pad - B), (0, E_pad - E)))

    # Weights kept in (out, in) layout (no per-call transpose), cast to bf16
    # for the MXU (halves weight HBM/VMEM footprint; f32 accumulation kept).
    flat = []
    for w, b in params:
        w = jnp.asarray(w)
        b = jnp.asarray(b)
        if w.shape != (E_pad, E_pad):
            w = jnp.pad(w, ((0, E_pad - w.shape[0]), (0, E_pad - w.shape[1])))
        if b.shape[0] != E_pad:
            b = jnp.pad(b, (0, E_pad - b.shape[0]))
        flat.append(w.astype(jnp.bfloat16))
        flat.append(b.astype(jnp.float32).reshape(1, E_pad))

    grid = (B_pad // bb,)

    x_spec = pl.BlockSpec((bb, E_pad), lambda i: (i, 0))
    # Weights/biases resident (constant block index) across the parallel batch axis.
    # TODO(synk): for E >= 1024 on v7x (64 MiB VMEM), single-buffer these constant
    # blocks (pipeline_mode=pl.Buffered(1)) instead of shrinking the batch tile.
    w_spec = pl.BlockSpec((E_pad, E_pad), lambda i: (0, 0))
    b_spec = pl.BlockSpec((1, E_pad), lambda i: (0, 0))
    o_spec = pl.BlockSpec((bb, E_pad), lambda i: (i, 0))

    flops = 2 * 3 * B_pad * E_pad * E_pad
    bytes_accessed = (B_pad * E_pad * 4                 # x
                      + 3 * E_pad * E_pad * 2           # bf16 weights
                      + 3 * E_pad * 4                   # biases
                      + B_pad * E_pad * 4)              # output

    out = pl.pallas_call(
        _style_vectorizer_kernel,
        out_shape=jax.ShapeDtypeStruct((B_pad, E_pad), x.dtype),
        grid_spec=pl.GridSpec(
            grid=grid,
            in_specs=[x_spec,
                      w_spec, b_spec,
                      w_spec, b_spec,
                      w_spec, b_spec],
            out_specs=o_spec),
        compiler_params=pltpu.CompilerParams(
            dimension_semantics=("parallel",),
            vmem_limit_bytes=48 * 1024 * 1024),   # > 32 MiB default, < v7x 64 MiB
        cost_estimate=pl.CostEstimate(
            flops=flops, transcendentals=0, bytes_accessed=bytes_accessed),
    )(x_p, *flat)

    if (B_pad, E_pad) != (B, E):
        out = out[:B, :E]
    return out


def _reference(x, params):
    """Pure-JAX f32 reference matching torch semantics: F.linear + leaky_relu(0.2)."""
    h = x
    for w, b in params:
        h = h @ w.T + b
        h = jnp.where(h > 0, h, 0.2 * h)
    return h


if __name__ == "__main__":
    # emb_num=512 is the module default; B=300 exercises the padded last tile
    # and gives a 2-step grid (both TensorCores on v7x).
    B, E, DEPTH = 300, 512, 3

    key = jax.random.PRNGKey(0)
    keys = jax.random.split(key, 2 * DEPTH + 1)

    x = jax.random.normal(keys[0], (B, E), dtype=jnp.float32)

    # Deterministic synthetic parameters (nn.Linear shapes: W (out,in), b (out,)).
    params = []
    for i in range(DEPTH):
        w = jax.random.normal(keys[1 + 2 * i], (E, E), dtype=jnp.float32) / jnp.sqrt(E)
        b = jax.random.normal(keys[2 + 2 * i], (E,), dtype=jnp.float32) * 0.01
        params.append((w, b))

    out = jax.block_until_ready(style_vectorizer(x, params, block_b=256))
    ref = _reference(x, params)

    assert out.shape == (B, E)
    # bf16 MXU operands with f32 accumulation -> a few-percent relative error
    # vs the pure-f32 reference is expected and acceptable for this style MLP.
    rel_err = float(jnp.max(jnp.abs(out - ref)) / (jnp.max(jnp.abs(ref)) + 1e-6))
    assert rel_err < 5e-2, f"mismatch vs reference: max rel err {rel_err}"

    print("KERNEL_OK")
</pallas_src>

<mosaic_0001>
module attributes {stable_mosaic.version = 11 : i64} {
  func.func @_style_vectorizer_kernel(%arg0: i32, %arg1: memref<256x512xf32, #tpu.memory_space<vmem>>, %arg2: memref<512x512xbf16, #tpu.memory_space<vmem>>, %arg3: memref<1x512xf32, #tpu.memory_space<vmem>>, %arg4: memref<512x512xbf16, #tpu.memory_space<vmem>>, %arg5: memref<1x512xf32, #tpu.memory_space<vmem>>, %arg6: memref<512x512xbf16, #tpu.memory_space<vmem>>, %arg7: memref<1x512xf32, #tpu.memory_space<vmem>>, %arg8: memref<256x512xf32, #tpu.memory_space<vmem>>) attributes {dimension_semantics = [#tpu.dimension_semantics<parallel>], iteration_bounds = array<i64: 2>, scalar_prefetch = 0 : i64, scratch_operands = 0 : i64, tpu.core_type = #tpu.core_type<tc>, window_params = [{transform_indices = @transform_0, window_bounds = array<i64: 256, 512>}, {pipeline_mode = #tpu.pipeline_mode<synchronous>, transform_indices = @transform_1, window_bounds = array<i64: 512, 512>}, {pipeline_mode = #tpu.pipeline_mode<synchronous>, transform_indices = @transform_2, window_bounds = array<i64: 1, 512>}, {pipeline_mode = #tpu.pipeline_mode<synchronous>, transform_indices = @transform_3, window_bounds = array<i64: 512, 512>}, {pipeline_mode = #tpu.pipeline_mode<synchronous>, transform_indices = @transform_4, window_bounds = array<i64: 1, 512>}, {pipeline_mode = #tpu.pipeline_mode<synchronous>, transform_indices = @transform_5, window_bounds = array<i64: 512, 512>}, {pipeline_mode = #tpu.pipeline_mode<synchronous>, transform_indices = @transform_6, window_bounds = array<i64: 1, 512>}, {transform_indices = @transform_7, window_bounds = array<i64: 256, 512>}]} {
    %c0 = arith.constant 0 : index
    %c0_0 = arith.constant 0 : index
    %0 = vector.load %arg1[%c0, %c0_0] : memref<256x512xf32, #tpu.memory_space<vmem>>, vector<256x512xf32>
    %1 = arith.truncf %0 : vector<256x512xf32> to vector<256x512xbf16>
    %c0_1 = arith.constant 0 : index
    %c0_2 = arith.constant 0 : index
    %2 = vector.load %arg2[%c0_1, %c0_2] : memref<512x512xbf16, #tpu.memory_space<vmem>>, vector<512x512xbf16>
    %cst = arith.constant dense<0.000000e+00> : vector<256x512xf32>
    %3 = tpu.matmul %1, %2, %cst {dimension_numbers = #tpu.dot_dimension_numbers<[1], [1], [0], [0], [0, 0, 1, 0], [], []>} : vector<256x512xbf16>, vector<512x512xbf16>, vector<256x512xf32> -> vector<256x512xf32>
    %c0_3 = arith.constant 0 : index
    %c0_4 = arith.constant 0 : index
    %4 = vector.load %arg3[%c0_3, %c0_4] : memref<1x512xf32, #tpu.memory_space<vmem>>, vector<1x512xf32>
    %5 = vector.broadcast %4 : vector<1x512xf32> to vector<256x512xf32>
    %6 = arith.addf %3, %5 : vector<256x512xf32>
    %cst_5 = arith.constant 0.000000e+00 : f32
    %7 = vector.broadcast %cst_5 : f32 to vector<256x512xf32>
    %8 = arith.cmpf ogt, %6, %7 : vector<256x512xf32>
    %cst_6 = arith.constant 2.000000e-01 : f32
    %9 = vector.broadcast %cst_6 : f32 to vector<256x512xf32>
    %10 = arith.mulf %9, %6 : vector<256x512xf32>
    %11 = arith.select %8, %6, %10 : vector<256x512xi1>, vector<256x512xf32>
    %12 = arith.truncf %11 : vector<256x512xf32> to vector<256x512xbf16>
    %c0_7 = arith.constant 0 : index
    %c0_8 = arith.constant 0 : index
    %13 = vector.load %arg4[%c0_7, %c0_8] : memref<512x512xbf16, #tpu.memory_space<vmem>>, vector<512x512xbf16>
    %cst_9 = arith.constant dense<0.000000e+00> : vector<256x512xf32>
    %14 = tpu.matmul %12, %13, %cst_9 {dimension_numbers = #tpu.dot_dimension_numbers<[1], [1], [0], [0], [0, 0, 1, 0], [], []>} : vector<256x512xbf16>, vector<512x512xbf16>, vector<256x512xf32> -> vector<256x512xf32>
    %c0_10 = arith.constant 0 : index
    %c0_11 = arith.constant 0 : index
    %15 = vector.load %arg5[%c0_10, %c0_11] : memref<1x512xf32, #tpu.memory_space<vmem>>, vector<1x512xf32>
    %16 = vector.broadcast %15 : vector<1x512xf32> to vector<256x512xf32>
    %17 = arith.addf %14, %16 : vector<256x512xf32>
    %cst_12 = arith.constant 0.000000e+00 : f32
    %18 = vector.broadcast %cst_12 : f32 to vector<256x512xf32>
    %19 = arith.cmpf ogt, %17, %18 : vector<256x512xf32>
    %cst_13 = arith.constant 2.000000e-01 : f32
    %20 = vector.broadcast %cst_13 : f32 to vector<256x512xf32>
    %21 = arith.mulf %20, %17 : vector<256x512xf32>
    %22 = arith.select %19, %17, %21 : vector<256x512xi1>, vector<256x512xf32>
    %23 = arith.truncf %22 : vector<256x512xf32> to vector<256x512xbf16>
    %c0_14 = arith.constant 0 : index
    %c0_15 = arith.constant 0 : index
    %24 = vector.load %arg6[%c0_14, %c0_15] : memref<512x512xbf16, #tpu.memory_space<vmem>>, vector<512x512xbf16>
    %cst_16 = arith.constant dense<0.000000e+00> : vector<256x512xf32>
    %25 = tpu.matmul %23, %24, %cst_16 {dimension_numbers = #tpu.dot_dimension_numbers<[1], [1], [0], [0], [0, 0, 1, 0], [], []>} : vector<256x512xbf16>, vector<512x512xbf16>, vector<256x512xf32> -> vector<256x512xf32>
    %c0_17 = arith.constant 0 : index
    %c0_18 = arith.constant 0 : index
    %26 = vector.load %arg7[%c0_17, %c0_18] : memref<1x512xf32, #tpu.memory_space<vmem>>, vector<1x512xf32>
    %27 = vector.broadcast %26 : vector<1x512xf32> to vector<256x512xf32>
    %28 = arith.addf %25, %27 : vector<256x512xf32>
    %cst_19 = arith.constant 0.000000e+00 : f32
    %29 = vector.broadcast %cst_19 : f32 to vector<256x512xf32>
    %30 = arith.cmpf ogt, %28, %29 : vector<256x512xf32>
    %cst_20 = arith.constant 2.000000e-01 : f32
    %31 = vector.broadcast %cst_20 : f32 to vector<256x512xf32>
    %32 = arith.mulf %31, %28 : vector<256x512xf32>
    %33 = arith.select %30, %28, %32 : vector<256x512xi1>, vector<256x512xf32>
    %c0_21 = arith.constant 0 : index
    %c0_22 = arith.constant 0 : index
    %34 = vector.load %arg8[%c0_21, %c0_22] : memref<256x512xf32, #tpu.memory_space<vmem>>, vector<256x512xf32>
    tpu.vector_store %arg8[%c0_21, %c0_22], %33 {strides = array<i32>} : memref<256x512xf32, #tpu.memory_space<vmem>>, vector<256x512xf32>,
    return
  }
  func.func @transform_0(%arg0: i32) -> (i32, i32) {
    %c0_i32 = arith.constant 0 : i32
    %c0_i32_0 = arith.constant 0 : i32
    return %arg0, %c0_i32 : i32, i32
  }
  func.func @transform_1(%arg0: i32) -> (i32, i32) {
    %c0_i32 = arith.constant 0 : i32
    %c0_i32_0 = arith.constant 0 : i32
    %c0_i32_1 = arith.constant 0 : i32
    return %c0_i32, %c0_i32_0 : i32, i32
  }
  func.func @transform_2(%arg0: i32) -> (i32, i32) {
    %c0_i32 = arith.constant 0 : i32
    %c0_i32_0 = arith.constant 0 : i32
    %c0_i32_1 = arith.constant 0 : i32
    return %c0_i32, %c0_i32_0 : i32, i32
  }
  func.func @transform_3(%arg0: i32) -> (i32, i32) {
    %c0_i32 = arith.constant 0 : i32
    %c0_i32_0 = arith.constant 0 : i32
    %c0_i32_1 = arith.constant 0 : i32
    return %c0_i32, %c0_i32_0 : i32, i32
  }
  func.func @transform_4(%arg0: i32) -> (i32, i32) {
    %c0_i32 = arith.constant 0 : i32
    %c0_i32_0 = arith.constant 0 : i32
    %c0_i32_1 = arith.constant 0 : i32
    return %c0_i32, %c0_i32_0 : i32, i32
  }
  func.func @transform_5(%arg0: i32) -> (i32, i32) {
    %c0_i32 = arith.constant 0 : i32
    %c0_i32_0 = arith.constant 0 : i32
    %c0_i32_1 = arith.constant 0 : i32
    return %c0_i32, %c0_i32_0 : i32, i32
  }
  func.func @transform_6(%arg0: i32) -> (i32, i32) {
    %c0_i32 = arith.constant 0 : i32
    %c0_i32_0 = arith.constant 0 : i32
    %c0_i32_1 = arith.constant 0 : i32
    return %c0_i32, %c0_i32_0 : i32, i32
  }
  func.func @transform_7(%arg0: i32) -> (i32, i32) {
    %c0_i32 = arith.constant 0 : i32
    %c0_i32_0 = arith.constant 0 : i32
    return %arg0, %c0_i32 : i32, i32
  }
}

</mosaic_0001>

<llo_original>
// kernel: style_vectorizer.1
$region0: #{style_vectorizer.1}
  #allocation0 [shape = 'u32[]', space=smem, size = 0x4, offset = 0x4, fixed_abs, tag = 'smem constant byte address 0x4 - core index']
  #allocation1 [shape = 'u32[144,128]{1,0:T(1,128)}', space=vmem, size = 0x12000, scoped, tag = 'internal scratch']
  %s0 = inlined_call_operand.vmem [shape: f32[512,512], index: 0, kind: input, shape index: {}]
  %s1 = inlined_call_operand.vmem [shape: bf16[512,512], index: 1, kind: input, shape index: {}]
  %s2 = inlined_call_operand.vmem [shape: f32[1,512], index: 2, kind: input, shape index: {}]
  %s3 = inlined_call_operand.vmem [shape: bf16[512,512], index: 3, kind: input, shape index: {}]
  %s4 = inlined_call_operand.vmem [shape: f32[1,512], index: 4, kind: input, shape index: {}]
  %s5 = inlined_call_operand.vmem [shape: bf16[512,512], index: 5, kind: input, shape index: {}]
  %s6 = inlined_call_operand.vmem [shape: f32[1,512], index: 6, kind: input, shape index: {}]
  %s7 = inlined_call_operand.vmem [shape: f32[512,512], index: 7, kind: output, shape index: {}]
  %s8 = sld [smem:[#allocation0]]
  $region61: #{style_vectorizer.1} parent=0
    _
  %s10 = ssub.s32 1, %s8
  %s11 = scalar_select 0, %s10, %s8
  loop: start=0, step=1, limit=4
  $region2: #{style_vectorizer.1} parent=0 // loop_pre_header
    _
  $region3: #{style_vectorizer.1} parent=0 // loop_header
    %s13 = sphi 0, %s17
    %p14 = scmp.ge.s32.totalorder %s13, 4
    %s23 = sphi 0, %s25
    %s26 = sphi 0, %s23
    %s27 = sphi 0, %s26
    %s43 = sphi 0, %s27
    %s47 = sphi 0, %s47
    %s49 = sphi 0, %s47
    %s50 = sphi 0, %s49
    %s64 = sphi 0, %s50
    %s68 = sphi 0, %s68
    %s70 = sphi 0, %s68
    %s71 = sphi 0, %s70
    %s85 = sphi 0, %s71
    %s89 = sphi 0, %s89
    %s91 = sphi 0, %s89
    %s92 = sphi 0, %s91
    %s106 = sphi 0, %s92
    %s110 = sphi 0, %s110
    %s112 = sphi 0, %s110
    %s113 = sphi 0, %s112
    %s127 = sphi 0, %s113
    %s131 = sphi 0, %s131
    %s133 = sphi 0, %s131
    %s134 = sphi 0, %s133
    %s148 = sphi 0, %s134
    %s152 = sphi 0, %s152
    %s154 = sphi 0, %s152
    %s155 = sphi 0, %s154
    %s169 = sphi 0, %s155
    %s175 = sphi 0, %s177
    %s178 = sphi 0, %s175
    %s179 = sphi 0, %s178
    %s195 = sphi 0, %s179
  $region4: #{style_vectorizer.1} parent=0 // loop_header_branch
    %16 = sbr.rel (%p14) target = $region8
  $region5: #{style_vectorizer.1} parent=0 // loop_body
    %s18 = ssub.s32 %s13, 1
    %s19 = ssub.s32 %s13, 2
    %s20 = sadd.s32 %s13, 1
    %s21 = ssub.s32 %s13, %s20
    %p22 = scmp.eq.s32.totalorder %s21, 0
    %s24 = sadd.s32 %s23, 1
    %s25 = scalar_select %p22, %s23, %s24
    %p28 = pneg %p22
    %p29 = scmp.eq.s32.totalorder %s13, 1
    %p30 = por %p28, %p29
    %p31 = scmp.ne.s32.totalorder %s23, %s26
    %p32 = scmp.eq.s32.totalorder %s13, 0
    %p33 = por %p31, %p32
    %p34 = scmp.ne.s32.totalorder %s23, %s26
    %p35 = scmp.eq.s32.totalorder %s18, 1
    %p36 = por %p34, %p35
    %p37 = scmp.ne.s32.totalorder %s26, %s27
    %p38 = scmp.eq.s32.totalorder %s18, 0
    %p39 = por %p37, %p38
    %p40 = scmp.ne.s32.totalorder %s26, %s27
    %p41 = scmp.eq.s32.totalorder %s19, 1
    %p42 = por %p40, %p41
    %p44 = scmp.ne.s32.totalorder %s27, %s43
    %p45 = scmp.eq.s32.totalorder %s19, 0
    %p46 = por %p44, %p45
    %s48 = sadd.s32 %s47, 1
    %p51 = scmp.eq.s32.totalorder %s13, 1
    %p52 = scmp.ne.s32.totalorder %s47, %s49
    %p53 = scmp.eq.s32.totalorder %s13, 0
    %p54 = por %p52, %p53
    %p55 = scmp.ne.s32.totalorder %s47, %s49
    %p56 = scmp.eq.s32.totalorder %s18, 1
    %p57 = por %p55, %p56
    %p58 = scmp.ne.s32.totalorder %s49, %s50
    %p59 = scmp.eq.s32.totalorder %s18, 0
    %p60 = por %p58, %p59
    %p61 = scmp.ne.s32.totalorder %s49, %s50
    %p62 = scmp.eq.s32.totalorder %s19, 1
    %p63 = por %p61, %p62
    %p65 = scmp.ne.s32.totalorder %s50, %s64
    %p66 = scmp.eq.s32.totalorder %s19, 0
    %p67 = por %p65, %p66
    %s69 = sadd.s32 %s68, 1
    %p72 = scmp.eq.s32.totalorder %s13, 1
    %p73 = scmp.ne.s32.totalorder %s68, %s70
    %p74 = scmp.eq.s32.totalorder %s13, 0
    %p75 = por %p73, %p74
    %p76 = scmp.ne.s32.totalorder %s68, %s70
    %p77 = scmp.eq.s32.totalorder %s18, 1
    %p78 = por %p76, %p77
    %p79 = scmp.ne.s32.totalorder %s70, %s71
    %p80 = scmp.eq.s32.totalorder %s18, 0
    %p81 = por %p79, %p80
    %p82 = scmp.ne.s32.totalorder %s70, %s71
    %p83 = scmp.eq.s32.totalorder %s19, 1
    %p84 = por %p82, %p83
    %p86 = scmp.ne.s32.totalorder %s71, %s85
    %p87 = scmp.eq.s32.totalorder %s19, 0
    %p88 = por %p86, %p87
    %s90 = sadd.s32 %s89, 1
    %p93 = scmp.eq.s32.totalorder %s13, 1
    %p94 = scmp.ne.s32.totalorder %s89, %s91
    %p95 = scmp.eq.s32.totalorder %s13, 0
    %p96 = por %p94, %p95
    %p97 = scmp.ne.s32.totalorder %s89, %s91
    %p98 = scmp.eq.s32.totalorder %s18, 1
    %p99 = por %p97, %p98
    %p100 = scmp.ne.s32.totalorder %s91, %s92
    %p101 = scmp.eq.s32.totalorder %s18, 0
    %p102 = por %p100, %p101
    %p103 = scmp.ne.s32.totalorder %s91, %s92
    %p104 = scmp.eq.s32.totalorder %s19, 1
    %p105 = por %p103, %p104
    %p107 = scmp.ne.s32.totalorder %s92, %s106
    %p108 = scmp.eq.s32.totalorder %s19, 0
    %p109 = por %p107, %p108
    %s111 = sadd.s32 %s110, 1
    %p114 = scmp.eq.s32.totalorder %s13, 1
    %p115 = scmp.ne.s32.totalorder %s110, %s112
    %p116 = scmp.eq.s32.totalorder %s13, 0
    %p117 = por %p115, %p116
    %p118 = scmp.ne.s32.totalorder %s110, %s112
    %p119 = scmp.eq.s32.totalorder %s18, 1
    %p120 = por %p118, %p119
    %p121 = scmp.ne.s32.totalorder %s112, %s113
    %p122 = scmp.eq.s32.totalorder %s18, 0
    %p123 = por %p121, %p122
    %p124 = scmp.ne.s32.totalorder %s112, %s113
    %p125 = scmp.eq.s32.totalorder %s19, 1
    %p126 = por %p124, %p125
    %p128 = scmp.ne.s32.totalorder %s113, %s127
    %p129 = scmp.eq.s32.totalorder %s19, 0
    %p130 = por %p128, %p129
    %s132 = sadd.s32 %s131, 1
    %p135 = scmp.eq.s32.totalorder %s13, 1
    %p136 = scmp.ne.s32.totalorder %s131, %s133
    %p137 = scmp.eq.s32.totalorder %s13, 0
    %p138 = por %p136, %p137
    %p139 = scmp.ne.s32.totalorder %s131, %s133
    %p140 = scmp.eq.s32.totalorder %s18, 1
    %p141 = por %p139, %p140
    %p142 = scmp.ne.s32.totalorder %s133, %s134
    %p143 = scmp.eq.s32.totalorder %s18, 0
    %p144 = por %p142, %p143
    %p145 = scmp.ne.s32.totalorder %s133, %s134
    %p146 = scmp.eq.s32.totalorder %s19, 1
    %p147 = por %p145, %p146
    %p149 = scmp.ne.s32.totalorder %s134, %s148
    %p150 = scmp.eq.s32.totalorder %s19, 0
    %p151 = por %p149, %p150
    %s153 = sadd.s32 %s152, 1
    %p156 = scmp.eq.s32.totalorder %s13, 1
    %p157 = scmp.ne.s32.totalorder %s152, %s154
    %p158 = scmp.eq.s32.totalorder %s13, 0
    %p159 = por %p157, %p158
    %p160 = scmp.ne.s32.totalorder %s152, %s154
    %p161 = scmp.eq.s32.totalorder %s18, 1
    %p162 = por %p160, %p161
    %p163 = scmp.ne.s32.totalorder %s154, %s155
    %p164 = scmp.eq.s32.totalorder %s18, 0
    %p165 = por %p163, %p164
    %p166 = scmp.ne.s32.totalorder %s154, %s155
    %p167 = scmp.eq.s32.totalorder %s19, 1
    %p168 = por %p166, %p167
    %p170 = scmp.ne.s32.totalorder %s155, %s169
    %p171 = scmp.eq.s32.totalorder %s19, 0
    %p172 = por %p170, %p171
    %s173 = ssub.s32 %s13, %s20
    %p174 = scmp.eq.s32.totalorder %s173, 0
    %s176 = sadd.s32 %s175, 1
    %s177 = scalar_select %p174, %s175, %s176
    %p180 = pneg %p174
    %p181 = scmp.eq.s32.totalorder %s13, 1
    %p182 = por %p180, %p181
    %p183 = scmp.ne.s32.totalorder %s175, %s178
    %p184 = scmp.eq.s32.totalorder %s13, 0
    %p185 = por %p183, %p184
    %p186 = scmp.ne.s32.totalorder %s175, %s178
    %p187 = scmp.eq.s32.totalorder %s18, 1
    %p188 = por %p186, %p187
    %p189 = scmp.ne.s32.totalorder %s178, %s179
    %p190 = scmp.eq.s32.totalorder %s18, 0
    %p191 = por %p189, %p190
    %p192 = scmp.ne.s32.totalorder %s178, %s179
    %p193 = scmp.eq.s32.totalorder %s19, 1
    %p194 = por %p192, %p193
    %p196 = scmp.ne.s32.totalorder %s179, %s195
    %p197 = scmp.eq.s32.totalorder %s19, 0
    %p198 = por %p196, %p197
    %p199 = scmp.le.s32.totalorder 1, %s13
    %p200 = scmp.lt.s32.totalorder %s13, 3
    %p201 = pnand %p199, %p200
    %p202 = pneg %p201
    // Predicated region
    $region9: #{style_vectorizer.1} parent=5 // pred_check
      _
    $region10: #{style_vectorizer.1} parent=5 // pred_check_branch
      %204 = sbr.rel (%p201) target = $region12
    $region11: #{style_vectorizer.1} parent=5 // pred_region
      %s205 = ssub.s32 %s13, 1
      // Predicated region
      $region13: #{style_vectorizer.1} parent=11 // pred_check
        %p206 = pneg %p60
      $region14: #{style_vectorizer.1} parent=11 // pred_check_branch
        %208 = sbr.rel (%p206) target = $region16
      $region15: #{style_vectorizer.1} parent=11 // pred_region
        _
      $region16: #{style_vectorizer.1} parent=11 // pred_fallthru
        _
      // Predicated region
      $region17: #{style_vectorizer.1} parent=11 // pred_check
        %p209 = pneg %p81
      $region18: #{style_vectorizer.1} parent=11 // pred_check_branch
        %211 = sbr.rel (%p209) target = $region20
      $region19: #{style_vectorizer.1} parent=11 // pred_region
        _
      $region20: #{style_vectorizer.1} parent=11 // pred_fallthru
        _
      // Predicated region
      $region21: #{style_vectorizer.1} parent=11 // pred_check
        %p212 = pneg %p102
      $region22: #{style_vectorizer.1} parent=11 // pred_check_branch
        %214 = sbr.rel (%p212) target = $region24
      $region23: #{style_vectorizer.1} parent=11 // pred_region
        _
      $region24: #{style_vectorizer.1} parent=11 // pred_fallthru
        _
      // Predicated region
      $region25: #{style_vectorizer.1} parent=11 // pred_check
        %p215 = pneg %p123
      $region26: #{style_vectorizer.1} parent=11 // pred_check_branch
        %217 = sbr.rel (%p215) target = $region28
      $region27: #{style_vectorizer.1} parent=11 // pred_region
        _
      $region28: #{style_vectorizer.1} parent=11 // pred_fallthru
        _
      // Predicated region
      $region29: #{style_vectorizer.1} parent=11 // pred_check
        %p218 = pneg %p144
      $region30: #{style_vectorizer.1} parent=11 // pred_check_branch
        %220 = sbr.rel (%p218) target = $region32
      $region31: #{style_vectorizer.1} parent=11 // pred_region
        _
      $region32: #{style_vectorizer.1} parent=11 // pred_fallthru
        _
      // Predicated region
      $region33: #{style_vectorizer.1} parent=11 // pred_check
        %p221 = pneg %p165
      $region34: #{style_vectorizer.1} parent=11 // pred_check_branch
        %223 = sbr.rel (%p221) target = $region36
      $region35: #{style_vectorizer.1} parent=11 // pred_region
        _
      $region36: #{style_vectorizer.1} parent=11 // pred_fallthru
        _
    $region12: #{style_vectorizer.1} parent=5 // pred_fallthru
      _
    %p224 = scmp.lt.s32.totalorder %s13, 2
    // Predicated region
    $region37: #{style_vectorizer.1} parent=5 // pred_check
      %p225 = pneg %p224
    $region38: #{style_vectorizer.1} parent=5 // pred_check_branch
      %227 = sbr.rel (%p225) target = $region40
    $region39: #{style_vectorizer.1} parent=5 // pred_region
      // Predicated region
      $region41: #{style_vectorizer.1} parent=39 // pred_check
        %p228 = pneg %p33
      $region42: #{style_vectorizer.1} parent=39 // pred_check_branch
        %230 = sbr.rel (%p228) target = $region44
      $region43: #{style_vectorizer.1} parent=39 // pred_region
        %s231 = smul.u32 32, %s13
        %p232 = scmp.lt.s32.totalorder %s231, 63
        %s233 = scalar_select %p232, %s231, 63
        %s234 = smul.addr %s233, 4
        %s235 = smul.addr %s234, 8
        %s236 = scalar_lea.vmem %s0, %s235
        %s237 = smul.u32 32, %s13
      $region44: #{style_vectorizer.1} parent=39 // pred_fallthru
        _
    $region40: #{style_vectorizer.1} parent=5 // pred_fallthru
      _
    %p238 = scmp.le.s32.totalorder 1, %s13
    %p239 = scmp.lt.s32.totalorder %s13, 3
    %p240 = pnand %p238, %p239
    %p241 = pneg %p240
    // Predicated region
    $region45: #{style_vectorizer.1} parent=5 // pred_check
      _
    $region46: #{style_vectorizer.1} parent=5 // pred_check_branch
      %243 = sbr.rel (%p240) target = $region48
    $region47: #{style_vectorizer.1} parent=5 // pred_region
      %s244 = ssub.s32 %s13, 1
      %s245 = smul.u32 32, %s18
      %p246 = scmp.lt.s32.totalorder %s245, 63
      %s247 = scalar_select %p246, %s245, 63
      %s248 = smul.addr %s247, 4
      %s249 = smul.addr %s248, 8
      %s250 = scalar_lea.vmem %s0, %s249
      %p251 = pneg %p39
      %p252 = pneg %p36
      %p253 = pneg %p60
      %p254 = pneg %p57
      %p255 = pneg %p81
      %p256 = pneg %p78
      %p257 = pneg %p102
      %p258 = pneg %p99
      %p259 = pneg %p123
      %p260 = pneg %p120
      %p261 = pneg %p144
      %p262 = pneg %p141
      %p263 = pneg %p165
      %p264 = pneg %p162
      %p265 = pneg %p191
      %p266 = pneg %p188
      %s267 = smul.u32 32, %s18
      %p268 = scmp.lt.s32.totalorder %s267, 63
      %s269 = scalar_select %p268, %s267, 63
      %s270 = smul.addr %s269, 4
      %s271 = smul.addr %s270, 8
      %s272 = scalar_lea.vmem %s7, %s271
      %s273 = smul.u32 32, %s18
      %p274 = scmp.lt.s32.totalorder %s273, 63
      %s275 = scalar_select %p274, %s273, 63
      %s276 = smul.addr %s275, 4
      %s277 = smul.addr %s276, 8
      %s278 = scalar_lea.vmem %s0, %s277
      %s279 = smul.u32 32, %s18
      %s280 = smul.u32 32, %s18
      %p281 = scmp.lt.s32.totalorder %s280, 63
      %s282 = scalar_select %p281, %s280, 63
      %s283 = smul.addr %s282, 4
      %s284 = smul.addr %s283, 8
      %s285 = scalar_lea.vmem %s7, %s284
      %s286 = smul.u32 32, %s18
      %v287 = vld [vmem:[%s278] sm:$0xff]
      %v288 = vld [vmem:[%s278 + $0x8] sm:$0xff]
      %v289 = vld [vmem:[%s278 + $0x10] sm:$0xff]
      %v290 = vld [vmem:[%s278 + $0x18] sm:$0xff]
      %v291 = vld [vmem:[%s278 + $0x20] sm:$0xff]
      %v292 = vld [vmem:[%s278 + $0x28] sm:$0xff]
      %v293 = vld [vmem:[%s278 + $0x30] sm:$0xff]
      %v294 = vld [vmem:[%s278 + $0x38] sm:$0xff]
      %v295 = vld [vmem:[%s278 + $0x40] sm:$0xff]
      %v296 = vld [vmem:[%s278 + $0x48] sm:$0xff]
      %v297 = vld [vmem:[%s278 + $0x50] sm:$0xff]
      %v298 = vld [vmem:[%s278 + $0x58] sm:$0xff]
      %v299 = vld [vmem:[%s278 + $0x60] sm:$0xff]
      %v300 = vld [vmem:[%s278 + $0x68] sm:$0xff]
      %v301 = vld [vmem:[%s278 + $0x70] sm:$0xff]
      %v302 = vld [vmem:[%s278 + $0x78] sm:$0xff]
      %v303 = vld [vmem:[%s278 + $0x80] sm:$0xff]
      %v304 = vld [vmem:[%s278 + $0x88] sm:$0xff]
      %v305 = vld [vmem:[%s278 + $0x90] sm:$0xff]
      %v306 = vld [vmem:[%s278 + $0x98] sm:$0xff]
      %v307 = vld [vmem:[%s278 + $0xa0] sm:$0xff]
      %v308 = vld [vmem:[%s278 + $0xa8] sm:$0xff]
      %v309 = vld [vmem:[%s278 + $0xb0] sm:$0xff]
      %v310 = vld [vmem:[%s278 + $0xb8] sm:$0xff]
      %v311 = vld [vmem:[%s278 + $0xc0] sm:$0xff]
      %v312 = vld [vmem:[%s278 + $0xc8] sm:$0xff]
      %v313 = vld [vmem:[%s278 + $0xd0] sm:$0xff]
      %v314 = vld [vmem:[%s278 + $0xd8] sm:$0xff]
      %v315 = vld [vmem:[%s278 + $0xe0] sm:$0xff]
      %v316 = vld [vmem:[%s278 + $0xe8] sm:$0xff]
      %v317 = vld [vmem:[%s278 + $0xf0] sm:$0xff]
      %v318 = vld [vmem:[%s278 + $0xf8] sm:$0xff]
      %v319 = vld [vmem:[%s278 + $0x100] sm:$0xff]
      %v320 = vld [vmem:[%s278 + $0x108] sm:$0xff]
      %v321 = vld [vmem:[%s278 + $0x110] sm:$0xff]
      %v322 = vld [vmem:[%s278 + $0x118] sm:$0xff]
      %v323 = vld [vmem:[%s278 + $0x120] sm:$0xff]
      %v324 = vld [vmem:[%s278 + $0x128] sm:$0xff]
      %v325 = vld [vmem:[%s278 + $0x130] sm:$0xff]
      %v326 = vld [vmem:[%s278 + $0x138] sm:$0xff]
      %v327 = vld [vmem:[%s278 + $0x140] sm:$0xff]
      %v328 = vld [vmem:[%s278 + $0x148] sm:$0xff]
      %v329 = vld [vmem:[%s278 + $0x150] sm:$0xff]
      %v330 = vld [vmem:[%s278 + $0x158] sm:$0xff]
      %v331 = vld [vmem:[%s278 + $0x160] sm:$0xff]
      %v332 = vld [vmem:[%s278 + $0x168] sm:$0xff]
      %v333 = vld [vmem:[%s278 + $0x170] sm:$0xff]
      %v334 = vld [vmem:[%s278 + $0x178] sm:$0xff]
      %v335 = vld [vmem:[%s278 + $0x180] sm:$0xff]
      %v336 = vld [vmem:[%s278 + $0x188] sm:$0xff]
      %v337 = vld [vmem:[%s278 + $0x190] sm:$0xff]
      %v338 = vld [vmem:[%s278 + $0x198] sm:$0xff]
      %v339 = vld [vmem:[%s278 + $0x1a0] sm:$0xff]
      %v340 = vld [vmem:[%s278 + $0x1a8] sm:$0xff]
      %v341 = vld [vmem:[%s278 + $0x1b0] sm:$0xff]
      %v342 = vld [vmem:[%s278 + $0x1b8] sm:$0xff]
      %v343 = vld [vmem:[%s278 + $0x1c0] sm:$0xff]
      %v344 = vld [vmem:[%s278 + $0x1c8] sm:$0xff]
      %v345 = vld [vmem:[%s278 + $0x1d0] sm:$0xff]
      %v346 = vld [vmem:[%s278 + $0x1d8] sm:$0xff]
      %v347 = vld [vmem:[%s278 + $0x1e0] sm:$0xff]
      %v348 = vld [vmem:[%s278 + $0x1e8] sm:$0xff]
      %v349 = vld [vmem:[%s278 + $0x1f0] sm:$0xff]
      %v350 = vld [vmem:[%s278 + $0x1f8] sm:$0xff]
      %v351 = vld [vmem:[%s278 + $0x200] sm:$0xff]
      %v352 = vld [vmem:[%s278 + $0x208] sm:$0xff]
      %v353 = vld [vmem:[%s278 + $0x210] sm:$0xff]
      %v354 = vld [vmem:[%s278 + $0x218] sm:$0xff]
      %v355 = vld [vmem:[%s278 + $0x220] sm:$0xff]
      %v356 = vld [vmem:[%s278 + $0x228] sm:$0xff]
      %v357 = vld [vmem:[%s278 + $0x230] sm:$0xff]
      %v358 = vld [vmem:[%s278 + $0x238] sm:$0xff]
      %v359 = vld [vmem:[%s278 + $0x240] sm:$0xff]
      %v360 = vld [vmem:[%s278 + $0x248] sm:$0xff]
      %v361 = vld [vmem:[%s278 + $0x250] sm:$0xff]
      %v362 = vld [vmem:[%s278 + $0x258] sm:$0xff]
      %v363 = vld [vmem:[%s278 + $0x260] sm:$0xff]
      %v364 = vld [vmem:[%s278 + $0x268] sm:$0xff]
      %v365 = vld [vmem:[%s278 + $0x270] sm:$0xff]
      %v366 = vld [vmem:[%s278 + $0x278] sm:$0xff]
      %v367 = vld [vmem:[%s278 + $0x280] sm:$0xff]
      %v368 = vld [vmem:[%s278 + $0x288] sm:$0xff]
      %v369 = vld [vmem:[%s278 + $0x290] sm:$0xff]
      %v370 = vld [vmem:[%s278 + $0x298] sm:$0xff]
      %v371 = vld [vmem:[%s278 + $0x2a0] sm:$0xff]
      %v372 = vld [vmem:[%s278 + $0x2a8] sm:$0xff]
      %v373 = vld [vmem:[%s278 + $0x2b0] sm:$0xff]
      %v374 = vld [vmem:[%s278 + $0x2b8] sm:$0xff]
      %v375 = vld [vmem:[%s278 + $0x2c0] sm:$0xff]
      %v376 = vld [vmem:[%s278 + $0x2c8] sm:$0xff]
      %v377 = vld [vmem:[%s278 + $0x2d0] sm:$0xff]
      %v378 = vld [vmem:[%s278 + $0x2d8] sm:$0xff]
      %v379 = vld [vmem:[%s278 + $0x2e0] sm:$0xff]
      %v380 = vld [vmem:[%s278 + $0x2e8] sm:$0xff]
      %v381 = vld [vmem:[%s278 + $0x2f0] sm:$0xff]
      %v382 = vld [vmem:[%s278 + $0x2f8] sm:$0xff]
      %v383 = vld [vmem:[%s278 + $0x300] sm:$0xff]
      %v384 = vld [vmem:[%s278 + $0x308] sm:$0xff]
      %v385 = vld [vmem:[%s278 + $0x310] sm:$0xff]
      %v386 = vld [vmem:[%s278 + $0x318] sm:$0xff]
      %v387 = vld [vmem:[%s278 + $0x320] sm:$0xff]
      %v388 = vld [vmem:[%s278 + $0x328] sm:$0xff]
      %v389 = vld [vmem:[%s278 + $0x330] sm:$0xff]
      %v390 = vld [vmem:[%s278 + $0x338] sm:$0xff]
      %v391 = vld [vmem:[%s278 + $0x340] sm:$0xff]
      %v392 = vld [vmem:[%s278 + $0x348] sm:$0xff]
      %v393 = vld [vmem:[%s278 + $0x350] sm:$0xff]
      %v394 = vld [vmem:[%s278 + $0x358] sm:$0xff]
      %v395 = vld [vmem:[%s278 + $0x360] sm:$0xff]
      %v396 = vld [vmem:[%s278 + $0x368] sm:$0xff]
      %v397 = vld [vmem:[%s278 + $0x370] sm:$0xff]
      %v398 = vld [vmem:[%s278 + $0x378] sm:$0xff]
      %v399 = vld [vmem:[%s278 + $0x380] sm:$0xff]
      %v400 = vld [vmem:[%s278 + $0x388] sm:$0xff]
      %v401 = vld [vmem:[%s278 + $0x390] sm:$0xff]
      %v402 = vld [vmem:[%s278 + $0x398] sm:$0xff]
      %v403 = vld [vmem:[%s278 + $0x3a0] sm:$0xff]
      %v404 = vld [vmem:[%s278 + $0x3a8] sm:$0xff]
      %v405 = vld [vmem:[%s278 + $0x3b0] sm:$0xff]
      %v406 = vld [vmem:[%s278 + $0x3b8] sm:$0xff]
      %v407 = vld [vmem:[%s278 + $0x3c0] sm:$0xff]
      %v408 = vld [vmem:[%s278 + $0x3c8] sm:$0xff]
      %v409 = vld [vmem:[%s278 + $0x3d0] sm:$0xff]
      %v410 = vld [vmem:[%s278 + $0x3d8] sm:$0xff]
      %v411 = vld [vmem:[%s278 + $0x3e0] sm:$0xff]
      %v412 = vld [vmem:[%s278 + $0x3e8] sm:$0xff]
      %v413 = vld [vmem:[%s278 + $0x3f0] sm:$0xff]
      %v414 = vld [vmem:[%s278 + $0x3f8] sm:$0xff]
      %v415 = vpack.c.bf16 %v291, %v287
      %v416 = vpack.c.bf16 %v292, %v288
      %v417 = vpack.c.bf16 %v293, %v289
      %v418 = vpack.c.bf16 %v294, %v290
      %v419 = vpack.c.bf16 %v299, %v295
      %v420 = vpack.c.bf16 %v300, %v296
      %v421 = vpack.c.bf16 %v301, %v297
      %v422 = vpack.c.bf16 %v302, %v298
      %v423 = vpack.c.bf16 %v307, %v303
      %v424 = vpack.c.bf16 %v308, %v304
      %v425 = vpack.c.bf16 %v309, %v305
      %v426 = vpack.c.bf16 %v310, %v306
      %v427 = vpack.c.bf16 %v315, %v311
      %v428 = vpack.c.bf16 %v316, %v312
      %v429 = vpack.c.bf16 %v317, %v313
      %v430 = vpack.c.bf16 %v318, %v314
      %v431 = vpack.c.bf16 %v323, %v319
      %v432 = vpack.c.bf16 %v324, %v320
      %v433 = vpack.c.bf16 %v325, %v321
      %v434 = vpack.c.bf16 %v326, %v322
      %v435 = vpack.c.bf16 %v331, %v327
      %v436 = vpack.c.bf16 %v332, %v328
      %v437 = vpack.c.bf16 %v333, %v329
      %v438 = vpack.c.bf16 %v334, %v330
      %v439 = vpack.c.bf16 %v339, %v335
      %v440 = vpack.c.bf16 %v340, %v336
      %v441 = vpack.c.bf16 %v341, %v337
      %v442 = vpack.c.bf16 %v342, %v338
      %v443 = vpack.c.bf16 %v347, %v343
      %v444 = vpack.c.bf16 %v348, %v344
      %v445 = vpack.c.bf16 %v349, %v345
      %v446 = vpack.c.bf16 %v350, %v346
      %v447 = vpack.c.bf16 %v355, %v351
      %v448 = vpack.c.bf16 %v356, %v352
      %v449 = vpack.c.bf16 %v357, %v353
      %v450 = vpack.c.bf16 %v358, %v354
      %v451 = vpack.c.bf16 %v363, %v359
      %v452 = vpack.c.bf16 %v364, %v360
      %v453 = vpack.c.bf16 %v365, %v361
      %v454 = vpack.c.bf16 %v366, %v362
      %v455 = vpack.c.bf16 %v371, %v367
      %v456 = vpack.c.bf16 %v372, %v368
      %v457 = vpack.c.bf16 %v373, %v369
      %v458 = vpack.c.bf16 %v374, %v370
      %v459 = vpack.c.bf16 %v379, %v375
      %v460 = vpack.c.bf16 %v380, %v376
      %v461 = vpack.c.bf16 %v381, %v377
      %v462 = vpack.c.bf16 %v382, %v378
      %v463 = vpack.c.bf16 %v387, %v383
      %v464 = vpack.c.bf16 %v388, %v384
      %v465 = vpack.c.bf16 %v389, %v385
      %v466 = vpack.c.bf16 %v390, %v386
      %v467 = vpack.c.bf16 %v395, %v391
      %v468 = vpack.c.bf16 %v396, %v392
      %v469 = vpack.c.bf16 %v397, %v393
      %v470 = vpack.c.bf16 %v398, %v394
      %v471 = vpack.c.bf16 %v403, %v399
      %v472 = vpack.c.bf16 %v404, %v400
      %v473 = vpack.c.bf16 %v405, %v401
      %v474 = vpack.c.bf16 %v406, %v402
      %v475 = vpack.c.bf16 %v411, %v407
      %v476 = vpack.c.bf16 %v412, %v408
      %v477 = vpack.c.bf16 %v413, %v409
      %v478 = vpack.c.bf16 %v414, %v410
      %v479 = vld [vmem:[%s1] sm:$0xff]
      %v480 = vld [vmem:[%s1 + $0x8] sm:$0xff]
      %v481 = vld [vmem:[%s1 + $0x10] sm:$0xff]
      %v482 = vld [vmem:[%s1 + $0x18] sm:$0xff]
      %v483 = vld [vmem:[%s1 + $0x20] sm:$0xff]
      %v484 = vld [vmem:[%s1 + $0x28] sm:$0xff]
      %v485 = vld [vmem:[%s1 + $0x30] sm:$0xff]
      %v486 = vld [vmem:[%s1 + $0x38] sm:$0xff]
      %v487 = vld [vmem:[%s1 + $0x40] sm:$0xff]
      %v488 = vld [vmem:[%s1 + $0x48] sm:$0xff]
      %v489 = vld [vmem:[%s1 + $0x50] sm:$0xff]
      %v490 = vld [vmem:[%s1 + $0x58] sm:$0xff]
      %v491 = vld [vmem:[%s1 + $0x60] sm:$0xff]
      %v492 = vld [vmem:[%s1 + $0x68] sm:$0xff]
      %v493 = vld [vmem:[%s1 + $0x70] sm:$0xff]
      %v494 = vld [vmem:[%s1 + $0x78] sm:$0xff]
      %v495 = vld [vmem:[%s1 + $0x80] sm:$0xff]
      %v496 = vld [vmem:[%s1 + $0x88] sm:$0xff]
      %v497 = vld [vmem:[%s1 + $0x90] sm:$0xff]
      %v498 = vld [vmem:[%s1 + $0x98] sm:$0xff]
      %v499 = vld [vmem:[%s1 + $0xa0] sm:$0xff]
      %v500 = vld [vmem:[%s1 + $0xa8] sm:$0xff]
      %v501 = vld [vmem:[%s1 + $0xb0] sm:$0xff]
      %v502 = vld [vmem:[%s1 + $0xb8] sm:$0xff]
      %v503 = vld [vmem:[%s1 + $0xc0] sm:$0xff]
      %v504 = vld [vmem:[%s1 + $0xc8] sm:$0xff]
      %v505 = vld [vmem:[%s1 + $0xd0] sm:$0xff]
      %v506 = vld [vmem:[%s1 + $0xd8] sm:$0xff]
      %v507 = vld [vmem:[%s1 + $0xe0] sm:$0xff]
      %v508 = vld [vmem:[%s1 + $0xe8] sm:$0xff]
      %v509 = vld [vmem:[%s1 + $0xf0] sm:$0xff]
      %v510 = vld [vmem:[%s1 + $0xf8] sm:$0xff]
      %v511 = vld [vmem:[%s1 + $0x100] sm:$0xff]
      %v512 = vld [vmem:[%s1 + $0x108] sm:$0xff]
      %v513 = vld [vmem:[%s1 + $0x110] sm:$0xff]
      %v514 = vld [vmem:[%s1 + $0x118] sm:$0xff]
      %v515 = vld [vmem:[%s1 + $0x120] sm:$0xff]
      %v516 = vld [vmem:[%s1 + $0x128] sm:$0xff]
      %v517 = vld [vmem:[%s1 + $0x130] sm:$0xff]
      %v518 = vld [vmem:[%s1 + $0x138] sm:$0xff]
      %v519 = vld [vmem:[%s1 + $0x140] sm:$0xff]
      %v520 = vld [vmem:[%s1 + $0x148] sm:$0xff]
      %v521 = vld [vmem:[%s1 + $0x150] sm:$0xff]
      %v522 = vld [vmem:[%s1 + $0x158] sm:$0xff]
      %v523 = vld [vmem:[%s1 + $0x160] sm:$0xff]
      %v524 = vld [vmem:[%s1 + $0x168] sm:$0xff]
      %v525 = vld [vmem:[%s1 + $0x170] sm:$0xff]
      %v526 = vld [vmem:[%s1 + $0x178] sm:$0xff]
      %v527 = vld [vmem:[%s1 + $0x180] sm:$0xff]
      %v528 = vld [vmem:[%s1 + $0x188] sm:$0xff]
      %v529 = vld [vmem:[%s1 + $0x190] sm:$0xff]
      %v530 = vld [vmem:[%s1 + $0x198] sm:$0xff]
      %v531 = vld [vmem:[%s1 + $0x1a0] sm:$0xff]
      %v532 = vld [vmem:[%s1 + $0x1a8] sm:$0xff]
      %v533 = vld [vmem:[%s1 + $0x1b0] sm:$0xff]
      %v534 = vld [vmem:[%s1 + $0x1b8] sm:$0xff]
      %v535 = vld [vmem:[%s1 + $0x1c0] sm:$0xff]
      %v536 = vld [vmem:[%s1 + $0x1c8] sm:$0xff]
      %v537 = vld [vmem:[%s1 + $0x1d0] sm:$0xff]
      %v538 = vld [vmem:[%s1 + $0x1d8] sm:$0xff]
      %v539 = vld [vmem:[%s1 + $0x1e0] sm:$0xff]
      %v540 = vld [vmem:[%s1 + $0x1e8] sm:$0xff]
      %v541 = vld [vmem:[%s1 + $0x1f0] sm:$0xff]
      %v542 = vld [vmem:[%s1 + $0x1f8] sm:$0xff]
      %v543 = vld [vmem:[%s1 + $0x200] sm:$0xff]
      %v544 = vld [vmem:[%s1 + $0x208] sm:$0xff]
      %v545 = vld [vmem:[%s1 + $0x210] sm:$0xff]
      %v546 = vld [vmem:[%s1 + $0x218] sm:$0xff]
      %v547 = vld [vmem:[%s1 + $0x220] sm:$0xff]
      %v548 = vld [vmem:[%s1 + $0x228] sm:$0xff]
      %v549 = vld [vmem:[%s1 + $0x230] sm:$0xff]
      %v550 = vld [vmem:[%s1 + $0x238] sm:$0xff]
      %v551 = vld [vmem:[%s1 + $0x240] sm:$0xff]
      %v552 = vld [vmem:[%s1 + $0x248] sm:$0xff]
      %v553 = vld [vmem:[%s1 + $0x250] sm:$0xff]
      %v554 = vld [vmem:[%s1 + $0x258] sm:$0xff]
      %v555 = vld [vmem:[%s1 + $0x260] sm:$0xff]
      %v556 = vld [vmem:[%s1 + $0x268] sm:$0xff]
      %v557 = vld [vmem:[%s1 + $0x270] sm:$0xff]
      %v558 = vld [vmem:[%s1 + $0x278] sm:$0xff]
      %v559 = vld [vmem:[%s1 + $0x280] sm:$0xff]
      %v560 = vld [vmem:[%s1 + $0x288] sm:$0xff]
      %v561 = vld [vmem:[%s1 + $0x290] sm:$0xff]
      %v562 = vld [vmem:[%s1 + $0x298] sm:$0xff]
      %v563 = vld [vmem:[%s1 + $0x2a0] sm:$0xff]
      %v564 = vld [vmem:[%s1 + $0x2a8] sm:$0xff]
      %v565 = vld [vmem:[%s1 + $0x2b0] sm:$0xff]
      %v566 = vld [vmem:[%s1 + $0x2b8] sm:$0xff]
      %v567 = vld [vmem:[%s1 + $0x2c0] sm:$0xff]
      %v568 = vld [vmem:[%s1 + $0x2c8] sm:$0xff]
      %v569 = vld [vmem:[%s1 + $0x2d0] sm:$0xff]
      %v570 = vld [vmem:[%s1 + $0x2d8] sm:$0xff]
      %v571 = vld [vmem:[%s1 + $0x2e0] sm:$0xff]
      %v572 = vld [vmem:[%s1 + $0x2e8] sm:$0xff]
      %v573 = vld [vmem:[%s1 + $0x2f0] sm:$0xff]
      %v574 = vld [vmem:[%s1 + $0x2f8] sm:$0xff]
      %v575 = vld [vmem:[%s1 + $0x300] sm:$0xff]
      %v576 = vld [vmem:[%s1 + $0x308] sm:$0xff]
      %v577 = vld [vmem:[%s1 + $0x310] sm:$0xff]
      %v578 = vld [vmem:[%s1 + $0x318] sm:$0xff]
      %v579 = vld [vmem:[%s1 + $0x320] sm:$0xff]
      %v580 = vld [vmem:[%s1 + $0x328] sm:$0xff]
      %v581 = vld [vmem:[%s1 + $0x330] sm:$0xff]
      %v582 = vld [vmem:[%s1 + $0x338] sm:$0xff]
      %v583 = vld [vmem:[%s1 + $0x340] sm:$0xff]
      %v584 = vld [vmem:[%s1 + $0x348] sm:$0xff]
      %v585 = vld [vmem:[%s1 + $0x350] sm:$0xff]
      %v586 = vld [vmem:[%s1 + $0x358] sm:$0xff]
      %v587 = vld [vmem:[%s1 + $0x360] sm:$0xff]
      %v588 = vld [vmem:[%s1 + $0x368] sm:$0xff]
      %v589 = vld [vmem:[%s1 + $0x370] sm:$0xff]
      %v590 = vld [vmem:[%s1 + $0x378] sm:$0xff]
      %v591 = vld [vmem:[%s1 + $0x380] sm:$0xff]
      %v592 = vld [vmem:[%s1 + $0x388] sm:$0xff]
      %v593 = vld [vmem:[%s1 + $0x390] sm:$0xff]
      %v594 = vld [vmem:[%s1 + $0x398] sm:$0xff]
      %v595 = vld [vmem:[%s1 + $0x3a0] sm:$0xff]
      %v596 = vld [vmem:[%s1 + $0x3a8] sm:$0xff]
      %v597 = vld [vmem:[%s1 + $0x3b0] sm:$0xff]
      %v598 = vld [vmem:[%s1 + $0x3b8] sm:$0xff]
      %v599 = vld [vmem:[%s1 + $0x3c0] sm:$0xff]
      %v600 = vld [vmem:[%s1 + $0x3c8] sm:$0xff]
      %v601 = vld [vmem:[%s1 + $0x3d0] sm:$0xff]
      %v602 = vld [vmem:[%s1 + $0x3d8] sm:$0xff]
      %v603 = vld [vmem:[%s1 + $0x3e0] sm:$0xff]
      %v604 = vld [vmem:[%s1 + $0x3e8] sm:$0xff]
      %v605 = vld [vmem:[%s1 + $0x3f0] sm:$0xff]
      %v606 = vld [vmem:[%s1 + $0x3f8] sm:$0xff]
      %v607 = vld [vmem:[%s2] sm:$0xf]
      %v609 = vlaneseq
      %v610 = vshrl.u32 %v609, 7
      %v611 = vsub.s32 0, %v610
      %v612 = vrot.slane %v607, %v611
      %v613 = vlaneseq
      %v614 = vshrl.u32 %v613, 7
      %v615 = vsub.s32 1, %v614
      %v616 = vrot.slane %v607, %v615
      %v617 = vlaneseq
      %v618 = vshrl.u32 %v617, 7
      %v619 = vsub.s32 2, %v618
      %v620 = vrot.slane %v607, %v619
      %v621 = vlaneseq
      %v622 = vshrl.u32 %v621, 7
      %v623 = vsub.s32 3, %v622
      %v624 = vrot.slane %v607, %v623
      %v757 = vunpack.c.l.b16 %v479
      %v758 = vunpack.c.h.b16 %v479
      %v759 = vunpack.c.l.b16 %v480
      %v760 = vunpack.c.h.b16 %v480
      %v761 = vunpack.c.l.b16 %v481
      %v762 = vunpack.c.h.b16 %v481
      %v763 = vunpack.c.l.b16 %v482
      %v764 = vunpack.c.h.b16 %v482
      %v765 = vunpack.c.l.b16 %v483
      %v766 = vunpack.c.h.b16 %v483
      %v767 = vunpack.c.l.b16 %v484
      %v768 = vunpack.c.h.b16 %v484
      %v769 = vunpack.c.l.b16 %v485
      %v770 = vunpack.c.h.b16 %v485
      %v771 = vunpack.c.l.b16 %v486
      %v772 = vunpack.c.h.b16 %v486
      %v773 = vunpack.c.l.b16 %v487
      %v774 = vunpack.c.h.b16 %v487
      %v775 = vunpack.c.l.b16 %v488
      %v776 = vunpack.c.h.b16 %v488
      %v777 = vunpack.c.l.b16 %v489
      %v778 = vunpack.c.h.b16 %v489
      %v779 = vunpack.c.l.b16 %v490
      %v780 = vunpack.c.h.b16 %v490
      %v781 = vunpack.c.l.b16 %v491
      %v782 = vunpack.c.h.b16 %v491
      %v783 = vunpack.c.l.b16 %v492
      %v784 = vunpack.c.h.b16 %v492
      %v785 = vunpack.c.l.b16 %v493
      %v786 = vunpack.c.h.b16 %v493
      %v787 = vunpack.c.l.b16 %v494
      %v788 = vunpack.c.h.b16 %v494
      %v789 = vunpack.c.l.b16 %v495
      %v790 = vunpack.c.h.b16 %v495
      %v791 = vunpack.c.l.b16 %v496
      %v792 = vunpack.c.h.b16 %v496
      %v793 = vunpack.c.l.b16 %v497
      %v794 = vunpack.c.h.b16 %v497
      %v795 = vunpack.c.l.b16 %v498
      %v796 = vunpack.c.h.b16 %v498
      %v797 = vunpack.c.l.b16 %v499
      %v798 = vunpack.c.h.b16 %v499
      %v799 = vunpack.c.l.b16 %v500
      %v800 = vunpack.c.h.b16 %v500
      %v801 = vunpack.c.l.b16 %v501
      %v802 = vunpack.c.h.b16 %v501
      %v803 = vunpack.c.l.b16 %v502
      %v804 = vunpack.c.h.b16 %v502
      %v805 = vunpack.c.l.b16 %v503
      %v806 = vunpack.c.h.b16 %v503
      %v807 = vunpack.c.l.b16 %v504
      %v808 = vunpack.c.h.b16 %v504
      %v809 = vunpack.c.l.b16 %v505
      %v810 = vunpack.c.h.b16 %v505
      %v811 = vunpack.c.l.b16 %v506
      %v812 = vunpack.c.h.b16 %v506
      %v813 = vunpack.c.l.b16 %v507
      %v814 = vunpack.c.h.b16 %v507
      %v815 = vunpack.c.l.b16 %v508
      %v816 = vunpack.c.h.b16 %v508
      %v817 = vunpack.c.l.b16 %v509
      %v818 = vunpack.c.h.b16 %v509
      %v819 = vunpack.c.l.b16 %v510
      %v820 = vunpack.c.h.b16 %v510
      %v821 = vunpack.c.l.b16 %v511
      %v822 = vunpack.c.h.b16 %v511
      %v823 = vunpack.c.l.b16 %v512
      %v824 = vunpack.c.h.b16 %v512
      %v825 = vunpack.c.l.b16 %v513
      %v826 = vunpack.c.h.b16 %v513
      %v827 = vunpack.c.l.b16 %v514
      %v828 = vunpack.c.h.b16 %v514
      %v829 = vunpack.c.l.b16 %v515
      %v830 = vunpack.c.h.b16 %v515
      %v831 = vunpack.c.l.b16 %v516
      %v832 = vunpack.c.h.b16 %v516
      %v833 = vunpack.c.l.b16 %v517
      %v834 = vunpack.c.h.b16 %v517
      %v835 = vunpack.c.l.b16 %v518
      %v836 = vunpack.c.h.b16 %v518
      %v837 = vunpack.c.l.b16 %v519
      %v838 = vunpack.c.h.b16 %v519
      %v839 = vunpack.c.l.b16 %v520
      %v840 = vunpack.c.h.b16 %v520
      %v841 = vunpack.c.l.b16 %v521
      %v842 = vunpack.c.h.b16 %v521
      %v843 = vunpack.c.l.b16 %v522
      %v844 = vunpack.c.h.b16 %v522
      %v845 = vunpack.c.l.b16 %v523
      %v846 = vunpack.c.h.b16 %v523
      %v847 = vunpack.c.l.b16 %v524
      %v848 = vunpack.c.h.b16 %v524
      %v849 = vunpack.c.l.b16 %v525
      %v850 = vunpack.c.h.b16 %v525
      %v851 = vunpack.c.l.b16 %v526
      %v852 = vunpack.c.h.b16 %v526
      %v853 = vunpack.c.l.b16 %v527
      %v854 = vunpack.c.h.b16 %v527
      %v855 = vunpack.c.l.b16 %v528
      %v856 = vunpack.c.h.b16 %v528
      %v857 = vunpack.c.l.b16 %v529
      %v858 = vunpack.c.h.b16 %v529
      %v859 = vunpack.c.l.b16 %v530
      %v860 = vunpack.c.h.b16 %v530
      %v861 = vunpack.c.l.b16 %v531
      %v862 = vunpack.c.h.b16 %v531
      %v863 = vunpack.c.l.b16 %v532
      %v864 = vunpack.c.h.b16 %v532
      %v865 = vunpack.c.l.b16 %v533
      %v866 = vunpack.c.h.b16 %v533
      %v867 = vunpack.c.l.b16 %v534
      %v868 = vunpack.c.h.b16 %v534
      %v869 = vunpack.c.l.b16 %v535
      %v870 = vunpack.c.h.b16 %v535
      %v871 = vunpack.c.l.b16 %v536
      %v872 = vunpack.c.h.b16 %v536
      %v873 = vunpack.c.l.b16 %v537
      %v874 = vunpack.c.h.b16 %v537
      %v875 = vunpack.c.l.b16 %v538
      %v876 = vunpack.c.h.b16 %v538
      %v877 = vunpack.c.l.b16 %v539
      %v878 = vunpack.c.h.b16 %v539
      %v879 = vunpack.c.l.b16 %v540
      %v880 = vunpack.c.h.b16 %v540
      %v881 = vunpack.c.l.b16 %v541
      %v882 = vunpack.c.h.b16 %v541
      %v883 = vunpack.c.l.b16 %v542
      %v884 = vunpack.c.h.b16 %v542
      %v885 = vunpack.c.l.b16 %v543
      %v886 = vunpack.c.h.b16 %v543
      %v887 = vunpack.c.l.b16 %v544
      %v888 = vunpack.c.h.b16 %v544
      %v889 = vunpack.c.l.b16 %v545
      %v890 = vunpack.c.h.b16 %v545
      %v891 = vunpack.c.l.b16 %v546
      %v892 = vunpack.c.h.b16 %v546
      %v893 = vunpack.c.l.b16 %v547
      %v894 = vunpack.c.h.b16 %v547
      %v895 = vunpack.c.l.b16 %v548
      %v896 = vunpack.c.h.b16 %v548
      %v897 = vunpack.c.l.b16 %v549
      %v898 = vunpack.c.h.b16 %v549
      %v899 = vunpack.c.l.b16 %v550
      %v900 = vunpack.c.h.b16 %v550
      %v901 = vunpack.c.l.b16 %v551
      %v902 = vunpack.c.h.b16 %v551
      %v903 = vunpack.c.l.b16 %v552
      %v904 = vunpack.c.h.b16 %v552
      %v905 = vunpack.c.l.b16 %v553
      %v906 = vunpack.c.h.b16 %v553
      %v907 = vunpack.c.l.b16 %v554
      %v908 = vunpack.c.h.b16 %v554
      %v909 = vunpack.c.l.b16 %v555
      %v910 = vunpack.c.h.b16 %v555
      %v911 = vunpack.c.l.b16 %v556
      %v912 = vunpack.c.h.b16 %v556
      %v913 = vunpack.c.l.b16 %v557
      %v914 = vunpack.c.h.b16 %v557
      %v915 = vunpack.c.l.b16 %v558
      %v916 = vunpack.c.h.b16 %v558
      %v917 = vunpack.c.l.b16 %v559
      %v918 = vunpack.c.h.b16 %v559
      %v919 = vunpack.c.l.b16 %v560
      %v920 = vunpack.c.h.b16 %v560
      %v921 = vunpack.c.l.b16 %v561
      %v922 = vunpack.c.h.b16 %v561
      %v923 = vunpack.c.l.b16 %v562
      %v924 = vunpack.c.h.b16 %v562
      %v925 = vunpack.c.l.b16 %v563
      %v926 = vunpack.c.h.b16 %v563
      %v927 = vunpack.c.l.b16 %v564
      %v928 = vunpack.c.h.b16 %v564
      %v929 = vunpack.c.l.b16 %v565
      %v930 = vunpack.c.h.b16 %v565
      %v931 = vunpack.c.l.b16 %v566
      %v932 = vunpack.c.h.b16 %v566
      %v933 = vunpack.c.l.b16 %v567
      %v934 = vunpack.c.h.b16 %v567
      %v935 = vunpack.c.l.b16 %v568
      %v936 = vunpack.c.h.b16 %v568
      %v937 = vunpack.c.l.b16 %v569
      %v938 = vunpack.c.h.b16 %v569
      %v939 = vunpack.c.l.b16 %v570
      %v940 = vunpack.c.h.b16 %v570
      %v941 = vunpack.c.l.b16 %v571
      %v942 = vunpack.c.h.b16 %v571
      %v943 = vunpack.c.l.b16 %v572
      %v944 = vunpack.c.h.b16 %v572
      %v945 = vunpack.c.l.b16 %v573
      %v946 = vunpack.c.h.b16 %v573
      %v947 = vunpack.c.l.b16 %v574
      %v948 = vunpack.c.h.b16 %v574
      %v949 = vunpack.c.l.b16 %v575
      %v950 = vunpack.c.h.b16 %v575
      %v951 = vunpack.c.l.b16 %v576
      %v952 = vunpack.c.h.b16 %v576
      %v953 = vunpack.c.l.b16 %v577
      %v954 = vunpack.c.h.b16 %v577
      %v955 = vunpack.c.l.b16 %v578
      %v956 = vunpack.c.h.b16 %v578
      %v957 = vunpack.c.l.b16 %v579
      %v958 = vunpack.c.h.b16 %v579
      %v959 = vunpack.c.l.b16 %v580
      %v960 = vunpack.c.h.b16 %v580
      %v961 = vunpack.c.l.b16 %v581
      %v962 = vunpack.c.h.b16 %v581
      %v963 = vunpack.c.l.b16 %v582
      %v964 = vunpack.c.h.b16 %v582
      %v965 = vunpack.c.l.b16 %v583
      %v966 = vunpack.c.h.b16 %v583
      %v967 = vunpack.c.l.b16 %v584
      %v968 = vunpack.c.h.b16 %v584
      %v969 = vunpack.c.l.b16 %v585
      %v970 = vunpack.c.h.b16 %v585
      %v971 = vunpack.c.l.b16 %v586
      %v972 = vunpack.c.h.b16 %v586
      %v973 = vunpack.c.l.b16 %v587
      %v974 = vunpack.c.h.b16 %v587
      %v975 = vunpack.c.l.b16 %v588
      %v976 = vunpack.c.h.b16 %v588
      %v977 = vunpack.c.l.b16 %v589
      %v978 = vunpack.c.h.b16 %v589
      %v979 = vunpack.c.l.b16 %v590
      %v980 = vunpack.c.h.b16 %v590
      %v981 = vunpack.c.l.b16 %v591
      %v982 = vunpack.c.h.b16 %v591
      %v983 = vunpack.c.l.b16 %v592
      %v984 = vunpack.c.h.b16 %v592
      %v985 = vunpack.c.l.b16 %v593
      %v986 = vunpack.c.h.b16 %v593
      %v987 = vunpack.c.l.b16 %v594
      %v988 = vunpack.c.h.b16 %v594
      %v989 = vunpack.c.l.b16 %v595
      %v990 = vunpack.c.h.b16 %v595
      %v991 = vunpack.c.l.b16 %v596
      %v992 = vunpack.c.h.b16 %v596
      %v993 = vunpack.c.l.b16 %v597
      %v994 = vunpack.c.h.b16 %v597
      %v995 = vunpack.c.l.b16 %v598
      %v996 = vunpack.c.h.b16 %v598
      %v997 = vunpack.c.l.b16 %v599
      %v998 = vunpack.c.h.b16 %v599
      %v999 = vunpack.c.l.b16 %v600
      %v1000 = vunpack.c.h.b16 %v600
      %v1001 = vunpack.c.l.b16 %v601
      %v1002 = vunpack.c.h.b16 %v601
      %v1003 = vunpack.c.l.b16 %v602
      %v1004 = vunpack.c.h.b16 %v602
      %v1005 = vunpack.c.l.b16 %v603
      %v1006 = vunpack.c.h.b16 %v603
      %v1007 = vunpack.c.l.b16 %v604
      %v1008 = vunpack.c.h.b16 %v604
      %v1009 = vunpack.c.l.b16 %v605
      %v1010 = vunpack.c.h.b16 %v605
      %v1011 = vunpack.c.l.b16 %v606
      %v1012 = vunpack.c.h.b16 %v606
      %v1013 = vpack.c.b16 %v761, %v757
      %v1014 = vpack.c.b16 %v762, %v758
      %v1015 = vpack.c.b16 %v763, %v759
      %v1016 = vpack.c.b16 %v764, %v760
      %v1017 = vpack.c.b16 %v769, %v765
      %v1018 = vpack.c.b16 %v770, %v766
      %v1019 = vpack.c.b16 %v771, %v767
      %v1020 = vpack.c.b16 %v772, %v768
      %v1021 = vpack.c.b16 %v777, %v773
      %v1022 = vpack.c.b16 %v778, %v774
      %v1023 = vpack.c.b16 %v779, %v775
      %v1024 = vpack.c.b16 %v780, %v776
      %v1025 = vpack.c.b16 %v785, %v781
      %v1026 = vpack.c.b16 %v786, %v782
      %v1027 = vpack.c.b16 %v787, %v783
      %v1028 = vpack.c.b16 %v788, %v784
      %v1029 = vpack.c.b16 %v793, %v789
      %v1030 = vpack.c.b16 %v794, %v790
      %v1031 = vpack.c.b16 %v795, %v791
      %v1032 = vpack.c.b16 %v796, %v792
      %v1033 = vpack.c.b16 %v801, %v797
      %v1034 = vpack.c.b16 %v802, %v798
      %v1035 = vpack.c.b16 %v803, %v799
      %v1036 = vpack.c.b16 %v804, %v800
      %v1037 = vpack.c.b16 %v809, %v805
      %v1038 = vpack.c.b16 %v810, %v806
      %v1039 = vpack.c.b16 %v811, %v807
      %v1040 = vpack.c.b16 %v812, %v808
      %v1041 = vpack.c.b16 %v817, %v813
      %v1042 = vpack.c.b16 %v818, %v814
      %v1043 = vpack.c.b16 %v819, %v815
      %v1044 = vpack.c.b16 %v820, %v816
      %v1045 = vpack.c.b16 %v825, %v821
      %v1046 = vpack.c.b16 %v826, %v822
      %v1047 = vpack.c.b16 %v827, %v823
      %v1048 = vpack.c.b16 %v828, %v824
      %v1049 = vpack.c.b16 %v833, %v829
      %v1050 = vpack.c.b16 %v834, %v830
      %v1051 = vpack.c.b16 %v835, %v831
      %v1052 = vpack.c.b16 %v836, %v832
      %v1053 = vpack.c.b16 %v841, %v837
      %v1054 = vpack.c.b16 %v842, %v838
      %v1055 = vpack.c.b16 %v843, %v839
      %v1056 = vpack.c.b16 %v844, %v840
      %v1057 = vpack.c.b16 %v849, %v845
      %v1058 = vpack.c.b16 %v850, %v846
      %v1059 = vpack.c.b16 %v851, %v847
      %v1060 = vpack.c.b16 %v852, %v848
      %v1061 = vpack.c.b16 %v857, %v853
      %v1062 = vpack.c.b16 %v858, %v854
      %v1063 = vpack.c.b16 %v859, %v855
      %v1064 = vpack.c.b16 %v860, %v856
      %v1065 = vpack.c.b16 %v865, %v861
      %v1066 = vpack.c.b16 %v866, %v862
      %v1067 = vpack.c.b16 %v867, %v863
      %v1068 = vpack.c.b16 %v868, %v864
      %v1069 = vpack.c.b16 %v873, %v869
      %v1070 = vpack.c.b16 %v874, %v870
      %v1071 = vpack.c.b16 %v875, %v871
      %v1072 = vpack.c.b16 %v876, %v872
      %v1073 = vpack.c.b16 %v881, %v877
      %v1074 = vpack.c.b16 %v882, %v878
      %v1075 = vpack.c.b16 %v883, %v879
      %v1076 = vpack.c.b16 %v884, %v880
      %v1077 = vpack.c.b16 %v889, %v885
      %v1078 = vpack.c.b16 %v890, %v886
      %v1079 = vpack.c.b16 %v891, %v887
      %v1080 = vpack.c.b16 %v892, %v888
      %v1081 = vpack.c.b16 %v897, %v893
      %v1082 = vpack.c.b16 %v898, %v894
      %v1083 = vpack.c.b16 %v899, %v895
      %v1084 = vpack.c.b16 %v900, %v896
      %v1085 = vpack.c.b16 %v905, %v901
      %v1086 = vpack.c.b16 %v906, %v902
      %v1087 = vpack.c.b16 %v907, %v903
      %v1088 = vpack.c.b16 %v908, %v904
      %v1089 = vpack.c.b16 %v913, %v909
      %v1090 = vpack.c.b16 %v914, %v910
      %v1091 = vpack.c.b16 %v915, %v911
      %v1092 = vpack.c.b16 %v916, %v912
      %v1093 = vpack.c.b16 %v921, %v917
      %v1094 = vpack.c.b16 %v922, %v918
      %v1095 = vpack.c.b16 %v923, %v919
      %v1096 = vpack.c.b16 %v924, %v920
      %v1097 = vpack.c.b16 %v929, %v925
      %v1098 = vpack.c.b16 %v930, %v926
      %v1099 = vpack.c.b16 %v931, %v927
      %v1100 = vpack.c.b16 %v932, %v928
      %v1101 = vpack.c.b16 %v937, %v933
      %v1102 = vpack.c.b16 %v938, %v934
      %v1103 = vpack.c.b16 %v939, %v935
      %v1104 = vpack.c.b16 %v940, %v936
      %v1105 = vpack.c.b16 %v945, %v941
      %v1106 = vpack.c.b16 %v946, %v942
      %v1107 = vpack.c.b16 %v947, %v943
      %v1108 = vpack.c.b16 %v948, %v944
      %v1109 = vpack.c.b16 %v953, %v949
      %v1110 = vpack.c.b16 %v954, %v950
      %v1111 = vpack.c.b16 %v955, %v951
      %v1112 = vpack.c.b16 %v956, %v952
      %v1113 = vpack.c.b16 %v961, %v957
      %v1114 = vpack.c.b16 %v962, %v958
      %v1115 = vpack.c.b16 %v963, %v959
      %v1116 = vpack.c.b16 %v964, %v960
      %v1117 = vpack.c.b16 %v969, %v965
      %v1118 = vpack.c.b16 %v970, %v966
      %v1119 = vpack.c.b16 %v971, %v967
      %v1120 = vpack.c.b16 %v972, %v968
      %v1121 = vpack.c.b16 %v977, %v973
      %v1122 = vpack.c.b16 %v978, %v974
      %v1123 = vpack.c.b16 %v979, %v975
      %v1124 = vpack.c.b16 %v980, %v976
      %v1125 = vpack.c.b16 %v985, %v981
      %v1126 = vpack.c.b16 %v986, %v982
      %v1127 = vpack.c.b16 %v987, %v983
      %v1128 = vpack.c.b16 %v988, %v984
      %v1129 = vpack.c.b16 %v993, %v989
      %v1130 = vpack.c.b16 %v994, %v990
      %v1131 = vpack.c.b16 %v995, %v991
      %v1132 = vpack.c.b16 %v996, %v992
      %v1133 = vpack.c.b16 %v1001, %v997
      %v1134 = vpack.c.b16 %v1002, %v998
      %v1135 = vpack.c.b16 %v1003, %v999
      %v1136 = vpack.c.b16 %v1004, %v1000
      %v1137 = vpack.c.b16 %v1009, %v1005
      %v1138 = vpack.c.b16 %v1010, %v1006
      %v1139 = vpack.c.b16 %v1011, %v1007
      %v1140 = vpack.c.b16 %v1012, %v1008
      %1269 = vmatprep.subr.bf16.mxu0 %v1042
      %1270 = vmatpush1.bf16.xpose.msra.mxu0 %v1041
      %1271 = vmatprep.subr.bf16.mxu0 %v1038
      %1272 = vmatpush1.bf16.xpose.msra.mxu0 %v1037
      %1273 = vmatprep.subr.bf16.mxu0 %v1034
      %1274 = vmatpush1.bf16.xpose.msra.mxu0 %v1033
      %1275 = vmatprep.subr.bf16.mxu0 %v1030
      %1276 = vmatpush1.bf16.xpose.msra.mxu0 %v1029
      %1277 = vmatprep.subr.bf16.mxu0 %v1026
      %1278 = vmatpush1.bf16.xpose.msra.mxu0 %v1025
      %1279 = vmatprep.subr.bf16.mxu0 %v1022
      %1280 = vmatpush1.bf16.xpose.msra.mxu0 %v1021
      %1281 = vmatprep.subr.bf16.mxu0 %v1018
      %1282 = vmatpush1.bf16.xpose.msra.mxu0 %v1017
      %1283 = vmatprep.subr.bf16.mxu0 %v1014
      %1284 = vmatpush1.bf16.xpose.msra.mxu0 %v1013
      %1285 = vmatprep.subr.bf16.mxu0 %v1074
      %1286 = vmatpush2.bf16.xpose.msra.mxu0 %v1073
      %1287 = vmatprep.subr.bf16.mxu0 %v1070
      %1288 = vmatpush2.bf16.xpose.msra.mxu0 %v1069
      %1289 = vmatprep.subr.bf16.mxu0 %v1066
      %1290 = vmatpush2.bf16.xpose.msra.mxu0 %v1065
      %1291 = vmatprep.subr.bf16.mxu0 %v1062
      %1292 = vmatpush2.bf16.xpose.msra.mxu0 %v1061
      %1293 = vmatprep.subr.bf16.mxu0 %v1058
      %1294 = vmatpush2.bf16.xpose.msra.mxu0 %v1057
      %1295 = vmatprep.subr.bf16.mxu0 %v1054
      %1296 = vmatpush2.bf16.xpose.msra.mxu0 %v1053
      %1297 = vmatprep.subr.bf16.mxu0 %v1050
      %1298 = vmatpush2.bf16.xpose.msra.mxu0 %v1049
      %1299 = vmatprep.subr.bf16.mxu0 %v1046
      %1300 = vmatpush2.bf16.xpose.msra.mxu0 %v1045
      %1301 = vmatprep.mubr.bf16.mxu0 %v416
      %1302 = vmatmul.mubr.bf16.gmra.mxu0 %v415
      %v1303 = vpop.f32.mrf.mxu0
      %v1304 = vadd.f32 %v612, %v1303
      %v1305 = vpop.f32.mrf.mxu0
      %v1306 = vadd.f32 %v616, %v1305
      %v1307 = vpop.f32.mrf.mxu0
      %v1308 = vadd.f32 %v612, %v1307
      %v1309 = vpop.f32.mrf.mxu0
      %v1310 = vadd.f32 %v616, %v1309
      %1311 = vmatprep.mubr.bf16.mxu0 %v420
      %1312 = vmatmul.mubr.bf16.gmra.mxu0 %v419
      %v1313 = vpop.f32.mrf.mxu0
      %v1314 = vadd.f32 %v612, %v1313
      %v1315 = vpop.f32.mrf.mxu0
      %v1316 = vadd.f32 %v616, %v1315
      %v1317 = vpop.f32.mrf.mxu0
      %v1318 = vadd.f32 %v612, %v1317
      %v1319 = vpop.f32.mrf.mxu0
      %v1320 = vadd.f32 %v616, %v1319
      %1321 = vmatprep.mubr.bf16.mxu0 %v424
      %1322 = vmatmul.mubr.bf16.gmra.mxu0 %v423
      %v1323 = vpop.f32.mrf.mxu0
      %v1324 = vadd.f32 %v612, %v1323
      %v1325 = vpop.f32.mrf.mxu0
      %v1326 = vadd.f32 %v616, %v1325
      %v1327 = vpop.f32.mrf.mxu0
      %v1328 = vadd.f32 %v612, %v1327
      %v1329 = vpop.f32.mrf.mxu0
      %v1330 = vadd.f32 %v616, %v1329
      %1331 = vmatprep.mubr.bf16.mxu0 %v428
      %1332 = vmatmul.mubr.bf16.gmra.mxu0 %v427
      %v1333 = vpop.f32.mrf.mxu0
      %v1334 = vadd.f32 %v612, %v1333
      %v1335 = vpop.f32.mrf.mxu0
      %v1336 = vadd.f32 %v616, %v1335
      %v1337 = vpop.f32.mrf.mxu0
      %v1338 = vadd.f32 %v612, %v1337
      %v1339 = vpop.f32.mrf.mxu0
      %v1340 = vadd.f32 %v616, %v1339
      %1341 = vmatprep.mubr.bf16.mxu0 %v432
      %1342 = vmatmul.mubr.bf16.gmra.mxu0 %v431
      %v1343 = vpop.f32.mrf.mxu0
      %v1344 = vadd.f32 %v612, %v1343
      %v1345 = vpop.f32.mrf.mxu0
      %v1346 = vadd.f32 %v616, %v1345
      %v1347 = vpop.f32.mrf.mxu0
      %v1348 = vadd.f32 %v612, %v1347
      %v1349 = vpop.f32.mrf.mxu0
      %v1350 = vadd.f32 %v616, %v1349
      %1351 = vmatprep.mubr.bf16.mxu0 %v436
      %1352 = vmatmul.mubr.bf16.gmra.mxu0 %v435
      %v1353 = vpop.f32.mrf.mxu0
      %v1354 = vadd.f32 %v612, %v1353
      %v1355 = vpop.f32.mrf.mxu0
      %v1356 = vadd.f32 %v616, %v1355
      %v1357 = vpop.f32.mrf.mxu0
      %v1358 = vadd.f32 %v612, %v1357
      %v1359 = vpop.f32.mrf.mxu0
      %v1360 = vadd.f32 %v616, %v1359
      %1361 = vmatprep.mubr.bf16.mxu0 %v440
      %1362 = vmatmul.mubr.bf16.gmra.mxu0 %v439
      %v1363 = vpop.f32.mrf.mxu0
      %v1364 = vadd.f32 %v612, %v1363
      %v1365 = vpop.f32.mrf.mxu0
      %v1366 = vadd.f32 %v616, %v1365
      %v1367 = vpop.f32.mrf.mxu0
      %v1368 = vadd.f32 %v612, %v1367
      %v1369 = vpop.f32.mrf.mxu0
      %v1370 = vadd.f32 %v616, %v1369
      %1371 = vmatprep.mubr.bf16.mxu0 %v444
      %1372 = vmatmul.mubr.bf16.gmra.mxu0 %v443
      %v1373 = vpop.f32.mrf.mxu0
      %v1374 = vadd.f32 %v612, %v1373
      %v1375 = vpop.f32.mrf.mxu0
      %v1376 = vadd.f32 %v616, %v1375
      %v1377 = vpop.f32.mrf.mxu0
      %v1378 = vadd.f32 %v612, %v1377
      %v1379 = vpop.f32.mrf.mxu0
      %v1380 = vadd.f32 %v616, %v1379
      %1381 = vmatprep.mubr.bf16.mxu0 %v448
      %1382 = vmatmul.mubr.bf16.gmra.mxu0 %v447
      %v1383 = vpop.f32.mrf.mxu0
      %v1384 = vadd.f32 %v612, %v1383
      %v1385 = vpop.f32.mrf.mxu0
      %v1386 = vadd.f32 %v616, %v1385
      %v1387 = vpop.f32.mrf.mxu0
      %v1388 = vadd.f32 %v612, %v1387
      %v1389 = vpop.f32.mrf.mxu0
      %v1390 = vadd.f32 %v616, %v1389
      %1391 = vmatprep.mubr.bf16.mxu0 %v452
      %1392 = vmatmul.mubr.bf16.gmra.mxu0 %v451
      %v1393 = vpop.f32.mrf.mxu0
      %v1394 = vadd.f32 %v612, %v1393
      %v1395 = vpop.f32.mrf.mxu0
      %v1396 = vadd.f32 %v616, %v1395
      %v1397 = vpop.f32.mrf.mxu0
      %v1398 = vadd.f32 %v612, %v1397
      %v1399 = vpop.f32.mrf.mxu0
      %v1400 = vadd.f32 %v616, %v1399
      %1401 = vmatprep.mubr.bf16.mxu0 %v456
      %1402 = vmatmul.mubr.bf16.gmra.mxu0 %v455
      %v1403 = vpop.f32.mrf.mxu0
      %v1404 = vadd.f32 %v612, %v1403
      %v1405 = vpop.f32.mrf.mxu0
      %v1406 = vadd.f32 %v616, %v1405
      %v1407 = vpop.f32.mrf.mxu0
      %v1408 = vadd.f32 %v612, %v1407
      %v1409 = vpop.f32.mrf.mxu0
      %v1410 = vadd.f32 %v616, %v1409
      %1411 = vmatprep.mubr.bf16.mxu0 %v460
      %1412 = vmatmul.mubr.bf16.gmra.mxu0 %v459
      %v1413 = vpop.f32.mrf.mxu0
      %v1414 = vadd.f32 %v612, %v1413
      %v1415 = vpop.f32.mrf.mxu0
      %v1416 = vadd.f32 %v616, %v1415
      %v1417 = vpop.f32.mrf.mxu0
      %v1418 = vadd.f32 %v612, %v1417
      %v1419 = vpop.f32.mrf.mxu0
      %v1420 = vadd.f32 %v616, %v1419
      %1421 = vmatprep.mubr.bf16.mxu0 %v464
      %1422 = vmatmul.mubr.bf16.gmra.mxu0 %v463
      %v1423 = vpop.f32.mrf.mxu0
      %v1424 = vadd.f32 %v612, %v1423
      %v1425 = vpop.f32.mrf.mxu0
      %v1426 = vadd.f32 %v616, %v1425
      %v1427 = vpop.f32.mrf.mxu0
      %v1428 = vadd.f32 %v612, %v1427
      %v1429 = vpop.f32.mrf.mxu0
      %v1430 = vadd.f32 %v616, %v1429
      %1431 = vmatprep.mubr.bf16.mxu0 %v468
      %1432 = vmatmul.mubr.bf16.gmra.mxu0 %v467
      %v1433 = vpop.f32.mrf.mxu0
      %v1434 = vadd.f32 %v612, %v1433
      %v1435 = vpop.f32.mrf.mxu0
      %v1436 = vadd.f32 %v616, %v1435
      %v1437 = vpop.f32.mrf.mxu0
      %v1438 = vadd.f32 %v612, %v1437
      %v1439 = vpop.f32.mrf.mxu0
      %v1440 = vadd.f32 %v616, %v1439
      %1441 = vmatprep.mubr.bf16.mxu0 %v472
      %1442 = vmatmul.mubr.bf16.gmra.mxu0 %v471
      %v1443 = vpop.f32.mrf.mxu0
      %v1444 = vadd.f32 %v612, %v1443
      %v1445 = vpop.f32.mrf.mxu0
      %v1446 = vadd.f32 %v616, %v1445
      %v1447 = vpop.f32.mrf.mxu0
      %v1448 = vadd.f32 %v612, %v1447
      %v1449 = vpop.f32.mrf.mxu0
      %v1450 = vadd.f32 %v616, %v1449
      %1451 = vmatprep.mubr.bf16.mxu0 %v476
      %1452 = vmatmul.mubr.bf16.gmra.mxu0 %v475
      %v1453 = vpop.f32.mrf.mxu0
      %v1454 = vadd.f32 %v612, %v1453
      %v1455 = vpop.f32.mrf.mxu0
      %v1456 = vadd.f32 %v616, %v1455
      %v1457 = vpop.f32.mrf.mxu0
      %v1458 = vadd.f32 %v612, %v1457
      %v1459 = vpop.f32.mrf.mxu0
      %v1460 = vadd.f32 %v616, %v1459
      %1461 = vdwg.mxu0
      %1462 = vmatprep.subr.bf16.mxu0 %v1044
      %1463 = vmatpush1.bf16.xpose.msra.mxu0 %v1043
      %1464 = vmatprep.subr.bf16.mxu0 %v1040
      %1465 = vmatpush1.bf16.xpose.msra.mxu0 %v1039
      %1466 = vmatprep.subr.bf16.mxu0 %v1036
      %1467 = vmatpush1.bf16.xpose.msra.mxu0 %v1035
      %1468 = vmatprep.subr.bf16.mxu0 %v1032
      %1469 = vmatpush1.bf16.xpose.msra.mxu0 %v1031
      %1470 = vmatprep.subr.bf16.mxu0 %v1028
      %1471 = vmatpush1.bf16.xpose.msra.mxu0 %v1027
      %1472 = vmatprep.subr.bf16.mxu0 %v1024
      %1473 = vmatpush1.bf16.xpose.msra.mxu0 %v1023
      %1474 = vmatprep.subr.bf16.mxu0 %v1020
      %1475 = vmatpush1.bf16.xpose.msra.mxu0 %v1019
      %1476 = vmatprep.subr.bf16.mxu0 %v1016
      %1477 = vmatpush1.bf16.xpose.msra.mxu0 %v1015
      %1478 = vmatprep.subr.bf16.mxu0 %v1076
      %1479 = vmatpush2.bf16.xpose.msra.mxu0 %v1075
      %1480 = vmatprep.subr.bf16.mxu0 %v1072
      %1481 = vmatpush2.bf16.xpose.msra.mxu0 %v1071
      %1482 = vmatprep.subr.bf16.mxu0 %v1068
      %1483 = vmatpush2.bf16.xpose.msra.mxu0 %v1067
      %1484 = vmatprep.subr.bf16.mxu0 %v1064
      %1485 = vmatpush2.bf16.xpose.msra.mxu0 %v1063
      %1486 = vmatprep.subr.bf16.mxu0 %v1060
      %1487 = vmatpush2.bf16.xpose.msra.mxu0 %v1059
      %1488 = vmatprep.subr.bf16.mxu0 %v1056
      %1489 = vmatpush2.bf16.xpose.msra.mxu0 %v1055
      %1490 = vmatprep.subr.bf16.mxu0 %v1052
      %1491 = vmatpush2.bf16.xpose.msra.mxu0 %v1051
      %1492 = vmatprep.subr.bf16.mxu0 %v1048
      %1493 = vmatpush2.bf16.xpose.msra.mxu0 %v1047
      %1494 = vmatprep.mubr.bf16.mxu0 %v418
      %1495 = vmatmul.mubr.bf16.gmra.mxu0 %v417
      %v1496 = vpop.f32.mrf.mxu0
      %v1497 = vadd.f32 %v1304, %v1496
      %v1498 = vpop.f32.mrf.mxu0
      %v1499 = vadd.f32 %v1306, %v1498
      %v1500 = vpop.f32.mrf.mxu0
      %v1501 = vadd.f32 %v1308, %v1500
      %v1502 = vpop.f32.mrf.mxu0
      %v1503 = vadd.f32 %v1310, %v1502
      %1504 = vmatprep.mubr.bf16.mxu0 %v422
      %1505 = vmatmul.mubr.bf16.gmra.mxu0 %v421
      %v1506 = vpop.f32.mrf.mxu0
      %v1507 = vadd.f32 %v1314, %v1506
      %v1508 = vpop.f32.mrf.mxu0
      %v1509 = vadd.f32 %v1316, %v1508
      %v1510 = vpop.f32.mrf.mxu0
      %v1511 = vadd.f32 %v1318, %v1510
      %v1512 = vpop.f32.mrf.mxu0
      %v1513 = vadd.f32 %v1320, %v1512
      %1514 = vmatprep.mubr.bf16.mxu0 %v426
      %1515 = vmatmul.mubr.bf16.gmra.mxu0 %v425
      %v1516 = vpop.f32.mrf.mxu0
      %v1517 = vadd.f32 %v1324, %v1516
      %v1518 = vpop.f32.mrf.mxu0
      %v1519 = vadd.f32 %v1326, %v1518
      %v1520 = vpop.f32.mrf.mxu0
      %v1521 = vadd.f32 %v1328, %v1520
      %v1522 = vpop.f32.mrf.mxu0
      %v1523 = vadd.f32 %v1330, %v1522
      %1524 = vmatprep.mubr.bf16.mxu0 %v430
      %1525 = vmatmul.mubr.bf16.gmra.mxu0 %v429
      %v1526 = vpop.f32.mrf.mxu0
      %v1527 = vadd.f32 %v1334, %v1526
      %v1528 = vpop.f32.mrf.mxu0
      %v1529 = vadd.f32 %v1336, %v1528
      %v1530 = vpop.f32.mrf.mxu0
      %v1531 = vadd.f32 %v1338, %v1530
      %v1532 = vpop.f32.mrf.mxu0
      %v1533 = vadd.f32 %v1340, %v1532
      %1534 = vmatprep.mubr.bf16.mxu0 %v434
      %1535 = vmatmul.mubr.bf16.gmra.mxu0 %v433
      %v1536 = vpop.f32.mrf.mxu0
      %v1537 = vadd.f32 %v1344, %v1536
      %v1538 = vpop.f32.mrf.mxu0
      %v1539 = vadd.f32 %v1346, %v1538
      %v1540 = vpop.f32.mrf.mxu0
      %v1541 = vadd.f32 %v1348, %v1540
      %v1542 = vpop.f32.mrf.mxu0
      %v1543 = vadd.f32 %v1350, %v1542
      %1544 = vmatprep.mubr.bf16.mxu0 %v438
      %1545 = vmatmul.mubr.bf16.gmra.mxu0 %v437
      %v1546 = vpop.f32.mrf.mxu0
      %v1547 = vadd.f32 %v1354, %v1546
      %v1548 = vpop.f32.mrf.mxu0
      %v1549 = vadd.f32 %v1356, %v1548
      %v1550 = vpop.f32.mrf.mxu0
      %v1551 = vadd.f32 %v1358, %v1550
      %v1552 = vpop.f32.mrf.mxu0
      %v1553 = vadd.f32 %v1360, %v1552
      %1554 = vmatprep.mubr.bf16.mxu0 %v442
      %1555 = vmatmul.mubr.bf16.gmra.mxu0 %v441
      %v1556 = vpop.f32.mrf.mxu0
      %v1557 = vadd.f32 %v1364, %v1556
      %v1558 = vpop.f32.mrf.mxu0
      %v1559 = vadd.f32 %v1366, %v1558
      %v1560 = vpop.f32.mrf.mxu0
      %v1561 = vadd.f32 %v1368, %v1560
      %v1562 = vpop.f32.mrf.mxu0
      %v1563 = vadd.f32 %v1370, %v1562
      %1564 = vmatprep.mubr.bf16.mxu0 %v446
      %1565 = vmatmul.mubr.bf16.gmra.mxu0 %v445
      %v1566 = vpop.f32.mrf.mxu0
      %v1567 = vadd.f32 %v1374, %v1566
      %v1568 = vpop.f32.mrf.mxu0
      %v1569 = vadd.f32 %v1376, %v1568
      %v1570 = vpop.f32.mrf.mxu0
      %v1571 = vadd.f32 %v1378, %v1570
      %v1572 = vpop.f32.mrf.mxu0
      %v1573 = vadd.f32 %v1380, %v1572
      %1574 = vmatprep.mubr.bf16.mxu0 %v450
      %1575 = vmatmul.mubr.bf16.gmra.mxu0 %v449
      %v1576 = vpop.f32.mrf.mxu0
      %v1577 = vadd.f32 %v1384, %v1576
      %v1578 = vpop.f32.mrf.mxu0
      %v1579 = vadd.f32 %v1386, %v1578
      %v1580 = vpop.f32.mrf.mxu0
      %v1581 = vadd.f32 %v1388, %v1580
      %v1582 = vpop.f32.mrf.mxu0
      %v1583 = vadd.f32 %v1390, %v1582
      %1584 = vmatprep.mubr.bf16.mxu0 %v454
      %1585 = vmatmul.mubr.bf16.gmra.mxu0 %v453
      %v1586 = vpop.f32.mrf.mxu0
      %v1587 = vadd.f32 %v1394, %v1586
      %v1588 = vpop.f32.mrf.mxu0
      %v1589 = vadd.f32 %v1396, %v1588
      %v1590 = vpop.f32.mrf.mxu0
      %v1591 = vadd.f32 %v1398, %v1590
      %v1592 = vpop.f32.mrf.mxu0
      %v1593 = vadd.f32 %v1400, %v1592
      %1594 = vmatprep.mubr.bf16.mxu0 %v458
      %1595 = vmatmul.mubr.bf16.gmra.mxu0 %v457
      %v1596 = vpop.f32.mrf.mxu0
      %v1597 = vadd.f32 %v1404, %v1596
      %v1598 = vpop.f32.mrf.mxu0
      %v1599 = vadd.f32 %v1406, %v1598
      %v1600 = vpop.f32.mrf.mxu0
      %v1601 = vadd.f32 %v1408, %v1600
      %v1602 = vpop.f32.mrf.mxu0
      %v1603 = vadd.f32 %v1410, %v1602
      %1604 = vmatprep.mubr.bf16.mxu0 %v462
      %1605 = vmatmul.mubr.bf16.gmra.mxu0 %v461
      %v1606 = vpop.f32.mrf.mxu0
      %v1607 = vadd.f32 %v1414, %v1606
      %v1608 = vpop.f32.mrf.mxu0
      %v1609 = vadd.f32 %v1416, %v1608
      %v1610 = vpop.f32.mrf.mxu0
      %v1611 = vadd.f32 %v1418, %v1610
      %v1612 = vpop.f32.mrf.mxu0
      %v1613 = vadd.f32 %v1420, %v1612
      %1614 = vmatprep.mubr.bf16.mxu0 %v466
      %1615 = vmatmul.mubr.bf16.gmra.mxu0 %v465
      %v1616 = vpop.f32.mrf.mxu0
      %v1617 = vadd.f32 %v1424, %v1616
      %v1618 = vpop.f32.mrf.mxu0
      %v1619 = vadd.f32 %v1426, %v1618
      %v1620 = vpop.f32.mrf.mxu0
      %v1621 = vadd.f32 %v1428, %v1620
      %v1622 = vpop.f32.mrf.mxu0
      %v1623 = vadd.f32 %v1430, %v1622
      %1624 = vmatprep.mubr.bf16.mxu0 %v470
      %1625 = vmatmul.mubr.bf16.gmra.mxu0 %v469
      %v1626 = vpop.f32.mrf.mxu0
      %v1627 = vadd.f32 %v1434, %v1626
      %v1628 = vpop.f32.mrf.mxu0
      %v1629 = vadd.f32 %v1436, %v1628
      %v1630 = vpop.f32.mrf.mxu0
      %v1631 = vadd.f32 %v1438, %v1630
      %v1632 = vpop.f32.mrf.mxu0
      %v1633 = vadd.f32 %v1440, %v1632
      %1634 = vmatprep.mubr.bf16.mxu0 %v474
      %1635 = vmatmul.mubr.bf16.gmra.mxu0 %v473
      %v1636 = vpop.f32.mrf.mxu0
      %v1637 = vadd.f32 %v1444, %v1636
      %v1638 = vpop.f32.mrf.mxu0
      %v1639 = vadd.f32 %v1446, %v1638
      %v1640 = vpop.f32.mrf.mxu0
      %v1641 = vadd.f32 %v1448, %v1640
      %v1642 = vpop.f32.mrf.mxu0
      %v1643 = vadd.f32 %v1450, %v1642
      %1644 = vmatprep.mubr.bf16.mxu0 %v478
      %1645 = vmatmul.mubr.bf16.gmra.mxu0 %v477
      %v1646 = vpop.f32.mrf.mxu0
      %v1647 = vadd.f32 %v1454, %v1646
      %v1648 = vpop.f32.mrf.mxu0
      %v1649 = vadd.f32 %v1456, %v1648
      %v1650 = vpop.f32.mrf.mxu0
      %v1651 = vadd.f32 %v1458, %v1650
      %v1652 = vpop.f32.mrf.mxu0
      %v1653 = vadd.f32 %v1460, %v1652
      %1654 = vdwg.mxu0
      %1655 = vmatprep.subr.bf16.mxu0 %v1106
      %1656 = vmatpush1.bf16.xpose.msra.mxu0 %v1105
      %1657 = vmatprep.subr.bf16.mxu0 %v1102
      %1658 = vmatpush1.bf16.xpose.msra.mxu0 %v1101
      %1659 = vmatprep.subr.bf16.mxu0 %v1098
      %1660 = vmatpush1.bf16.xpose.msra.mxu0 %v1097
      %1661 = vmatprep.subr.bf16.mxu0 %v1094
      %1662 = vmatpush1.bf16.xpose.msra.mxu0 %v1093
      %1663 = vmatprep.subr.bf16.mxu0 %v1090
      %1664 = vmatpush1.bf16.xpose.msra.mxu0 %v1089
      %1665 = vmatprep.subr.bf16.mxu0 %v1086
      %1666 = vmatpush1.bf16.xpose.msra.mxu0 %v1085
      %1667 = vmatprep.subr.bf16.mxu0 %v1082
      %1668 = vmatpush1.bf16.xpose.msra.mxu0 %v1081
      %1669 = vmatprep.subr.bf16.mxu0 %v1078
      %1670 = vmatpush1.bf16.xpose.msra.mxu0 %v1077
      %1671 = vmatprep.subr.bf16.mxu0 %v1138
      %1672 = vmatpush2.bf16.xpose.msra.mxu0 %v1137
      %1673 = vmatprep.subr.bf16.mxu0 %v1134
      %1674 = vmatpush2.bf16.xpose.msra.mxu0 %v1133
      %1675 = vmatprep.subr.bf16.mxu0 %v1130
      %1676 = vmatpush2.bf16.xpose.msra.mxu0 %v1129
      %1677 = vmatprep.subr.bf16.mxu0 %v1126
      %1678 = vmatpush2.bf16.xpose.msra.mxu0 %v1125
      %1679 = vmatprep.subr.bf16.mxu0 %v1122
      %1680 = vmatpush2.bf16.xpose.msra.mxu0 %v1121
      %1681 = vmatprep.subr.bf16.mxu0 %v1118
      %1682 = vmatpush2.bf16.xpose.msra.mxu0 %v1117
      %1683 = vmatprep.subr.bf16.mxu0 %v1114
      %1684 = vmatpush2.bf16.xpose.msra.mxu0 %v1113
      %1685 = vmatprep.subr.bf16.mxu0 %v1110
      %1686 = vmatpush2.bf16.xpose.msra.mxu0 %v1109
      %1687 = vmatprep.mubr.bf16.mxu0 %v416
      %1688 = vmatmul.mubr.bf16.gmra.mxu0 %v415
      %v1689 = vpop.f32.mrf.mxu0
      %v1690 = vadd.f32 %v620, %v1689
      %v1691 = vpop.f32.mrf.mxu0
      %v1692 = vadd.f32 %v624, %v1691
      %v1693 = vpop.f32.mrf.mxu0
      %v1694 = vadd.f32 %v620, %v1693
      %v1695 = vpop.f32.mrf.mxu0
      %v1696 = vadd.f32 %v624, %v1695
      %1697 = vmatprep.mubr.bf16.mxu0 %v420
      %1698 = vmatmul.mubr.bf16.gmra.mxu0 %v419
      %v1699 = vpop.f32.mrf.mxu0
      %v1700 = vadd.f32 %v620, %v1699
      %v1701 = vpop.f32.mrf.mxu0
      %v1702 = vadd.f32 %v624, %v1701
      %v1703 = vpop.f32.mrf.mxu0
      %v1704 = vadd.f32 %v620, %v1703
      %v1705 = vpop.f32.mrf.mxu0
      %v1706 = vadd.f32 %v624, %v1705
      %1707 = vmatprep.mubr.bf16.mxu0 %v424
      %1708 = vmatmul.mubr.bf16.gmra.mxu0 %v423
      %v1709 = vpop.f32.mrf.mxu0
      %v1710 = vadd.f32 %v620, %v1709
      %v1711 = vpop.f32.mrf.mxu0
      %v1712 = vadd.f32 %v624, %v1711
      %v1713 = vpop.f32.mrf.mxu0
      %v1714 = vadd.f32 %v620, %v1713
      %v1715 = vpop.f32.mrf.mxu0
      %v1716 = vadd.f32 %v624, %v1715
      %1717 = vmatprep.mubr.bf16.mxu0 %v428
      %1718 = vmatmul.mubr.bf16.gmra.mxu0 %v427
      %v1719 = vpop.f32.mrf.mxu0
      %v1720 = vadd.f32 %v620, %v1719
      %v1721 = vpop.f32.mrf.mxu0
      %v1722 = vadd.f32 %v624, %v1721
      %v1723 = vpop.f32.mrf.mxu0
      %v1724 = vadd.f32 %v620, %v1723
      %v1725 = vpop.f32.mrf.mxu0
      %v1726 = vadd.f32 %v624, %v1725
      %1727 = vmatprep.mubr.bf16.mxu0 %v432
      %1728 = vmatmul.mubr.bf16.gmra.mxu0 %v431
      %v1729 = vpop.f32.mrf.mxu0
      %v1730 = vadd.f32 %v620, %v1729
      %v1731 = vpop.f32.mrf.mxu0
      %v1732 = vadd.f32 %v624, %v1731
      %v1733 = vpop.f32.mrf.mxu0
      %v1734 = vadd.f32 %v620, %v1733
      %v1735 = vpop.f32.mrf.mxu0
      %v1736 = vadd.f32 %v624, %v1735
      %1737 = vmatprep.mubr.bf16.mxu0 %v436
      %1738 = vmatmul.mubr.bf16.gmra.mxu0 %v435
      %v1739 = vpop.f32.mrf.mxu0
      %v1740 = vadd.f32 %v620, %v1739
      %v1741 = vpop.f32.mrf.mxu0
      %v1742 = vadd.f32 %v624, %v1741
      %v1743 = vpop.f32.mrf.mxu0
      %v1744 = vadd.f32 %v620, %v1743
      %v1745 = vpop.f32.mrf.mxu0
      %v1746 = vadd.f32 %v624, %v1745
      %1747 = vmatprep.mubr.bf16.mxu0 %v440
      %1748 = vmatmul.mubr.bf16.gmra.mxu0 %v439
      %v1749 = vpop.f32.mrf.mxu0
      %v1750 = vadd.f32 %v620, %v1749
      %v1751 = vpop.f32.mrf.mxu0
      %v1752 = vadd.f32 %v624, %v1751
      %v1753 = vpop.f32.mrf.mxu0
      %v1754 = vadd.f32 %v620, %v1753
      %v1755 = vpop.f32.mrf.mxu0
      %v1756 = vadd.f32 %v624, %v1755
      %1757 = vmatprep.mubr.bf16.mxu0 %v444
      %1758 = vmatmul.mubr.bf16.gmra.mxu0 %v443
      %v1759 = vpop.f32.mrf.mxu0
      %v1760 = vadd.f32 %v620, %v1759
      %v1761 = vpop.f32.mrf.mxu0
      %v1762 = vadd.f32 %v624, %v1761
      %v1763 = vpop.f32.mrf.mxu0
      %v1764 = vadd.f32 %v620, %v1763
      %v1765 = vpop.f32.mrf.mxu0
      %v1766 = vadd.f32 %v624, %v1765
      %1767 = vmatprep.mubr.bf16.mxu0 %v448
      %1768 = vmatmul.mubr.bf16.gmra.mxu0 %v447
      %v1769 = vpop.f32.mrf.mxu0
      %v1770 = vadd.f32 %v620, %v1769
      %v1771 = vpop.f32.mrf.mxu0
      %v1772 = vadd.f32 %v624, %v1771
      %v1773 = vpop.f32.mrf.mxu0
      %v1774 = vadd.f32 %v620, %v1773
      %v1775 = vpop.f32.mrf.mxu0
      %v1776 = vadd.f32 %v624, %v1775
      %1777 = vmatprep.mubr.bf16.mxu0 %v452
      %1778 = vmatmul.mubr.bf16.gmra.mxu0 %v451
      %v1779 = vpop.f32.mrf.mxu0
      %v1780 = vadd.f32 %v620, %v1779
      %v1781 = vpop.f32.mrf.mxu0
      %v1782 = vadd.f32 %v624, %v1781
      %v1783 = vpop.f32.mrf.mxu0
      %v1784 = vadd.f32 %v620, %v1783
      %v1785 = vpop.f32.mrf.mxu0
      %v1786 = vadd.f32 %v624, %v1785
      %1787 = vmatprep.mubr.bf16.mxu0 %v456
      %1788 = vmatmul.mubr.bf16.gmra.mxu0 %v455
      %v1789 = vpop.f32.mrf.mxu0
      %v1790 = vadd.f32 %v620, %v1789
      %v1791 = vpop.f32.mrf.mxu0
      %v1792 = vadd.f32 %v624, %v1791
      %v1793 = vpop.f32.mrf.mxu0
      %v1794 = vadd.f32 %v620, %v1793
      %v1795 = vpop.f32.mrf.mxu0
      %v1796 = vadd.f32 %v624, %v1795
      %1797 = vmatprep.mubr.bf16.mxu0 %v460
      %1798 = vmatmul.mubr.bf16.gmra.mxu0 %v459
      %v1799 = vpop.f32.mrf.mxu0
      %v1800 = vadd.f32 %v620, %v1799
      %v1801 = vpop.f32.mrf.mxu0
      %v1802 = vadd.f32 %v624, %v1801
      %v1803 = vpop.f32.mrf.mxu0
      %v1804 = vadd.f32 %v620, %v1803
      %v1805 = vpop.f32.mrf.mxu0
      %v1806 = vadd.f32 %v624, %v1805
      %1807 = vmatprep.mubr.bf16.mxu0 %v464
      %1808 = vmatmul.mubr.bf16.gmra.mxu0 %v463
      %v1809 = vpop.f32.mrf.mxu0
      %v1810 = vadd.f32 %v620, %v1809
      %v1811 = vpop.f32.mrf.mxu0
      %v1812 = vadd.f32 %v624, %v1811
      %v1813 = vpop.f32.mrf.mxu0
      %v1814 = vadd.f32 %v620, %v1813
      %v1815 = vpop.f32.mrf.mxu0
      %v1816 = vadd.f32 %v624, %v1815
      %1817 = vmatprep.mubr.bf16.mxu0 %v468
      %1818 = vmatmul.mubr.bf16.gmra.mxu0 %v467
      %v1819 = vpop.f32.mrf.mxu0
      %v1820 = vadd.f32 %v620, %v1819
      %v1821 = vpop.f32.mrf.mxu0
      %v1822 = vadd.f32 %v624, %v1821
      %v1823 = vpop.f32.mrf.mxu0
      %v1824 = vadd.f32 %v620, %v1823
      %v1825 = vpop.f32.mrf.mxu0
      %v1826 = vadd.f32 %v624, %v1825
      %1827 = vmatprep.mubr.bf16.mxu0 %v472
      %1828 = vmatmul.mubr.bf16.gmra.mxu0 %v471
      %v1829 = vpop.f32.mrf.mxu0
      %v1830 = vadd.f32 %v620, %v1829
      %v1831 = vpop.f32.mrf.mxu0
      %v1832 = vadd.f32 %v624, %v1831
      %v1833 = vpop.f32.mrf.mxu0
      %v1834 = vadd.f32 %v620, %v1833
      %v1835 = vpop.f32.mrf.mxu0
      %v1836 = vadd.f32 %v624, %v1835
      %1837 = vmatprep.mubr.bf16.mxu0 %v476
      %1838 = vmatmul.mubr.bf16.gmra.mxu0 %v475
      %v1839 = vpop.f32.mrf.mxu0
      %v1840 = vadd.f32 %v620, %v1839
      %v1841 = vpop.f32.mrf.mxu0
      %v1842 = vadd.f32 %v624, %v1841
      %v1843 = vpop.f32.mrf.mxu0
      %v1844 = vadd.f32 %v620, %v1843
      %v1845 = vpop.f32.mrf.mxu0
      %v1846 = vadd.f32 %v624, %v1845
      %1847 = vdwg.mxu0
      %1848 = vmatprep.subr.bf16.mxu0 %v1108
      %1849 = vmatpush1.bf16.xpose.msra.mxu0 %v1107
      %1850 = vmatprep.subr.bf16.mxu0 %v1104
      %1851 = vmatpush1.bf16.xpose.msra.mxu0 %v1103
      %1852 = vmatprep.subr.bf16.mxu0 %v1100
      %1853 = vmatpush1.bf16.xpose.msra.mxu0 %v1099
      %1854 = vmatprep.subr.bf16.mxu0 %v1096
      %1855 = vmatpush1.bf16.xpose.msra.mxu0 %v1095
      %1856 = vmatprep.subr.bf16.mxu0 %v1092
      %1857 = vmatpush1.bf16.xpose.msra.mxu0 %v1091
      %1858 = vmatprep.subr.bf16.mxu0 %v1088
      %1859 = vmatpush1.bf16.xpose.msra.mxu0 %v1087
      %1860 = vmatprep.subr.bf16.mxu0 %v1084
      %1861 = vmatpush1.bf16.xpose.msra.mxu0 %v1083
      %1862 = vmatprep.subr.bf16.mxu0 %v1080
      %1863 = vmatpush1.bf16.xpose.msra.mxu0 %v1079
      %1864 = vmatprep.subr.bf16.mxu0 %v1140
      %1865 = vmatpush2.bf16.xpose.msra.mxu0 %v1139
      %1866 = vmatprep.subr.bf16.mxu0 %v1136
      %1867 = vmatpush2.bf16.xpose.msra.mxu0 %v1135
      %1868 = vmatprep.subr.bf16.mxu0 %v1132
      %1869 = vmatpush2.bf16.xpose.msra.mxu0 %v1131
      %1870 = vmatprep.subr.bf16.mxu0 %v1128
      %1871 = vmatpush2.bf16.xpose.msra.mxu0 %v1127
      %1872 = vmatprep.subr.bf16.mxu0 %v1124
      %1873 = vmatpush2.bf16.xpose.msra.mxu0 %v1123
      %1874 = vmatprep.subr.bf16.mxu0 %v1120
      %1875 = vmatpush2.bf16.xpose.msra.mxu0 %v1119
      %1876 = vmatprep.subr.bf16.mxu0 %v1116
      %1877 = vmatpush2.bf16.xpose.msra.mxu0 %v1115
      %1878 = vmatprep.subr.bf16.mxu0 %v1112
      %1879 = vmatpush2.bf16.xpose.msra.mxu0 %v1111
      %1880 = vmatprep.mubr.bf16.mxu0 %v418
      %1881 = vmatmul.mubr.bf16.gmra.mxu0 %v417
      %v1882 = vpop.f32.mrf.mxu0
      %v1883 = vadd.f32 %v1690, %v1882
      %v1884 = vpop.f32.mrf.mxu0
      %v1885 = vadd.f32 %v1692, %v1884
      %v1886 = vpop.f32.mrf.mxu0
      %v1887 = vadd.f32 %v1694, %v1886
      %v1888 = vpop.f32.mrf.mxu0
      %v1889 = vadd.f32 %v1696, %v1888
      %1890 = vmatprep.mubr.bf16.mxu0 %v422
      %1891 = vmatmul.mubr.bf16.gmra.mxu0 %v421
      %v1892 = vpop.f32.mrf.mxu0
      %v1893 = vadd.f32 %v1700, %v1892
      %v1894 = vpop.f32.mrf.mxu0
      %v1895 = vadd.f32 %v1702, %v1894
      %v1896 = vpop.f32.mrf.mxu0
      %v1897 = vadd.f32 %v1704, %v1896
      %v1898 = vpop.f32.mrf.mxu0
      %v1899 = vadd.f32 %v1706, %v1898
      %1900 = vmatprep.mubr.bf16.mxu0 %v426
      %1901 = vmatmul.mubr.bf16.gmra.mxu0 %v425
      %v1902 = vpop.f32.mrf.mxu0
      %v1903 = vadd.f32 %v1710, %v1902
      %v1904 = vpop.f32.mrf.mxu0
      %v1905 = vadd.f32 %v1712, %v1904
      %v1906 = vpop.f32.mrf.mxu0
      %v1907 = vadd.f32 %v1714, %v1906
      %v1908 = vpop.f32.mrf.mxu0
      %v1909 = vadd.f32 %v1716, %v1908
      %1910 = vmatprep.mubr.bf16.mxu0 %v430
      %1911 = vmatmul.mubr.bf16.gmra.mxu0 %v429
      %v1912 = vpop.f32.mrf.mxu0
      %v1913 = vadd.f32 %v1720, %v1912
      %v1914 = vpop.f32.mrf.mxu0
      %v1915 = vadd.f32 %v1722, %v1914
      %v1916 = vpop.f32.mrf.mxu0
      %v1917 = vadd.f32 %v1724, %v1916
      %v1918 = vpop.f32.mrf.mxu0
      %v1919 = vadd.f32 %v1726, %v1918
      %1920 = vmatprep.mubr.bf16.mxu0 %v434
      %1921 = vmatmul.mubr.bf16.gmra.mxu0 %v433
      %v1922 = vpop.f32.mrf.mxu0
      %v1923 = vadd.f32 %v1730, %v1922
      %v1924 = vpop.f32.mrf.mxu0
      %v1925 = vadd.f32 %v1732, %v1924
      %v1926 = vpop.f32.mrf.mxu0
      %v1927 = vadd.f32 %v1734, %v1926
      %v1928 = vpop.f32.mrf.mxu0
      %v1929 = vadd.f32 %v1736, %v1928
      %1930 = vmatprep.mubr.bf16.mxu0 %v438
      %1931 = vmatmul.mubr.bf16.gmra.mxu0 %v437
      %v1932 = vpop.f32.mrf.mxu0
      %v1933 = vadd.f32 %v1740, %v1932
      %v1934 = vpop.f32.mrf.mxu0
      %v1935 = vadd.f32 %v1742, %v1934
      %v1936 = vpop.f32.mrf.mxu0
      %v1937 = vadd.f32 %v1744, %v1936
      %v1938 = vpop.f32.mrf.mxu0
      %v1939 = vadd.f32 %v1746, %v1938
      %1940 = vmatprep.mubr.bf16.mxu0 %v442
      %1941 = vmatmul.mubr.bf16.gmra.mxu0 %v441
      %v1942 = vpop.f32.mrf.mxu0
      %v1943 = vadd.f32 %v1750, %v1942
      %v1944 = vpop.f32.mrf.mxu0
      %v1945 = vadd.f32 %v1752, %v1944
      %v1946 = vpop.f32.mrf.mxu0
      %v1947 = vadd.f32 %v1754, %v1946
      %v1948 = vpop.f32.mrf.mxu0
      %v1949 = vadd.f32 %v1756, %v1948
      %1950 = vmatprep.mubr.bf16.mxu0 %v446
      %1951 = vmatmul.mubr.bf16.gmra.mxu0 %v445
      %v1952 = vpop.f32.mrf.mxu0
      %v1953 = vadd.f32 %v1760, %v1952
      %v1954 = vpop.f32.mrf.mxu0
      %v1955 = vadd.f32 %v1762, %v1954
      %v1956 = vpop.f32.mrf.mxu0
      %v1957 = vadd.f32 %v1764, %v1956
      %v1958 = vpop.f32.mrf.mxu0
      %v1959 = vadd.f32 %v1766, %v1958
      %1960 = vmatprep.mubr.bf16.mxu0 %v450
      %1961 = vmatmul.mubr.bf16.gmra.mxu0 %v449
      %v1962 = vpop.f32.mrf.mxu0
      %v1963 = vadd.f32 %v1770, %v1962
      %v1964 = vpop.f32.mrf.mxu0
      %v1965 = vadd.f32 %v1772, %v1964
      %v1966 = vpop.f32.mrf.mxu0
      %v1967 = vadd.f32 %v1774, %v1966
      %v1968 = vpop.f32.mrf.mxu0
      %v1969 = vadd.f32 %v1776, %v1968
      %1970 = vmatprep.mubr.bf16.mxu0 %v454
      %1971 = vmatmul.mubr.bf16.gmra.mxu0 %v453
      %v1972 = vpop.f32.mrf.mxu0
      %v1973 = vadd.f32 %v1780, %v1972
      %v1974 = vpop.f32.mrf.mxu0
      %v1975 = vadd.f32 %v1782, %v1974
      %v1976 = vpop.f32.mrf.mxu0
      %v1977 = vadd.f32 %v1784, %v1976
      %v1978 = vpop.f32.mrf.mxu0
      %v1979 = vadd.f32 %v1786, %v1978
      %1980 = vmatprep.mubr.bf16.mxu0 %v458
      %1981 = vmatmul.mubr.bf16.gmra.mxu0 %v457
      %v1982 = vpop.f32.mrf.mxu0
      %v1983 = vadd.f32 %v1790, %v1982
      %v1984 = vpop.f32.mrf.mxu0
      %v1985 = vadd.f32 %v1792, %v1984
      %v1986 = vpop.f32.mrf.mxu0
      %v1987 = vadd.f32 %v1794, %v1986
      %v1988 = vpop.f32.mrf.mxu0
      %v1989 = vadd.f32 %v1796, %v1988
      %1990 = vmatprep.mubr.bf16.mxu0 %v462
      %1991 = vmatmul.mubr.bf16.gmra.mxu0 %v461
      %v1992 = vpop.f32.mrf.mxu0
      %v1993 = vadd.f32 %v1800, %v1992
      %v1994 = vpop.f32.mrf.mxu0
      %v1995 = vadd.f32 %v1802, %v1994
      %v1996 = vpop.f32.mrf.mxu0
      %v1997 = vadd.f32 %v1804, %v1996
      %v1998 = vpop.f32.mrf.mxu0
      %v1999 = vadd.f32 %v1806, %v1998
      %2000 = vmatprep.mubr.bf16.mxu0 %v466
      %2001 = vmatmul.mubr.bf16.gmra.mxu0 %v465
      %v2002 = vpop.f32.mrf.mxu0
      %v2003 = vadd.f32 %v1810, %v2002
      %v2004 = vpop.f32.mrf.mxu0
      %v2005 = vadd.f32 %v1812, %v2004
      %v2006 = vpop.f32.mrf.mxu0
      %v2007 = vadd.f32 %v1814, %v2006
      %v2008 = vpop.f32.mrf.mxu0
      %v2009 = vadd.f32 %v1816, %v2008
      %2010 = vmatprep.mubr.bf16.mxu0 %v470
      %2011 = vmatmul.mubr.bf16.gmra.mxu0 %v469
      %v2012 = vpop.f32.mrf.mxu0
      %v2013 = vadd.f32 %v1820, %v2012
      %v2014 = vpop.f32.mrf.mxu0
      %v2015 = vadd.f32 %v1822, %v2014
      %v2016 = vpop.f32.mrf.mxu0
      %v2017 = vadd.f32 %v1824, %v2016
      %v2018 = vpop.f32.mrf.mxu0
      %v2019 = vadd.f32 %v1826, %v2018
      %2020 = vmatprep.mubr.bf16.mxu0 %v474
      %2021 = vmatmul.mubr.bf16.gmra.mxu0 %v473
      %v2022 = vpop.f32.mrf.mxu0
      %v2023 = vadd.f32 %v1830, %v2022
      %v2024 = vpop.f32.mrf.mxu0
      %v2025 = vadd.f32 %v1832, %v2024
      %v2026 = vpop.f32.mrf.mxu0
      %v2027 = vadd.f32 %v1834, %v2026
      %v2028 = vpop.f32.mrf.mxu0
      %v2029 = vadd.f32 %v1836, %v2028
      %2030 = vmatprep.mubr.bf16.mxu0 %v478
      %2031 = vmatmul.mubr.bf16.gmra.mxu0 %v477
      %v2032 = vpop.f32.mrf.mxu0
      %v2033 = vadd.f32 %v1840, %v2032
      %v2034 = vpop.f32.mrf.mxu0
      %v2035 = vadd.f32 %v1842, %v2034
      %v2036 = vpop.f32.mrf.mxu0
      %v2037 = vadd.f32 %v1844, %v2036
      %v2038 = vpop.f32.mrf.mxu0
      %v2039 = vadd.f32 %v1846, %v2038
      %2040 = vdwg.mxu0
      %vm2041 = vcmp.gt.f32.partialorder %v1497, 0.0
      %vm2042 = vcmp.gt.f32.partialorder %v1499, 0.0
      %vm2043 = vcmp.gt.f32.partialorder %v1883, 0.0
      %vm2044 = vcmp.gt.f32.partialorder %v1885, 0.0
      %vm2045 = vcmp.gt.f32.partialorder %v1501, 0.0
      %vm2046 = vcmp.gt.f32.partialorder %v1503, 0.0
      %vm2047 = vcmp.gt.f32.partialorder %v1887, 0.0
      %vm2048 = vcmp.gt.f32.partialorder %v1889, 0.0
      %vm2049 = vcmp.gt.f32.partialorder %v1507, 0.0
      %vm2050 = vcmp.gt.f32.partialorder %v1509, 0.0
      %vm2051 = vcmp.gt.f32.partialorder %v1893, 0.0
      %vm2052 = vcmp.gt.f32.partialorder %v1895, 0.0
      %vm2053 = vcmp.gt.f32.partialorder %v1511, 0.0
      %vm2054 = vcmp.gt.f32.partialorder %v1513, 0.0
      %vm2055 = vcmp.gt.f32.partialorder %v1897, 0.0
      %vm2056 = vcmp.gt.f32.partialorder %v1899, 0.0
      %vm2057 = vcmp.gt.f32.partialorder %v1517, 0.0
      %vm2058 = vcmp.gt.f32.partialorder %v1519, 0.0
      %vm2059 = vcmp.gt.f32.partialorder %v1903, 0.0
      %vm2060 = vcmp.gt.f32.partialorder %v1905, 0.0
      %vm2061 = vcmp.gt.f32.partialorder %v1521, 0.0
      %vm2062 = vcmp.gt.f32.partialorder %v1523, 0.0
      %vm2063 = vcmp.gt.f32.partialorder %v1907, 0.0
      %vm2064 = vcmp.gt.f32.partialorder %v1909, 0.0
      %vm2065 = vcmp.gt.f32.partialorder %v1527, 0.0
      %vm2066 = vcmp.gt.f32.partialorder %v1529, 0.0
      %vm2067 = vcmp.gt.f32.partialorder %v1913, 0.0
      %vm2068 = vcmp.gt.f32.partialorder %v1915, 0.0
      %vm2069 = vcmp.gt.f32.partialorder %v1531, 0.0
      %vm2070 = vcmp.gt.f32.partialorder %v1533, 0.0
      %vm2071 = vcmp.gt.f32.partialorder %v1917, 0.0
      %vm2072 = vcmp.gt.f32.partialorder %v1919, 0.0
      %vm2073 = vcmp.gt.f32.partialorder %v1537, 0.0
      %vm2074 = vcmp.gt.f32.partialorder %v1539, 0.0
      %vm2075 = vcmp.gt.f32.partialorder %v1923, 0.0
      %vm2076 = vcmp.gt.f32.partialorder %v1925, 0.0
      %vm2077 = vcmp.gt.f32.partialorder %v1541, 0.0
      %vm2078 = vcmp.gt.f32.partialorder %v1543, 0.0
      %vm2079 = vcmp.gt.f32.partialorder %v1927, 0.0
      %vm2080 = vcmp.gt.f32.partialorder %v1929, 0.0
      %vm2081 = vcmp.gt.f32.partialorder %v1547, 0.0
      %vm2082 = vcmp.gt.f32.partialorder %v1549, 0.0
      %vm2083 = vcmp.gt.f32.partialorder %v1933, 0.0
      %vm2084 = vcmp.gt.f32.partialorder %v1935, 0.0
      %vm2085 = vcmp.gt.f32.partialorder %v1551, 0.0
      %vm2086 = vcmp.gt.f32.partialorder %v1553, 0.0
      %vm2087 = vcmp.gt.f32.partialorder %v1937, 0.0
      %vm2088 = vcmp.gt.f32.partialorder %v1939, 0.0
      %vm2089 = vcmp.gt.f32.partialorder %v1557, 0.0
      %vm2090 = vcmp.gt.f32.partialorder %v1559, 0.0
      %vm2091 = vcmp.gt.f32.partialorder %v1943, 0.0
      %vm2092 = vcmp.gt.f32.partialorder %v1945, 0.0
      %vm2093 = vcmp.gt.f32.partialorder %v1561, 0.0
      %vm2094 = vcmp.gt.f32.partialorder %v1563, 0.0
      %vm2095 = vcmp.gt.f32.partialorder %v1947, 0.0
      %vm2096 = vcmp.gt.f32.partialorder %v1949, 0.0
      %vm2097 = vcmp.gt.f32.partialorder %v1567, 0.0
      %vm2098 = vcmp.gt.f32.partialorder %v1569, 0.0
      %vm2099 = vcmp.gt.f32.partialorder %v1953, 0.0
      %vm2100 = vcmp.gt.f32.partialorder %v1955, 0.0
      %vm2101 = vcmp.gt.f32.partialorder %v1571, 0.0
      %vm2102 = vcmp.gt.f32.partialorder %v1573, 0.0
      %vm2103 = vcmp.gt.f32.partialorder %v1957, 0.0
      %vm2104 = vcmp.gt.f32.partialorder %v1959, 0.0
      %vm2105 = vcmp.gt.f32.partialorder %v1577, 0.0
      %vm2106 = vcmp.gt.f32.partialorder %v1579, 0.0
      %vm2107 = vcmp.gt.f32.partialorder %v1963, 0.0
      %vm2108 = vcmp.gt.f32.partialorder %v1965, 0.0
      %vm2109 = vcmp.gt.f32.partialorder %v1581, 0.0
      %vm2110 = vcmp.gt.f32.partialorder %v1583, 0.0
      %vm2111 = vcmp.gt.f32.partialorder %v1967, 0.0
      %vm2112 = vcmp.gt.f32.partialorder %v1969, 0.0
      %vm2113 = vcmp.gt.f32.partialorder %v1587, 0.0
      %vm2114 = vcmp.gt.f32.partialorder %v1589, 0.0
      %vm2115 = vcmp.gt.f32.partialorder %v1973, 0.0
      %vm2116 = vcmp.gt.f32.partialorder %v1975, 0.0
      %vm2117 = vcmp.gt.f32.partialorder %v1591, 0.0
      %vm2118 = vcmp.gt.f32.partialorder %v1593, 0.0
      %vm2119 = vcmp.gt.f32.partialorder %v1977, 0.0
      %vm2120 = vcmp.gt.f32.partialorder %v1979, 0.0
      %vm2121 = vcmp.gt.f32.partialorder %v1597, 0.0
      %vm2122 = vcmp.gt.f32.partialorder %v1599, 0.0
      %vm2123 = vcmp.gt.f32.partialorder %v1983, 0.0
      %vm2124 = vcmp.gt.f32.partialorder %v1985, 0.0
      %vm2125 = vcmp.gt.f32.partialorder %v1601, 0.0
      %vm2126 = vcmp.gt.f32.partialorder %v1603, 0.0
      %vm2127 = vcmp.gt.f32.partialorder %v1987, 0.0
      %vm2128 = vcmp.gt.f32.partialorder %v1989, 0.0
      %vm2129 = vcmp.gt.f32.partialorder %v1607, 0.0
      %vm2130 = vcmp.gt.f32.partialorder %v1609, 0.0
      %vm2131 = vcmp.gt.f32.partialorder %v1993, 0.0
      %vm2132 = vcmp.gt.f32.partialorder %v1995, 0.0
      %vm2133 = vcmp.gt.f32.partialorder %v1611, 0.0
      %vm2134 = vcmp.gt.f32.partialorder %v1613, 0.0
      %vm2135 = vcmp.gt.f32.partialorder %v1997, 0.0
      %vm2136 = vcmp.gt.f32.partialorder %v1999, 0.0
      %vm2137 = vcmp.gt.f32.partialorder %v1617, 0.0
      %vm2138 = vcmp.gt.f32.partialorder %v1619, 0.0
      %vm2139 = vcmp.gt.f32.partialorder %v2003, 0.0
      %vm2140 = vcmp.gt.f32.partialorder %v2005, 0.0
      %vm2141 = vcmp.gt.f32.partialorder %v1621, 0.0
      %vm2142 = vcmp.gt.f32.partialorder %v1623, 0.0
      %vm2143 = vcmp.gt.f32.partialorder %v2007, 0.0
      %vm2144 = vcmp.gt.f32.partialorder %v2009, 0.0
      %vm2145 = vcmp.gt.f32.partialorder %v1627, 0.0
      %vm2146 = vcmp.gt.f32.partialorder %v1629, 0.0
      %vm2147 = vcmp.gt.f32.partialorder %v2013, 0.0
      %vm2148 = vcmp.gt.f32.partialorder %v2015, 0.0
      %vm2149 = vcmp.gt.f32.partialorder %v1631, 0.0
      %vm2150 = vcmp.gt.f32.partialorder %v1633, 0.0
      %vm2151 = vcmp.gt.f32.partialorder %v2017, 0.0
      %vm2152 = vcmp.gt.f32.partialorder %v2019, 0.0
      %vm2153 = vcmp.gt.f32.partialorder %v1637, 0.0
      %vm2154 = vcmp.gt.f32.partialorder %v1639, 0.0
      %vm2155 = vcmp.gt.f32.partialorder %v2023, 0.0
      %vm2156 = vcmp.gt.f32.partialorder %v2025, 0.0
      %vm2157 = vcmp.gt.f32.partialorder %v1641, 0.0
      %vm2158 = vcmp.gt.f32.partialorder %v1643, 0.0
      %vm2159 = vcmp.gt.f32.partialorder %v2027, 0.0
      %vm2160 = vcmp.gt.f32.partialorder %v2029, 0.0
      %vm2161 = vcmp.gt.f32.partialorder %v1647, 0.0
      %vm2162 = vcmp.gt.f32.partialorder %v1649, 0.0
      %vm2163 = vcmp.gt.f32.partialorder %v2033, 0.0
      %vm2164 = vcmp.gt.f32.partialorder %v2035, 0.0
      %vm2165 = vcmp.gt.f32.partialorder %v1651, 0.0
      %vm2166 = vcmp.gt.f32.partialorder %v1653, 0.0
      %vm2167 = vcmp.gt.f32.partialorder %v2037, 0.0
      %vm2168 = vcmp.gt.f32.partialorder %v2039, 0.0
      %v2169 = vmul.f32 %v1497, 0.2
      %v2170 = vmul.f32 %v1499, 0.2
      %v2171 = vmul.f32 %v1883, 0.2
      %v2172 = vmul.f32 %v1885, 0.2
      %v2173 = vmul.f32 %v1501, 0.2
      %v2174 = vmul.f32 %v1503, 0.2
      %v2175 = vmul.f32 %v1887, 0.2
      %v2176 = vmul.f32 %v1889, 0.2
      %v2177 = vmul.f32 %v1507, 0.2
      %v2178 = vmul.f32 %v1509, 0.2
      %v2179 = vmul.f32 %v1893, 0.2
      %v2180 = vmul.f32 %v1895, 0.2
      %v2181 = vmul.f32 %v1511, 0.2
      %v2182 = vmul.f32 %v1513, 0.2
      %v2183 = vmul.f32 %v1897, 0.2
      %v2184 = vmul.f32 %v1899, 0.2
      %v2185 = vmul.f32 %v1517, 0.2
      %v2186 = vmul.f32 %v1519, 0.2
      %v2187 = vmul.f32 %v1903, 0.2
      %v2188 = vmul.f32 %v1905, 0.2
      %v2189 = vmul.f32 %v1521, 0.2
      %v2190 = vmul.f32 %v1523, 0.2
      %v2191 = vmul.f32 %v1907, 0.2
      %v2192 = vmul.f32 %v1909, 0.2
      %v2193 = vmul.f32 %v1527, 0.2
      %v2194 = vmul.f32 %v1529, 0.2
      %v2195 = vmul.f32 %v1913, 0.2
      %v2196 = vmul.f32 %v1915, 0.2
      %v2197 = vmul.f32 %v1531, 0.2
      %v2198 = vmul.f32 %v1533, 0.2
      %v2199 = vmul.f32 %v1917, 0.2
      %v2200 = vmul.f32 %v1919, 0.2
      %v2201 = vmul.f32 %v1537, 0.2
      %v2202 = vmul.f32 %v1539, 0.2
      %v2203 = vmul.f32 %v1923, 0.2
      %v2204 = vmul.f32 %v1925, 0.2
      %v2205 = vmul.f32 %v1541, 0.2
      %v2206 = vmul.f32 %v1543, 0.2
      %v2207 = vmul.f32 %v1927, 0.2
      %v2208 = vmul.f32 %v1929, 0.2
      %v2209 = vmul.f32 %v1547, 0.2
      %v2210 = vmul.f32 %v1549, 0.2
      %v2211 = vmul.f32 %v1933, 0.2
      %v2212 = vmul.f32 %v1935, 0.2
      %v2213 = vmul.f32 %v1551, 0.2
      %v2214 = vmul.f32 %v1553, 0.2
      %v2215 = vmul.f32 %v1937, 0.2
      %v2216 = vmul.f32 %v1939, 0.2
      %v2217 = vmul.f32 %v1557, 0.2
      %v2218 = vmul.f32 %v1559, 0.2
      %v2219 = vmul.f32 %v1943, 0.2
      %v2220 = vmul.f32 %v1945, 0.2
      %v2221 = vmul.f32 %v1561, 0.2
      %v2222 = vmul.f32 %v1563, 0.2
      %v2223 = vmul.f32 %v1947, 0.2
      %v2224 = vmul.f32 %v1949, 0.2
      %v2225 = vmul.f32 %v1567, 0.2
      %v2226 = vmul.f32 %v1569, 0.2
      %v2227 = vmul.f32 %v1953, 0.2
      %v2228 = vmul.f32 %v1955, 0.2
      %v2229 = vmul.f32 %v1571, 0.2
      %v2230 = vmul.f32 %v1573, 0.2
      %v2231 = vmul.f32 %v1957, 0.2
      %v2232 = vmul.f32 %v1959, 0.2
      %v2233 = vmul.f32 %v1577, 0.2
      %v2234 = vmul.f32 %v1579, 0.2
      %v2235 = vmul.f32 %v1963, 0.2
      %v2236 = vmul.f32 %v1965, 0.2
      %v2237 = vmul.f32 %v1581, 0.2
      %v2238 = vmul.f32 %v1583, 0.2
      %v2239 = vmul.f32 %v1967, 0.2
      %v2240 = vmul.f32 %v1969, 0.2
      %v2241 = vmul.f32 %v1587, 0.2
      %v2242 = vmul.f32 %v1589, 0.2
      %v2243 = vmul.f32 %v1973, 0.2
      %v2244 = vmul.f32 %v1975, 0.2
      %v2245 = vmul.f32 %v1591, 0.2
      %v2246 = vmul.f32 %v1593, 0.2
      %v2247 = vmul.f32 %v1977, 0.2
      %v2248 = vmul.f32 %v1979, 0.2
      %v2249 = vmul.f32 %v1597, 0.2
      %v2250 = vmul.f32 %v1599, 0.2
      %v2251 = vmul.f32 %v1983, 0.2
      %v2252 = vmul.f32 %v1985, 0.2
      %v2253 = vmul.f32 %v1601, 0.2
      %v2254 = vmul.f32 %v1603, 0.2
      %v2255 = vmul.f32 %v1987, 0.2
      %v2256 = vmul.f32 %v1989, 0.2
      %v2257 = vmul.f32 %v1607, 0.2
      %v2258 = vmul.f32 %v1609, 0.2
      %v2259 = vmul.f32 %v1993, 0.2
      %v2260 = vmul.f32 %v1995, 0.2
      %v2261 = vmul.f32 %v1611, 0.2
      %v2262 = vmul.f32 %v1613, 0.2
      %v2263 = vmul.f32 %v1997, 0.2
      %v2264 = vmul.f32 %v1999, 0.2
      %v2265 = vmul.f32 %v1617, 0.2
      %v2266 = vmul.f32 %v1619, 0.2
      %v2267 = vmul.f32 %v2003, 0.2
      %v2268 = vmul.f32 %v2005, 0.2
      %v2269 = vmul.f32 %v1621, 0.2
      %v2270 = vmul.f32 %v1623, 0.2
      %v2271 = vmul.f32 %v2007, 0.2
      %v2272 = vmul.f32 %v2009, 0.2
      %v2273 = vmul.f32 %v1627, 0.2
      %v2274 = vmul.f32 %v1629, 0.2
      %v2275 = vmul.f32 %v2013, 0.2
      %v2276 = vmul.f32 %v2015, 0.2
      %v2277 = vmul.f32 %v1631, 0.2
      %v2278 = vmul.f32 %v1633, 0.2
      %v2279 = vmul.f32 %v2017, 0.2
      %v2280 = vmul.f32 %v2019, 0.2
      %v2281 = vmul.f32 %v1637, 0.2
      %v2282 = vmul.f32 %v1639, 0.2
      %v2283 = vmul.f32 %v2023, 0.2
      %v2284 = vmul.f32 %v2025, 0.2
      %v2285 = vmul.f32 %v1641, 0.2
      %v2286 = vmul.f32 %v1643, 0.2
      %v2287 = vmul.f32 %v2027, 0.2
      %v2288 = vmul.f32 %v2029, 0.2
      %v2289 = vmul.f32 %v1647, 0.2
      %v2290 = vmul.f32 %v1649, 0.2
      %v2291 = vmul.f32 %v2033, 0.2
      %v2292 = vmul.f32 %v2035, 0.2
      %v2293 = vmul.f32 %v1651, 0.2
      %v2294 = vmul.f32 %v1653, 0.2
      %v2295 = vmul.f32 %v2037, 0.2
      %v2296 = vmul.f32 %v2039, 0.2
      %v2297 = vsel %vm2041, %v1497, %v2169
      %v2298 = vsel %vm2042, %v1499, %v2170
      %v2299 = vsel %vm2043, %v1883, %v2171
      %v2300 = vsel %vm2044, %v1885, %v2172
      %v2301 = vsel %vm2045, %v1501, %v2173
      %v2302 = vsel %vm2046, %v1503, %v2174
      %v2303 = vsel %vm2047, %v1887, %v2175
      %v2304 = vsel %vm2048, %v1889, %v2176
      %v2305 = vsel %vm2049, %v1507, %v2177
      %v2306 = vsel %vm2050, %v1509, %v2178
      %v2307 = vsel %vm2051, %v1893, %v2179
      %v2308 = vsel %vm2052, %v1895, %v2180
      %v2309 = vsel %vm2053, %v1511, %v2181
      %v2310 = vsel %vm2054, %v1513, %v2182
      %v2311 = vsel %vm2055, %v1897, %v2183
      %v2312 = vsel %vm2056, %v1899, %v2184
      %v2313 = vsel %vm2057, %v1517, %v2185
      %v2314 = vsel %vm2058, %v1519, %v2186
      %v2315 = vsel %vm2059, %v1903, %v2187
      %v2316 = vsel %vm2060, %v1905, %v2188
      %v2317 = vsel %vm2061, %v1521, %v2189
      %v2318 = vsel %vm2062, %v1523, %v2190
      %v2319 = vsel %vm2063, %v1907, %v2191
      %v2320 = vsel %vm2064, %v1909, %v2192
      %v2321 = vsel %vm2065, %v1527, %v2193
      %v2322 = vsel %vm2066, %v1529, %v2194
      %v2323 = vsel %vm2067, %v1913, %v2195
      %v2324 = vsel %vm2068, %v1915, %v2196
      %v2325 = vsel %vm2069, %v1531, %v2197
      %v2326 = vsel %vm2070, %v1533, %v2198
      %v2327 = vsel %vm2071, %v1917, %v2199
      %v2328 = vsel %vm2072, %v1919, %v2200
      %v2329 = vsel %vm2073, %v1537, %v2201
      %v2330 = vsel %vm2074, %v1539, %v2202
      %v2331 = vsel %vm2075, %v1923, %v2203
      %v2332 = vsel %vm2076, %v1925, %v2204
      %v2333 = vsel %vm2077, %v1541, %v2205
      %v2334 = vsel %vm2078, %v1543, %v2206
      %v2335 = vsel %vm2079, %v1927, %v2207
      %v2336 = vsel %vm2080, %v1929, %v2208
      %v2337 = vsel %vm2081, %v1547, %v2209
      %v2338 = vsel %vm2082, %v1549, %v2210
      %v2339 = vsel %vm2083, %v1933, %v2211
      %v2340 = vsel %vm2084, %v1935, %v2212
      %v2341 = vsel %vm2085, %v1551, %v2213
      %v2342 = vsel %vm2086, %v1553, %v2214
      %v2343 = vsel %vm2087, %v1937, %v2215
      %v2344 = vsel %vm2088, %v1939, %v2216
      %v2345 = vsel %vm2089, %v1557, %v2217
      %v2346 = vsel %vm2090, %v1559, %v2218
      %v2347 = vsel %vm2091, %v1943, %v2219
      %v2348 = vsel %vm2092, %v1945, %v2220
      %v2349 = vsel %vm2093, %v1561, %v2221
      %v2350 = vsel %vm2094, %v1563, %v2222
      %v2351 = vsel %vm2095, %v1947, %v2223
      %v2352 = vsel %vm2096, %v1949, %v2224
      %v2353 = vsel %vm2097, %v1567, %v2225
      %v2354 = vsel %vm2098, %v1569, %v2226
      %v2355 = vsel %vm2099, %v1953, %v2227
      %v2356 = vsel %vm2100, %v1955, %v2228
      %v2357 = vsel %vm2101, %v1571, %v2229
      %v2358 = vsel %vm2102, %v1573, %v2230
      %v2359 = vsel %vm2103, %v1957, %v2231
      %v2360 = vsel %vm2104, %v1959, %v2232
      %v2361 = vsel %vm2105, %v1577, %v2233
      %v2362 = vsel %vm2106, %v1579, %v2234
      %v2363 = vsel %vm2107, %v1963, %v2235
      %v2364 = vsel %vm2108, %v1965, %v2236
      %v2365 = vsel %vm2109, %v1581, %v2237
      %v2366 = vsel %vm2110, %v1583, %v2238
      %v2367 = vsel %vm2111, %v1967, %v2239
      %v2368 = vsel %vm2112, %v1969, %v2240
      %v2369 = vsel %vm2113, %v1587, %v2241
      %v2370 = vsel %vm2114, %v1589, %v2242
      %v2371 = vsel %vm2115, %v1973, %v2243
      %v2372 = vsel %vm2116, %v1975, %v2244
      %v2373 = vsel %vm2117, %v1591, %v2245
      %v2374 = vsel %vm2118, %v1593, %v2246
      %v2375 = vsel %vm2119, %v1977, %v2247
      %v2376 = vsel %vm2120, %v1979, %v2248
      %v2377 = vsel %vm2121, %v1597, %v2249
      %v2378 = vsel %vm2122, %v1599, %v2250
      %v2379 = vsel %vm2123, %v1983, %v2251
      %v2380 = vsel %vm2124, %v1985, %v2252
      %v2381 = vsel %vm2125, %v1601, %v2253
      %v2382 = vsel %vm2126, %v1603, %v2254
      %v2383 = vsel %vm2127, %v1987, %v2255
      %v2384 = vsel %vm2128, %v1989, %v2256
      %v2385 = vsel %vm2129, %v1607, %v2257
      %v2386 = vsel %vm2130, %v1609, %v2258
      %v2387 = vsel %vm2131, %v1993, %v2259
      %v2388 = vsel %vm2132, %v1995, %v2260
      %v2389 = vsel %vm2133, %v1611, %v2261
      %v2390 = vsel %vm2134, %v1613, %v2262
      %v2391 = vsel %vm2135, %v1997, %v2263
      %v2392 = vsel %vm2136, %v1999, %v2264
      %v2393 = vsel %vm2137, %v1617, %v2265
      %v2394 = vsel %vm2138, %v1619, %v2266
      %v2395 = vsel %vm2139, %v2003, %v2267
      %v2396 = vsel %vm2140, %v2005, %v2268
      %v2397 = vsel %vm2141, %v1621, %v2269
      %v2398 = vsel %vm2142, %v1623, %v2270
      %v2399 = vsel %vm2143, %v2007, %v2271
      %v2400 = vsel %vm2144, %v2009, %v2272
      %v2401 = vsel %vm2145, %v1627, %v2273
      %v2402 = vsel %vm2146, %v1629, %v2274
      %v2403 = vsel %vm2147, %v2013, %v2275
      %v2404 = vsel %vm2148, %v2015, %v2276
      %v2405 = vsel %vm2149, %v1631, %v2277
      %v2406 = vsel %vm2150, %v1633, %v2278
      %v2407 = vsel %vm2151, %v2017, %v2279
      %v2408 = vsel %vm2152, %v2019, %v2280
      %v2409 = vsel %vm2153, %v1637, %v2281
      %v2410 = vsel %vm2154, %v1639, %v2282
      %v2411 = vsel %vm2155, %v2023, %v2283
      %v2412 = vsel %vm2156, %v2025, %v2284
      %v2413 = vsel %vm2157, %v1641, %v2285
      %v2414 = vsel %vm2158, %v1643, %v2286
      %v2415 = vsel %vm2159, %v2027, %v2287
      %v2416 = vsel %vm2160, %v2029, %v2288
      %v2417 = vsel %vm2161, %v1647, %v2289
      %v2418 = vsel %vm2162, %v1649, %v2290
      %v2419 = vsel %vm2163, %v2033, %v2291
      %v2420 = vsel %vm2164, %v2035, %v2292
      %v2421 = vsel %vm2165, %v1651, %v2293
      %v2422 = vsel %vm2166, %v1653, %v2294
      %v2423 = vsel %vm2167, %v2037, %v2295
      %v2424 = vsel %vm2168, %v2039, %v2296
      %v2425 = vpack.c.bf16 %v2301, %v2297
      %v2426 = vpack.c.bf16 %v2302, %v2298
      %v2427 = vpack.c.bf16 %v2303, %v2299
      %v2428 = vpack.c.bf16 %v2304, %v2300
      %v2429 = vpack.c.bf16 %v2309, %v2305
      %v2430 = vpack.c.bf16 %v2310, %v2306
      %v2431 = vpack.c.bf16 %v2311, %v2307
      %v2432 = vpack.c.bf16 %v2312, %v2308
      %v2433 = vpack.c.bf16 %v2317, %v2313
      %v2434 = vpack.c.bf16 %v2318, %v2314
      %v2435 = vpack.c.bf16 %v2319, %v2315
      %v2436 = vpack.c.bf16 %v2320, %v2316
      %v2437 = vpack.c.bf16 %v2325, %v2321
      %v2438 = vpack.c.bf16 %v2326, %v2322
      %v2439 = vpack.c.bf16 %v2327, %v2323
      %v2440 = vpack.c.bf16 %v2328, %v2324
      %v2441 = vpack.c.bf16 %v2333, %v2329
      %v2442 = vpack.c.bf16 %v2334, %v2330
      %v2443 = vpack.c.bf16 %v2335, %v2331
      %v2444 = vpack.c.bf16 %v2336, %v2332
      %v2445 = vpack.c.bf16 %v2341, %v2337
      %v2446 = vpack.c.bf16 %v2342, %v2338
      %v2447 = vpack.c.bf16 %v2343, %v2339
      %v2448 = vpack.c.bf16 %v2344, %v2340
      %v2449 = vpack.c.bf16 %v2349, %v2345
      %v2450 = vpack.c.bf16 %v2350, %v2346
      %v2451 = vpack.c.bf16 %v2351, %v2347
      %v2452 = vpack.c.bf16 %v2352, %v2348
      %v2453 = vpack.c.bf16 %v2357, %v2353
      %v2454 = vpack.c.bf16 %v2358, %v2354
      %v2455 = vpack.c.bf16 %v2359, %v2355
      %v2456 = vpack.c.bf16 %v2360, %v2356
      %v2457 = vpack.c.bf16 %v2365, %v2361
      %v2458 = vpack.c.bf16 %v2366, %v2362
      %v2459 = vpack.c.bf16 %v2367, %v2363
      %v2460 = vpack.c.bf16 %v2368, %v2364
      %v2461 = vpack.c.bf16 %v2373, %v2369
      %v2462 = vpack.c.bf16 %v2374, %v2370
      %v2463 = vpack.c.bf16 %v2375, %v2371
      %v2464 = vpack.c.bf16 %v2376, %v2372
      %v2465 = vpack.c.bf16 %v2381, %v2377
      %v2466 = vpack.c.bf16 %v2382, %v2378
      %v2467 = vpack.c.bf16 %v2383, %v2379
      %v2468 = vpack.c.bf16 %v2384, %v2380
      %v2469 = vpack.c.bf16 %v2389, %v2385
      %v2470 = vpack.c.bf16 %v2390, %v2386
      %v2471 = vpack.c.bf16 %v2391, %v2387
      %v2472 = vpack.c.bf16 %v2392, %v2388
      %v2473 = vpack.c.bf16 %v2397, %v2393
      %v2474 = vpack.c.bf16 %v2398, %v2394
      %v2475 = vpack.c.bf16 %v2399, %v2395
      %v2476 = vpack.c.bf16 %v2400, %v2396
      %v2477 = vpack.c.bf16 %v2405, %v2401
      %v2478 = vpack.c.bf16 %v2406, %v2402
      %v2479 = vpack.c.bf16 %v2407, %v2403
      %v2480 = vpack.c.bf16 %v2408, %v2404
      %v2481 = vpack.c.bf16 %v2413, %v2409
      %v2482 = vpack.c.bf16 %v2414, %v2410
      %v2483 = vpack.c.bf16 %v2415, %v2411
      %v2484 = vpack.c.bf16 %v2416, %v2412
      %v2485 = vpack.c.bf16 %v2421, %v2417
      %v2486 = vpack.c.bf16 %v2422, %v2418
      %v2487 = vpack.c.bf16 %v2423, %v2419
      %v2488 = vpack.c.bf16 %v2424, %v2420
      %v2489 = vld [vmem:[%s3] sm:$0xff]
      %v2490 = vld [vmem:[%s3 + $0x8] sm:$0xff]
      %v2491 = vld [vmem:[%s3 + $0x10] sm:$0xff]
      %v2492 = vld [vmem:[%s3 + $0x18] sm:$0xff]
      %v2493 = vld [vmem:[%s3 + $0x20] sm:$0xff]
      %v2494 = vld [vmem:[%s3 + $0x28] sm:$0xff]
      %v2495 = vld [vmem:[%s3 + $0x30] sm:$0xff]
      %v2496 = vld [vmem:[%s3 + $0x38] sm:$0xff]
      %v2497 = vld [vmem:[%s3 + $0x40] sm:$0xff]
      %v2498 = vld [vmem:[%s3 + $0x48] sm:$0xff]
      %v2499 = vld [vmem:[%s3 + $0x50] sm:$0xff]
      %v2500 = vld [vmem:[%s3 + $0x58] sm:$0xff]
      %v2501 = vld [vmem:[%s3 + $0x60] sm:$0xff]
      %v2502 = vld [vmem:[%s3 + $0x68] sm:$0xff]
      %v2503 = vld [vmem:[%s3 + $0x70] sm:$0xff]
      %v2504 = vld [vmem:[%s3 + $0x78] sm:$0xff]
      %v2505 = vld [vmem:[%s3 + $0x80] sm:$0xff]
      %v2506 = vld [vmem:[%s3 + $0x88] sm:$0xff]
      %v2507 = vld [vmem:[%s3 + $0x90] sm:$0xff]
      %v2508 = vld [vmem:[%s3 + $0x98] sm:$0xff]
      %v2509 = vld [vmem:[%s3 + $0xa0] sm:$0xff]
      %v2510 = vld [vmem:[%s3 + $0xa8] sm:$0xff]
      %v2511 = vld [vmem:[%s3 + $0xb0] sm:$0xff]
      %v2512 = vld [vmem:[%s3 + $0xb8] sm:$0xff]
      %v2513 = vld [vmem:[%s3 + $0xc0] sm:$0xff]
      %v2514 = vld [vmem:[%s3 + $0xc8] sm:$0xff]
      %v2515 = vld [vmem:[%s3 + $0xd0] sm:$0xff]
      %v2516 = vld [vmem:[%s3 + $0xd8] sm:$0xff]
      %v2517 = vld [vmem:[%s3 + $0xe0] sm:$0xff]
      %v2518 = vld [vmem:[%s3 + $0xe8] sm:$0xff]
      %v2519 = vld [vmem:[%s3 + $0xf0] sm:$0xff]
      %v2520 = vld [vmem:[%s3 + $0xf8] sm:$0xff]
      %v2521 = vld [vmem:[%s3 + $0x100] sm:$0xff]
      %v2522 = vld [vmem:[%s3 + $0x108] sm:$0xff]
      %v2523 = vld [vmem:[%s3 + $0x110] sm:$0xff]
      %v2524 = vld [vmem:[%s3 + $0x118] sm:$0xff]
      %v2525 = vld [vmem:[%s3 + $0x120] sm:$0xff]
      %v2526 = vld [vmem:[%s3 + $0x128] sm:$0xff]
      %v2527 = vld [vmem:[%s3 + $0x130] sm:$0xff]
      %v2528 = vld [vmem:[%s3 + $0x138] sm:$0xff]
      %v2529 = vld [vmem:[%s3 + $0x140] sm:$0xff]
      %v2530 = vld [vmem:[%s3 + $0x148] sm:$0xff]
      %v2531 = vld [vmem:[%s3 + $0x150] sm:$0xff]
      %v2532 = vld [vmem:[%s3 + $0x158] sm:$0xff]
      %v2533 = vld [vmem:[%s3 + $0x160] sm:$0xff]
      %v2534 = vld [vmem:[%s3 + $0x168] sm:$0xff]
      %v2535 = vld [vmem:[%s3 + $0x170] sm:$0xff]
      %v2536 = vld [vmem:[%s3 + $0x178] sm:$0xff]
      %v2537 = vld [vmem:[%s3 + $0x180] sm:$0xff]
      %v2538 = vld [vmem:[%s3 + $0x188] sm:$0xff]
      %v2539 = vld [vmem:[%s3 + $0x190] sm:$0xff]
      %v2540 = vld [vmem:[%s3 + $0x198] sm:$0xff]
      %v2541 = vld [vmem:[%s3 + $0x1a0] sm:$0xff]
      %v2542 = vld [vmem:[%s3 + $0x1a8] sm:$0xff]
      %v2543 = vld [vmem:[%s3 + $0x1b0] sm:$0xff]
      %v2544 = vld [vmem:[%s3 + $0x1b8] sm:$0xff]
      %v2545 = vld [vmem:[%s3 + $0x1c0] sm:$0xff]
      %v2546 = vld [vmem:[%s3 + $0x1c8] sm:$0xff]
      %v2547 = vld [vmem:[%s3 + $0x1d0] sm:$0xff]
      %v2548 = vld [vmem:[%s3 + $0x1d8] sm:$0xff]
      %v2549 = vld [vmem:[%s3 + $0x1e0] sm:$0xff]
      %v2550 = vld [vmem:[%s3 + $0x1e8] sm:$0xff]
      %v2551 = vld [vmem:[%s3 + $0x1f0] sm:$0xff]
      %v2552 = vld [vmem:[%s3 + $0x1f8] sm:$0xff]
      %v2553 = vld [vmem:[%s3 + $0x200] sm:$0xff]
      %v2554 = vld [vmem:[%s3 + $0x208] sm:$0xff]
      %v2555 = vld [vmem:[%s3 + $0x210] sm:$0xff]
      %v2556 = vld [vmem:[%s3 + $0x218] sm:$0xff]
      %v2557 = vld [vmem:[%s3 + $0x220] sm:$0xff]
      %v2558 = vld [vmem:[%s3 + $0x228] sm:$0xff]
      %v2559 = vld [vmem:[%s3 + $0x230] sm:$0xff]
      %v2560 = vld [vmem:[%s3 + $0x238] sm:$0xff]
      %v2561 = vld [vmem:[%s3 + $0x240] sm:$0xff]
      %v2562 = vld [vmem:[%s3 + $0x248] sm:$0xff]
      %v2563 = vld [vmem:[%s3 + $0x250] sm:$0xff]
      %v2564 = vld [vmem:[%s3 + $0x258] sm:$0xff]
      %v2565 = vld [vmem:[%s3 + $0x260] sm:$0xff]
      %v2566 = vld [vmem:[%s3 + $0x268] sm:$0xff]
      %v2567 = vld [vmem:[%s3 + $0x270] sm:$0xff]
      %v2568 = vld [vmem:[%s3 + $0x278] sm:$0xff]
      %v2569 = vld [vmem:[%s3 + $0x280] sm:$0xff]
      %v2570 = vld [vmem:[%s3 + $0x288] sm:$0xff]
      %v2571 = vld [vmem:[%s3 + $0x290] sm:$0xff]
      %v2572 = vld [vmem:[%s3 + $0x298] sm:$0xff]
      %v2573 = vld [vmem:[%s3 + $0x2a0] sm:$0xff]
      %v2574 = vld [vmem:[%s3 + $0x2a8] sm:$0xff]
      %v2575 = vld [vmem:[%s3 + $0x2b0] sm:$0xff]
      %v2576 = vld [vmem:[%s3 + $0x2b8] sm:$0xff]
      %v2577 = vld [vmem:[%s3 + $0x2c0] sm:$0xff]
      %v2578 = vld [vmem:[%s3 + $0x2c8] sm:$0xff]
      %v2579 = vld [vmem:[%s3 + $0x2d0] sm:$0xff]
      %v2580 = vld [vmem:[%s3 + $0x2d8] sm:$0xff]
      %v2581 = vld [vmem:[%s3 + $0x2e0] sm:$0xff]
      %v2582 = vld [vmem:[%s3 + $0x2e8] sm:$0xff]
      %v2583 = vld [vmem:[%s3 + $0x2f0] sm:$0xff]
      %v2584 = vld [vmem:[%s3 + $0x2f8] sm:$0xff]
      %v2585 = vld [vmem:[%s3 + $0x300] sm:$0xff]
      %v2586 = vld [vmem:[%s3 + $0x308] sm:$0xff]
      %v2587 = vld [vmem:[%s3 + $0x310] sm:$0xff]
      %v2588 = vld [vmem:[%s3 + $0x318] sm:$0xff]
      %v2589 = vld [vmem:[%s3 + $0x320] sm:$0xff]
      %v2590 = vld [vmem:[%s3 + $0x328] sm:$0xff]
      %v2591 = vld [vmem:[%s3 + $0x330] sm:$0xff]
      %v2592 = vld [vmem:[%s3 + $0x338] sm:$0xff]
      %v2593 = vld [vmem:[%s3 + $0x340] sm:$0xff]
      %v2594 = vld [vmem:[%s3 + $0x348] sm:$0xff]
      %v2595 = vld [vmem:[%s3 + $0x350] sm:$0xff]
      %v2596 = vld [vmem:[%s3 + $0x358] sm:$0xff]
      %v2597 = vld [vmem:[%s3 + $0x360] sm:$0xff]
      %v2598 = vld [vmem:[%s3 + $0x368] sm:$0xff]
      %v2599 = vld [vmem:[%s3 + $0x370] sm:$0xff]
      %v2600 = vld [vmem:[%s3 + $0x378] sm:$0xff]
      %v2601 = vld [vmem:[%s3 + $0x380] sm:$0xff]
      %v2602 = vld [vmem:[%s3 + $0x388] sm:$0xff]
      %v2603 = vld [vmem:[%s3 + $0x390] sm:$0xff]
      %v2604 = vld [vmem:[%s3 + $0x398] sm:$0xff]
      %v2605 = vld [vmem:[%s3 + $0x3a0] sm:$0xff]
      %v2606 = vld [vmem:[%s3 + $0x3a8] sm:$0xff]
      %v2607 = vld [vmem:[%s3 + $0x3b0] sm:$0xff]
      %v2608 = vld [vmem:[%s3 + $0x3b8] sm:$0xff]
      %v2609 = vld [vmem:[%s3 + $0x3c0] sm:$0xff]
      %v2610 = vld [vmem:[%s3 + $0x3c8] sm:$0xff]
      %v2611 = vld [vmem:[%s3 + $0x3d0] sm:$0xff]
      %v2612 = vld [vmem:[%s3 + $0x3d8] sm:$0xff]
      %v2613 = vld [vmem:[%s3 + $0x3e0] sm:$0xff]
      %v2614 = vld [vmem:[%s3 + $0x3e8] sm:$0xff]
      %v2615 = vld [vmem:[%s3 + $0x3f0] sm:$0xff]
      %v2616 = vld [vmem:[%s3 + $0x3f8] sm:$0xff]
      %v2617 = vld [vmem:[%s4] sm:$0xf]
      %v2619 = vlaneseq
      %v2620 = vshrl.u32 %v2619, 7
      %v2621 = vsub.s32 0, %v2620
      %v2622 = vrot.slane %v2617, %v2621
      %v2623 = vlaneseq
      %v2624 = vshrl.u32 %v2623, 7
      %v2625 = vsub.s32 1, %v2624
      %v2626 = vrot.slane %v2617, %v2625
      %v2627 = vlaneseq
      %v2628 = vshrl.u32 %v2627, 7
      %v2629 = vsub.s32 2, %v2628
      %v2630 = vrot.slane %v2617, %v2629
      %v2631 = vlaneseq
      %v2632 = vshrl.u32 %v2631, 7
      %v2633 = vsub.s32 3, %v2632
      %v2634 = vrot.slane %v2617, %v2633
      %v2767 = vunpack.c.l.b16 %v2489
      %v2768 = vunpack.c.h.b16 %v2489
      %v2769 = vunpack.c.l.b16 %v2490
      %v2770 = vunpack.c.h.b16 %v2490
      %v2771 = vunpack.c.l.b16 %v2491
      %v2772 = vunpack.c.h.b16 %v2491
      %v2773 = vunpack.c.l.b16 %v2492
      %v2774 = vunpack.c.h.b16 %v2492
      %v2775 = vunpack.c.l.b16 %v2493
      %v2776 = vunpack.c.h.b16 %v2493
      %v2777 = vunpack.c.l.b16 %v2494
      %v2778 = vunpack.c.h.b16 %v2494
      %v2779 = vunpack.c.l.b16 %v2495
      %v2780 = vunpack.c.h.b16 %v2495
      %v2781 = vunpack.c.l.b16 %v2496
      %v2782 = vunpack.c.h.b16 %v2496
      %v2783 = vunpack.c.l.b16 %v2497
      %v2784 = vunpack.c.h.b16 %v2497
      %v2785 = vunpack.c.l.b16 %v2498
      %v2786 = vunpack.c.h.b16 %v2498
      %v2787 = vunpack.c.l.b16 %v2499
      %v2788 = vunpack.c.h.b16 %v2499
      %v2789 = vunpack.c.l.b16 %v2500
      %v2790 = vunpack.c.h.b16 %v2500
      %v2791 = vunpack.c.l.b16 %v2501
      %v2792 = vunpack.c.h.b16 %v2501
      %v2793 = vunpack.c.l.b16 %v2502
      %v2794 = vunpack.c.h.b16 %v2502
      %v2795 = vunpack.c.l.b16 %v2503
      %v2796 = vunpack.c.h.b16 %v2503
      %v2797 = vunpack.c.l.b16 %v2504
      %v2798 = vunpack.c.h.b16 %v2504
      %v2799 = vunpack.c.l.b16 %v2505
      %v2800 = vunpack.c.h.b16 %v2505
      %v2801 = vunpack.c.l.b16 %v2506
      %v2802 = vunpack.c.h.b16 %v2506
      %v2803 = vunpack.c.l.b16 %v2507
      %v2804 = vunpack.c.h.b16 %v2507
      %v2805 = vunpack.c.l.b16 %v2508
      %v2806 = vunpack.c.h.b16 %v2508
      %v2807 = vunpack.c.l.b16 %v2509
      %v2808 = vunpack.c.h.b16 %v2509
      %v2809 = vunpack.c.l.b16 %v2510
      %v2810 = vunpack.c.h.b16 %v2510
      %v2811 = vunpack.c.l.b16 %v2511
      %v2812 = vunpack.c.h.b16 %v2511
      %v2813 = vunpack.c.l.b16 %v2512
      %v2814 = vunpack.c.h.b16 %v2512
      %v2815 = vunpack.c.l.b16 %v2513
      %v2816 = vunpack.c.h.b16 %v2513
      %v2817 = vunpack.c.l.b16 %v2514
      %v2818 = vunpack.c.h.b16 %v2514
      %v2819 = vunpack.c.l.b16 %v2515
      %v2820 = vunpack.c.h.b16 %v2515
      %v2821 = vunpack.c.l.b16 %v2516
      %v2822 = vunpack.c.h.b16 %v2516
      %v2823 = vunpack.c.l.b16 %v2517
      %v2824 = vunpack.c.h.b16 %v2517
      %v2825 = vunpack.c.l.b16 %v2518
      %v2826 = vunpack.c.h.b16 %v2518
      %v2827 = vunpack.c.l.b16 %v2519
      %v2828 = vunpack.c.h.b16 %v2519
      %v2829 = vunpack.c.l.b16 %v2520
      %v2830 = vunpack.c.h.b16 %v2520
      %v2831 = vunpack.c.l.b16 %v2521
      %v2832 = vunpack.c.h.b16 %v2521
      %v2833 = vunpack.c.l.b16 %v2522
      %v2834 = vunpack.c.h.b16 %v2522
      %v2835 = vunpack.c.l.b16 %v2523
      %v2836 = vunpack.c.h.b16 %v2523
      %v2837 = vunpack.c.l.b16 %v2524
      %v2838 = vunpack.c.h.b16 %v2524
      %v2839 = vunpack.c.l.b16 %v2525
      %v2840 = vunpack.c.h.b16 %v2525
      %v2841 = vunpack.c.l.b16 %v2526
      %v2842 = vunpack.c.h.b16 %v2526
      %v2843 = vunpack.c.l.b16 %v2527
      %v2844 = vunpack.c.h.b16 %v2527
      %v2845 = vunpack.c.l.b16 %v2528
      %v2846 = vunpack.c.h.b16 %v2528
      %v2847 = vunpack.c.l.b16 %v2529
      %v2848 = vunpack.c.h.b16 %v2529
      %v2849 = vunpack.c.l.b16 %v2530
      %v2850 = vunpack.c.h.b16 %v2530
      %v2851 = vunpack.c.l.b16 %v2531
      %v2852 = vunpack.c.h.b16 %v2531
      %v2853 = vunpack.c.l.b16 %v2532
      %v2854 = vunpack.c.h.b16 %v2532
      %v2855 = vunpack.c.l.b16 %v2533
      %v2856 = vunpack.c.h.b16 %v2533
      %v2857 = vunpack.c.l.b16 %v2534
      %v2858 = vunpack.c.h.b16 %v2534
      %v2859 = vunpack.c.l.b16 %v2535
      %v2860 = vunpack.c.h.b16 %v2535
      %v2861 = vunpack.c.l.b16 %v2536
      %v2862 = vunpack.c.h.b16 %v2536
      %v2863 = vunpack.c.l.b16 %v2537
      %v2864 = vunpack.c.h.b16 %v2537
      %v2865 = vunpack.c.l.b16 %v2538
      %v2866 = vunpack.c.h.b16 %v2538
      %v2867 = vunpack.c.l.b16 %v2539
      %v2868 = vunpack.c.h.b16 %v2539
      %v2869 = vunpack.c.l.b16 %v2540
      %v2870 = vunpack.c.h.b16 %v2540
      %v2871 = vunpack.c.l.b16 %v2541
      %v2872 = vunpack.c.h.b16 %v2541
      %v2873 = vunpack.c.l.b16 %v2542
      %v2874 = vunpack.c.h.b16 %v2542
      %v2875 = vunpack.c.l.b16 %v2543
      %v2876 = vunpack.c.h.b16 %v2543
      %v2877 = vunpack.c.l.b16 %v2544
      %v2878 = vunpack.c.h.b16 %v2544
      %v2879 = vunpack.c.l.b16 %v2545
      %v2880 = vunpack.c.h.b16 %v2545
      %v2881 = vunpack.c.l.b16 %v2546
      %v2882 = vunpack.c.h.b16 %v2546
      %v2883 = vunpack.c.l.b16 %v2547
      %v2884 = vunpack.c.h.b16 %v2547
      %v2885 = vunpack.c.l.b16 %v2548
      %v2886 = vunpack.c.h.b16 %v2548
      %v2887 = vunpack.c.l.b16 %v2549
      %v2888 = vunpack.c.h.b16 %v2549
      %v2889 = vunpack.c.l.b16 %v2550
      %v2890 = vunpack.c.h.b16 %v2550
      %v2891 = vunpack.c.l.b16 %v2551
      %v2892 = vunpack.c.h.b16 %v2551
      %v2893 = vunpack.c.l.b16 %v2552
      %v2894 = vunpack.c.h.b16 %v2552
      %v2895 = vunpack.c.l.b16 %v2553
      %v2896 = vunpack.c.h.b16 %v2553
      %v2897 = vunpack.c.l.b16 %v2554
      %v2898 = vunpack.c.h.b16 %v2554
      %v2899 = vunpack.c.l.b16 %v2555
      %v2900 = vunpack.c.h.b16 %v2555
      %v2901 = vunpack.c.l.b16 %v2556
      %v2902 = vunpack.c.h.b16 %v2556
      %v2903 = vunpack.c.l.b16 %v2557
      %v2904 = vunpack.c.h.b16 %v2557
      %v2905 = vunpack.c.l.b16 %v2558
      %v2906 = vunpack.c.h.b16 %v2558
      %v2907 = vunpack.c.l.b16 %v2559
      %v2908 = vunpack.c.h.b16 %v2559
      %v2909 = vunpack.c.l.b16 %v2560
      %v2910 = vunpack.c.h.b16 %v2560
      %v2911 = vunpack.c.l.b16 %v2561
      %v2912 = vunpack.c.h.b16 %v2561
      %v2913 = vunpack.c.l.b16 %v2562
      %v2914 = vunpack.c.h.b16 %v2562
      %v2915 = vunpack.c.l.b16 %v2563
      %v2916 = vunpack.c.h.b16 %v2563
      %v2917 = vunpack.c.l.b16 %v2564
      %v2918 = vunpack.c.h.b16 %v2564
      %v2919 = vunpack.c.l.b16 %v2565
      %v2920 = vunpack.c.h.b16 %v2565
      %v2921 = vunpack.c.l.b16 %v2566
      %v2922 = vunpack.c.h.b16 %v2566
      %v2923 = vunpack.c.l.b16 %v2567
      %v2924 = vunpack.c.h.b16 %v2567
      %v2925 = vunpack.c.l.b16 %v2568
      %v2926 = vunpack.c.h.b16 %v2568
      %v2927 = vunpack.c.l.b16 %v2569
      %v2928 = vunpack.c.h.b16 %v2569
      %v2929 = vunpack.c.l.b16 %v2570
      %v2930 = vunpack.c.h.b16 %v2570
      %v2931 = vunpack.c.l.b16 %v2571
      %v2932 = vunpack.c.h.b16 %v2571
      %v2933 = vunpack.c.l.b16 %v2572
      %v2934 = vunpack.c.h.b16 %v2572
      %v2935 = vunpack.c.l.b16 %v2573
      %v2936 = vunpack.c.h.b16 %v2573
      %v2937 = vunpack.c.l.b16 %v2574
      %v2938 = vunpack.c.h.b16 %v2574
      %v2939 = vunpack.c.l.b16 %v2575
      %v2940 = vunpack.c.h.b16 %v2575
      %v2941 = vunpack.c.l.b16 %v2576
      %v2942 = vunpack.c.h.b16 %v2576
      %v2943 = vunpack.c.l.b16 %v2577
      %v2944 = vunpack.c.h.b16 %v2577
      %v2945 = vunpack.c.l.b16 %v2578
      %v2946 = vunpack.c.h.b16 %v2578
      %v2947 = vunpack.c.l.b16 %v2579
      %v2948 = vunpack.c.h.b16 %v2579
      %v2949 = vunpack.c.l.b16 %v2580
      %v2950 = vunpack.c.h.b16 %v2580
      %v2951 = vunpack.c.l.b16 %v2581
      %v2952 = vunpack.c.h.b16 %v2581
      %v2953 = vunpack.c.l.b16 %v2582
      %v2954 = vunpack.c.h.b16 %v2582
      %v2955 = vunpack.c.l.b16 %v2583
      %v2956 = vunpack.c.h.b16 %v2583
      %v2957 = vunpack.c.l.b16 %v2584
      %v2958 = vunpack.c.h.b16 %v2584
      %v2959 = vunpack.c.l.b16 %v2585
      %v2960 = vunpack.c.h.b16 %v2585
      %v2961 = vunpack.c.l.b16 %v2586
      %v2962 = vunpack.c.h.b16 %v2586
      %v2963 = vunpack.c.l.b16 %v2587
      %v2964 = vunpack.c.h.b16 %v2587
      %v2965 = vunpack.c.l.b16 %v2588
      %v2966 = vunpack.c.h.b16 %v2588
      %v2967 = vunpack.c.l.b16 %v2589
      %v2968 = vunpack.c.h.b16 %v2589
      %v2969 = vunpack.c.l.b16 %v2590
      %v2970 = vunpack.c.h.b16 %v2590
      %v2971 = vunpack.c.l.b16 %v2591
      %v2972 = vunpack.c.h.b16 %v2591
      %v2973 = vunpack.c.l.b16 %v2592
      %v2974 = vunpack.c.h.b16 %v2592
      %v2975 = vunpack.c.l.b16 %v2593
      %v2976 = vunpack.c.h.b16 %v2593
      %v2977 = vunpack.c.l.b16 %v2594
      %v2978 = vunpack.c.h.b16 %v2594
      %v2979 = vunpack.c.l.b16 %v2595
      %v2980 = vunpack.c.h.b16 %v2595
      %v2981 = vunpack.c.l.b16 %v2596
      %v2982 = vunpack.c.h.b16 %v2596
      %v2983 = vunpack.c.l.b16 %v2597
      %v2984 = vunpack.c.h.b16 %v2597
      %v2985 = vunpack.c.l.b16 %v2598
      %v2986 = vunpack.c.h.b16 %v2598
      %v2987 = vunpack.c.l.b16 %v2599
      %v2988 = vunpack.c.h.b16 %v2599
      %v2989 = vunpack.c.l.b16 %v2600
      %v2990 = vunpack.c.h.b16 %v2600
      %v2991 = vunpack.c.l.b16 %v2601
      %v2992 = vunpack.c.h.b16 %v2601
      %v2993 = vunpack.c.l.b16 %v2602
      %v2994 = vunpack.c.h.b16 %v2602
      %v2995 = vunpack.c.l.b16 %v2603
      %v2996 = vunpack.c.h.b16 %v2603
      %v2997 = vunpack.c.l.b16 %v2604
      %v2998 = vunpack.c.h.b16 %v2604
      %v2999 = vunpack.c.l.b16 %v2605
      %v3000 = vunpack.c.h.b16 %v2605
      %v3001 = vunpack.c.l.b16 %v2606
      %v3002 = vunpack.c.h.b16 %v2606
      %v3003 = vunpack.c.l.b16 %v2607
      %v3004 = vunpack.c.h.b16 %v2607
      %v3005 = vunpack.c.l.b16 %v2608
      %v3006 = vunpack.c.h.b16 %v2608
      %v3007 = vunpack.c.l.b16 %v2609
      %v3008 = vunpack.c.h.b16 %v2609
      %v3009 = vunpack.c.l.b16 %v2610
      %v3010 = vunpack.c.h.b16 %v2610
      %v3011 = vunpack.c.l.b16 %v2611
      %v3012 = vunpack.c.h.b16 %v2611
      %v3013 = vunpack.c.l.b16 %v2612
      %v3014 = vunpack.c.h.b16 %v2612
      %v3015 = vunpack.c.l.b16 %v2613
      %v3016 = vunpack.c.h.b16 %v2613
      %v3017 = vunpack.c.l.b16 %v2614
      %v3018 = vunpack.c.h.b16 %v2614
      %v3019 = vunpack.c.l.b16 %v2615
      %v3020 = vunpack.c.h.b16 %v2615
      %v3021 = vunpack.c.l.b16 %v2616
      %v3022 = vunpack.c.h.b16 %v2616
      %v3023 = vpack.c.b16 %v2771, %v2767
      %v3024 = vpack.c.b16 %v2772, %v2768
      %v3025 = vpack.c.b16 %v2773, %v2769
      %v3026 = vpack.c.b16 %v2774, %v2770
      %v3027 = vpack.c.b16 %v2779, %v2775
      %v3028 = vpack.c.b16 %v2780, %v2776
      %v3029 = vpack.c.b16 %v2781, %v2777
      %v3030 = vpack.c.b16 %v2782, %v2778
      %v3031 = vpack.c.b16 %v2787, %v2783
      %v3032 = vpack.c.b16 %v2788, %v2784
      %v3033 = vpack.c.b16 %v2789, %v2785
      %v3034 = vpack.c.b16 %v2790, %v2786
      %v3035 = vpack.c.b16 %v2795, %v2791
      %v3036 = vpack.c.b16 %v2796, %v2792
      %v3037 = vpack.c.b16 %v2797, %v2793
      %v3038 = vpack.c.b16 %v2798, %v2794
      %v3039 = vpack.c.b16 %v2803, %v2799
      %v3040 = vpack.c.b16 %v2804, %v2800
      %v3041 = vpack.c.b16 %v2805, %v2801
      %v3042 = vpack.c.b16 %v2806, %v2802
      %v3043 = vpack.c.b16 %v2811, %v2807
      %v3044 = vpack.c.b16 %v2812, %v2808
      %v3045 = vpack.c.b16 %v2813, %v2809
      %v3046 = vpack.c.b16 %v2814, %v2810
      %v3047 = vpack.c.b16 %v2819, %v2815
      %v3048 = vpack.c.b16 %v2820, %v2816
      %v3049 = vpack.c.b16 %v2821, %v2817
      %v3050 = vpack.c.b16 %v2822, %v2818
      %v3051 = vpack.c.b16 %v2827, %v2823
      %v3052 = vpack.c.b16 %v2828, %v2824
      %v3053 = vpack.c.b16 %v2829, %v2825
      %v3054 = vpack.c.b16 %v2830, %v2826
      %v3055 = vpack.c.b16 %v2835, %v2831
      %v3056 = vpack.c.b16 %v2836, %v2832
      %v3057 = vpack.c.b16 %v2837, %v2833
      %v3058 = vpack.c.b16 %v2838, %v2834
      %v3059 = vpack.c.b16 %v2843, %v2839
      %v3060 = vpack.c.b16 %v2844, %v2840
      %v3061 = vpack.c.b16 %v2845, %v2841
      %v3062 = vpack.c.b16 %v2846, %v2842
      %v3063 = vpack.c.b16 %v2851, %v2847
      %v3064 = vpack.c.b16 %v2852, %v2848
      %v3065 = vpack.c.b16 %v2853, %v2849
      %v3066 = vpack.c.b16 %v2854, %v2850
      %v3067 = vpack.c.b16 %v2859, %v2855
      %v3068 = vpack.c.b16 %v2860, %v2856
      %v3069 = vpack.c.b16 %v2861, %v2857
      %v3070 = vpack.c.b16 %v2862, %v2858
      %v3071 = vpack.c.b16 %v2867, %v2863
      %v3072 = vpack.c.b16 %v2868, %v2864
      %v3073 = vpack.c.b16 %v2869, %v2865
      %v3074 = vpack.c.b16 %v2870, %v2866
      %v3075 = vpack.c.b16 %v2875, %v2871
      %v3076 = vpack.c.b16 %v2876, %v2872
      %v3077 = vpack.c.b16 %v2877, %v2873
      %v3078 = vpack.c.b16 %v2878, %v2874
      %v3079 = vpack.c.b16 %v2883, %v2879
      %v3080 = vpack.c.b16 %v2884, %v2880
      %v3081 = vpack.c.b16 %v2885, %v2881
      %v3082 = vpack.c.b16 %v2886, %v2882
      %v3083 = vpack.c.b16 %v2891, %v2887
      %v3084 = vpack.c.b16 %v2892, %v2888
      %v3085 = vpack.c.b16 %v2893, %v2889
      %v3086 = vpack.c.b16 %v2894, %v2890
      %v3087 = vpack.c.b16 %v2899, %v2895
      %v3088 = vpack.c.b16 %v2900, %v2896
      %v3089 = vpack.c.b16 %v2901, %v2897
      %v3090 = vpack.c.b16 %v2902, %v2898
      %v3091 = vpack.c.b16 %v2907, %v2903
      %v3092 = vpack.c.b16 %v2908, %v2904
      %v3093 = vpack.c.b16 %v2909, %v2905
      %v3094 = vpack.c.b16 %v2910, %v2906
      %v3095 = vpack.c.b16 %v2915, %v2911
      %v3096 = vpack.c.b16 %v2916, %v2912
      %v3097 = vpack.c.b16 %v2917, %v2913
      %v3098 = vpack.c.b16 %v2918, %v2914
      %v3099 = vpack.c.b16 %v2923, %v2919
      %v3100 = vpack.c.b16 %v2924, %v2920
      %v3101 = vpack.c.b16 %v2925, %v2921
      %v3102 = vpack.c.b16 %v2926, %v2922
      %v3103 = vpack.c.b16 %v2931, %v2927
      %v3104 = vpack.c.b16 %v2932, %v2928
      %v3105 = vpack.c.b16 %v2933, %v2929
      %v3106 = vpack.c.b16 %v2934, %v2930
      %v3107 = vpack.c.b16 %v2939, %v2935
      %v3108 = vpack.c.b16 %v2940, %v2936
      %v3109 = vpack.c.b16 %v2941, %v2937
      %v3110 = vpack.c.b16 %v2942, %v2938
      %v3111 = vpack.c.b16 %v2947, %v2943
      %v3112 = vpack.c.b16 %v2948, %v2944
      %v3113 = vpack.c.b16 %v2949, %v2945
      %v3114 = vpack.c.b16 %v2950, %v2946
      %v3115 = vpack.c.b16 %v2955, %v2951
      %v3116 = vpack.c.b16 %v2956, %v2952
      %v3117 = vpack.c.b16 %v2957, %v2953
      %v3118 = vpack.c.b16 %v2958, %v2954
      %v3119 = vpack.c.b16 %v2963, %v2959
      %v3120 = vpack.c.b16 %v2964, %v2960
      %v3121 = vpack.c.b16 %v2965, %v2961
      %v3122 = vpack.c.b16 %v2966, %v2962
      %v3123 = vpack.c.b16 %v2971, %v2967
      %v3124 = vpack.c.b16 %v2972, %v2968
      %v3125 = vpack.c.b16 %v2973, %v2969
      %v3126 = vpack.c.b16 %v2974, %v2970
      %v3127 = vpack.c.b16 %v2979, %v2975
      %v3128 = vpack.c.b16 %v2980, %v2976
      %v3129 = vpack.c.b16 %v2981, %v2977
      %v3130 = vpack.c.b16 %v2982, %v2978
      %v3131 = vpack.c.b16 %v2987, %v2983
      %v3132 = vpack.c.b16 %v2988, %v2984
      %v3133 = vpack.c.b16 %v2989, %v2985
      %v3134 = vpack.c.b16 %v2990, %v2986
      %v3135 = vpack.c.b16 %v2995, %v2991
      %v3136 = vpack.c.b16 %v2996, %v2992
      %v3137 = vpack.c.b16 %v2997, %v2993
      %v3138 = vpack.c.b16 %v2998, %v2994
      %v3139 = vpack.c.b16 %v3003, %v2999
      %v3140 = vpack.c.b16 %v3004, %v3000
      %v3141 = vpack.c.b16 %v3005, %v3001
      %v3142 = vpack.c.b16 %v3006, %v3002
      %v3143 = vpack.c.b16 %v3011, %v3007
      %v3144 = vpack.c.b16 %v3012, %v3008
      %v3145 = vpack.c.b16 %v3013, %v3009
      %v3146 = vpack.c.b16 %v3014, %v3010
      %v3147 = vpack.c.b16 %v3019, %v3015
      %v3148 = vpack.c.b16 %v3020, %v3016
      %v3149 = vpack.c.b16 %v3021, %v3017
      %v3150 = vpack.c.b16 %v3022, %v3018
      %3279 = vmatprep.subr.bf16.mxu0 %v3052
      %3280 = vmatpush1.bf16.xpose.msra.mxu0 %v3051
      %3281 = vmatprep.subr.bf16.mxu0 %v3048
      %3282 = vmatpush1.bf16.xpose.msra.mxu0 %v3047
      %3283 = vmatprep.subr.bf16.mxu0 %v3044
      %3284 = vmatpush1.bf16.xpose.msra.mxu0 %v3043
      %3285 = vmatprep.subr.bf16.mxu0 %v3040
      %3286 = vmatpush1.bf16.xpose.msra.mxu0 %v3039
      %3287 = vmatprep.subr.bf16.mxu0 %v3036
      %3288 = vmatpush1.bf16.xpose.msra.mxu0 %v3035
      %3289 = vmatprep.subr.bf16.mxu0 %v3032
      %3290 = vmatpush1.bf16.xpose.msra.mxu0 %v3031
      %3291 = vmatprep.subr.bf16.mxu0 %v3028
      %3292 = vmatpush1.bf16.xpose.msra.mxu0 %v3027
      %3293 = vmatprep.subr.bf16.mxu0 %v3024
      %3294 = vmatpush1.bf16.xpose.msra.mxu0 %v3023
      %3295 = vmatprep.subr.bf16.mxu0 %v3084
      %3296 = vmatpush2.bf16.xpose.msra.mxu0 %v3083
      %3297 = vmatprep.subr.bf16.mxu0 %v3080
      %3298 = vmatpush2.bf16.xpose.msra.mxu0 %v3079
      %3299 = vmatprep.subr.bf16.mxu0 %v3076
      %3300 = vmatpush2.bf16.xpose.msra.mxu0 %v3075
      %3301 = vmatprep.subr.bf16.mxu0 %v3072
      %3302 = vmatpush2.bf16.xpose.msra.mxu0 %v3071
      %3303 = vmatprep.subr.bf16.mxu0 %v3068
      %3304 = vmatpush2.bf16.xpose.msra.mxu0 %v3067
      %3305 = vmatprep.subr.bf16.mxu0 %v3064
      %3306 = vmatpush2.bf16.xpose.msra.mxu0 %v3063
      %3307 = vmatprep.subr.bf16.mxu0 %v3060
      %3308 = vmatpush2.bf16.xpose.msra.mxu0 %v3059
      %3309 = vmatprep.subr.bf16.mxu0 %v3056
      %3310 = vmatpush2.bf16.xpose.msra.mxu0 %v3055
      %3311 = vmatprep.mubr.bf16.mxu0 %v2426
      %3312 = vmatmul.mubr.bf16.gmra.mxu0 %v2425
      %v3313 = vpop.f32.mrf.mxu0
      %v3314 = vadd.f32 %v2622, %v3313
      %v3315 = vpop.f32.mrf.mxu0
      %v3316 = vadd.f32 %v2626, %v3315
      %v3317 = vpop.f32.mrf.mxu0
      %v3318 = vadd.f32 %v2622, %v3317
      %v3319 = vpop.f32.mrf.mxu0
      %v3320 = vadd.f32 %v2626, %v3319
      %3321 = vmatprep.mubr.bf16.mxu0 %v2430
      %3322 = vmatmul.mubr.bf16.gmra.mxu0 %v2429
      %v3323 = vpop.f32.mrf.mxu0
      %v3324 = vadd.f32 %v2622, %v3323
      %v3325 = vpop.f32.mrf.mxu0
      %v3326 = vadd.f32 %v2626, %v3325
      %v3327 = vpop.f32.mrf.mxu0
      %v3328 = vadd.f32 %v2622, %v3327
      %v3329 = vpop.f32.mrf.mxu0
      %v3330 = vadd.f32 %v2626, %v3329
      %3331 = vmatprep.mubr.bf16.mxu0 %v2434
      %3332 = vmatmul.mubr.bf16.gmra.mxu0 %v2433
      %v3333 = vpop.f32.mrf.mxu0
      %v3334 = vadd.f32 %v2622, %v3333
      %v3335 = vpop.f32.mrf.mxu0
      %v3336 = vadd.f32 %v2626, %v3335
      %v3337 = vpop.f32.mrf.mxu0
      %v3338 = vadd.f32 %v2622, %v3337
      %v3339 = vpop.f32.mrf.mxu0
      %v3340 = vadd.f32 %v2626, %v3339
      %3341 = vmatprep.mubr.bf16.mxu0 %v2438
      %3342 = vmatmul.mubr.bf16.gmra.mxu0 %v2437
      %v3343 = vpop.f32.mrf.mxu0
      %v3344 = vadd.f32 %v2622, %v3343
      %v3345 = vpop.f32.mrf.mxu0
      %v3346 = vadd.f32 %v2626, %v3345
      %v3347 = vpop.f32.mrf.mxu0
      %v3348 = vadd.f32 %v2622, %v3347
      %v3349 = vpop.f32.mrf.mxu0
      %v3350 = vadd.f32 %v2626, %v3349
      %3351 = vmatprep.mubr.bf16.mxu0 %v2442
      %3352 = vmatmul.mubr.bf16.gmra.mxu0 %v2441
      %v3353 = vpop.f32.mrf.mxu0
      %v3354 = vadd.f32 %v2622, %v3353
      %v3355 = vpop.f32.mrf.mxu0
      %v3356 = vadd.f32 %v2626, %v3355
      %v3357 = vpop.f32.mrf.mxu0
      %v3358 = vadd.f32 %v2622, %v3357
      %v3359 = vpop.f32.mrf.mxu0
      %v3360 = vadd.f32 %v2626, %v3359
      %3361 = vmatprep.mubr.bf16.mxu0 %v2446
      %3362 = vmatmul.mubr.bf16.gmra.mxu0 %v2445
      %v3363 = vpop.f32.mrf.mxu0
      %v3364 = vadd.f32 %v2622, %v3363
      %v3365 = vpop.f32.mrf.mxu0
      %v3366 = vadd.f32 %v2626, %v3365
      %v3367 = vpop.f32.mrf.mxu0
      %v3368 = vadd.f32 %v2622, %v3367
      %v3369 = vpop.f32.mrf.mxu0
      %v3370 = vadd.f32 %v2626, %v3369
      %3371 = vmatprep.mubr.bf16.mxu0 %v2450
      %3372 = vmatmul.mubr.bf16.gmra.mxu0 %v2449
      %v3373 = vpop.f32.mrf.mxu0
      %v3374 = vadd.f32 %v2622, %v3373
      %v3375 = vpop.f32.mrf.mxu0
      %v3376 = vadd.f32 %v2626, %v3375
      %v3377 = vpop.f32.mrf.mxu0
      %v3378 = vadd.f32 %v2622, %v3377
      %v3379 = vpop.f32.mrf.mxu0
      %v3380 = vadd.f32 %v2626, %v3379
      %3381 = vmatprep.mubr.bf16.mxu0 %v2454
      %3382 = vmatmul.mubr.bf16.gmra.mxu0 %v2453
      %v3383 = vpop.f32.mrf.mxu0
      %v3384 = vadd.f32 %v2622, %v3383
      %v3385 = vpop.f32.mrf.mxu0
      %v3386 = vadd.f32 %v2626, %v3385
      %v3387 = vpop.f32.mrf.mxu0
      %v3388 = vadd.f32 %v2622, %v3387
      %v3389 = vpop.f32.mrf.mxu0
      %v3390 = vadd.f32 %v2626, %v3389
      %3391 = vmatprep.mubr.bf16.mxu0 %v2458
      %3392 = vmatmul.mubr.bf16.gmra.mxu0 %v2457
      %v3393 = vpop.f32.mrf.mxu0
      %v3394 = vadd.f32 %v2622, %v3393
      %v3395 = vpop.f32.mrf.mxu0
      %v3396 = vadd.f32 %v2626, %v3395
      %v3397 = vpop.f32.mrf.mxu0
      %v3398 = vadd.f32 %v2622, %v3397
      %v3399 = vpop.f32.mrf.mxu0
      %v3400 = vadd.f32 %v2626, %v3399
      %3401 = vmatprep.mubr.bf16.mxu0 %v2462
      %3402 = vmatmul.mubr.bf16.gmra.mxu0 %v2461
      %v3403 = vpop.f32.mrf.mxu0
      %v3404 = vadd.f32 %v2622, %v3403
      %v3405 = vpop.f32.mrf.mxu0
      %v3406 = vadd.f32 %v2626, %v3405
      %v3407 = vpop.f32.mrf.mxu0
      %v3408 = vadd.f32 %v2622, %v3407
      %v3409 = vpop.f32.mrf.mxu0
      %v3410 = vadd.f32 %v2626, %v3409
      %3411 = vmatprep.mubr.bf16.mxu0 %v2466
      %3412 = vmatmul.mubr.bf16.gmra.mxu0 %v2465
      %v3413 = vpop.f32.mrf.mxu0
      %v3414 = vadd.f32 %v2622, %v3413
      %v3415 = vpop.f32.mrf.mxu0
      %v3416 = vadd.f32 %v2626, %v3415
      %v3417 = vpop.f32.mrf.mxu0
      %v3418 = vadd.f32 %v2622, %v3417
      %v3419 = vpop.f32.mrf.mxu0
      %v3420 = vadd.f32 %v2626, %v3419
      %3421 = vmatprep.mubr.bf16.mxu0 %v2470
      %3422 = vmatmul.mubr.bf16.gmra.mxu0 %v2469
      %v3423 = vpop.f32.mrf.mxu0
      %v3424 = vadd.f32 %v2622, %v3423
      %v3425 = vpop.f32.mrf.mxu0
      %v3426 = vadd.f32 %v2626, %v3425
      %v3427 = vpop.f32.mrf.mxu0
      %v3428 = vadd.f32 %v2622, %v3427
      %v3429 = vpop.f32.mrf.mxu0
      %v3430 = vadd.f32 %v2626, %v3429
      %3431 = vmatprep.mubr.bf16.mxu0 %v2474
      %3432 = vmatmul.mubr.bf16.gmra.mxu0 %v2473
      %v3433 = vpop.f32.mrf.mxu0
      %v3434 = vadd.f32 %v2622, %v3433
      %v3435 = vpop.f32.mrf.mxu0
      %v3436 = vadd.f32 %v2626, %v3435
      %v3437 = vpop.f32.mrf.mxu0
      %v3438 = vadd.f32 %v2622, %v3437
      %v3439 = vpop.f32.mrf.mxu0
      %v3440 = vadd.f32 %v2626, %v3439
      %3441 = vmatprep.mubr.bf16.mxu0 %v2478
      %3442 = vmatmul.mubr.bf16.gmra.mxu0 %v2477
      %v3443 = vpop.f32.mrf.mxu0
      %v3444 = vadd.f32 %v2622, %v3443
      %v3445 = vpop.f32.mrf.mxu0
      %v3446 = vadd.f32 %v2626, %v3445
      %v3447 = vpop.f32.mrf.mxu0
      %v3448 = vadd.f32 %v2622, %v3447
      %v3449 = vpop.f32.mrf.mxu0
      %v3450 = vadd.f32 %v2626, %v3449
      %3451 = vmatprep.mubr.bf16.mxu0 %v2482
      %3452 = vmatmul.mubr.bf16.gmra.mxu0 %v2481
      %v3453 = vpop.f32.mrf.mxu0
      %v3454 = vadd.f32 %v2622, %v3453
      %v3455 = vpop.f32.mrf.mxu0
      %v3456 = vadd.f32 %v2626, %v3455
      %v3457 = vpop.f32.mrf.mxu0
      %v3458 = vadd.f32 %v2622, %v3457
      %v3459 = vpop.f32.mrf.mxu0
      %v3460 = vadd.f32 %v2626, %v3459
      %3461 = vmatprep.mubr.bf16.mxu0 %v2486
      %3462 = vmatmul.mubr.bf16.gmra.mxu0 %v2485
      %v3463 = vpop.f32.mrf.mxu0
      %v3464 = vadd.f32 %v2622, %v3463
      %v3465 = vpop.f32.mrf.mxu0
      %v3466 = vadd.f32 %v2626, %v3465
      %v3467 = vpop.f32.mrf.mxu0
      %v3468 = vadd.f32 %v2622, %v3467
      %v3469 = vpop.f32.mrf.mxu0
      %v3470 = vadd.f32 %v2626, %v3469
      %3471 = vdwg.mxu0
      %3472 = vmatprep.subr.bf16.mxu0 %v3054
      %3473 = vmatpush1.bf16.xpose.msra.mxu0 %v3053
      %3474 = vmatprep.subr.bf16.mxu0 %v3050
      %3475 = vmatpush1.bf16.xpose.msra.mxu0 %v3049
      %3476 = vmatprep.subr.bf16.mxu0 %v3046
      %3477 = vmatpush1.bf16.xpose.msra.mxu0 %v3045
      %3478 = vmatprep.subr.bf16.mxu0 %v3042
      %3479 = vmatpush1.bf16.xpose.msra.mxu0 %v3041
      %3480 = vmatprep.subr.bf16.mxu0 %v3038
      %3481 = vmatpush1.bf16.xpose.msra.mxu0 %v3037
      %3482 = vmatprep.subr.bf16.mxu0 %v3034
      %3483 = vmatpush1.bf16.xpose.msra.mxu0 %v3033
      %3484 = vmatprep.subr.bf16.mxu0 %v3030
      %3485 = vmatpush1.bf16.xpose.msra.mxu0 %v3029
      %3486 = vmatprep.subr.bf16.mxu0 %v3026
      %3487 = vmatpush1.bf16.xpose.msra.mxu0 %v3025
      %3488 = vmatprep.subr.bf16.mxu0 %v3086
      %3489 = vmatpush2.bf16.xpose.msra.mxu0 %v3085
      %3490 = vmatprep.subr.bf16.mxu0 %v3082
      %3491 = vmatpush2.bf16.xpose.msra.mxu0 %v3081
      %3492 = vmatprep.subr.bf16.mxu0 %v3078
      %3493 = vmatpush2.bf16.xpose.msra.mxu0 %v3077
      %3494 = vmatprep.subr.bf16.mxu0 %v3074
      %3495 = vmatpush2.bf16.xpose.msra.mxu0 %v3073
      %3496 = vmatprep.subr.bf16.mxu0 %v3070
      %3497 = vmatpush2.bf16.xpose.msra.mxu0 %v3069
      %3498 = vmatprep.subr.bf16.mxu0 %v3066
      %3499 = vmatpush2.bf16.xpose.msra.mxu0 %v3065
      %3500 = vmatprep.subr.bf16.mxu0 %v3062
      %3501 = vmatpush2.bf16.xpose.msra.mxu0 %v3061
      %3502 = vmatprep.subr.bf16.mxu0 %v3058
      %3503 = vmatpush2.bf16.xpose.msra.mxu0 %v3057
      %3504 = vmatprep.mubr.bf16.mxu0 %v2428
      %3505 = vmatmul.mubr.bf16.gmra.mxu0 %v2427
      %v3506 = vpop.f32.mrf.mxu0
      %v3507 = vadd.f32 %v3314, %v3506
      %v3508 = vpop.f32.mrf.mxu0
      %v3509 = vadd.f32 %v3316, %v3508
      %v3510 = vpop.f32.mrf.mxu0
      %v3511 = vadd.f32 %v3318, %v3510
      %v3512 = vpop.f32.mrf.mxu0
      %v3513 = vadd.f32 %v3320, %v3512
      %3514 = vmatprep.mubr.bf16.mxu0 %v2432
      %3515 = vmatmul.mubr.bf16.gmra.mxu0 %v2431
      %v3516 = vpop.f32.mrf.mxu0
      %v3517 = vadd.f32 %v3324, %v3516
      %v3518 = vpop.f32.mrf.mxu0
      %v3519 = vadd.f32 %v3326, %v3518
      %v3520 = vpop.f32.mrf.mxu0
      %v3521 = vadd.f32 %v3328, %v3520
      %v3522 = vpop.f32.mrf.mxu0
      %v3523 = vadd.f32 %v3330, %v3522
      %3524 = vmatprep.mubr.bf16.mxu0 %v2436
      %3525 = vmatmul.mubr.bf16.gmra.mxu0 %v2435
      %v3526 = vpop.f32.mrf.mxu0
      %v3527 = vadd.f32 %v3334, %v3526
      %v3528 = vpop.f32.mrf.mxu0
      %v3529 = vadd.f32 %v3336, %v3528
      %v3530 = vpop.f32.mrf.mxu0
      %v3531 = vadd.f32 %v3338, %v3530
      %v3532 = vpop.f32.mrf.mxu0
      %v3533 = vadd.f32 %v3340, %v3532
      %3534 = vmatprep.mubr.bf16.mxu0 %v2440
      %3535 = vmatmul.mubr.bf16.gmra.mxu0 %v2439
      %v3536 = vpop.f32.mrf.mxu0
      %v3537 = vadd.f32 %v3344, %v3536
      %v3538 = vpop.f32.mrf.mxu0
      %v3539 = vadd.f32 %v3346, %v3538
      %v3540 = vpop.f32.mrf.mxu0
      %v3541 = vadd.f32 %v3348, %v3540
      %v3542 = vpop.f32.mrf.mxu0
      %v3543 = vadd.f32 %v3350, %v3542
      %3544 = vmatprep.mubr.bf16.mxu0 %v2444
      %3545 = vmatmul.mubr.bf16.gmra.mxu0 %v2443
      %v3546 = vpop.f32.mrf.mxu0
      %v3547 = vadd.f32 %v3354, %v3546
      %v3548 = vpop.f32.mrf.mxu0
      %v3549 = vadd.f32 %v3356, %v3548
      %v3550 = vpop.f32.mrf.mxu0
      %v3551 = vadd.f32 %v3358, %v3550
      %v3552 = vpop.f32.mrf.mxu0
      %v3553 = vadd.f32 %v3360, %v3552
      %3554 = vmatprep.mubr.bf16.mxu0 %v2448
      %3555 = vmatmul.mubr.bf16.gmra.mxu0 %v2447
      %v3556 = vpop.f32.mrf.mxu0
      %v3557 = vadd.f32 %v3364, %v3556
      %v3558 = vpop.f32.mrf.mxu0
      %v3559 = vadd.f32 %v3366, %v3558
      %v3560 = vpop.f32.mrf.mxu0
      %v3561 = vadd.f32 %v3368, %v3560
      %v3562 = vpop.f32.mrf.mxu0
      %v3563 = vadd.f32 %v3370, %v3562
      %3564 = vmatprep.mubr.bf16.mxu0 %v2452
      %3565 = vmatmul.mubr.bf16.gmra.mxu0 %v2451
      %v3566 = vpop.f32.mrf.mxu0
      %v3567 = vadd.f32 %v3374, %v3566
      %v3568 = vpop.f32.mrf.mxu0
      %v3569 = vadd.f32 %v3376, %v3568
      %v3570 = vpop.f32.mrf.mxu0
      %v3571 = vadd.f32 %v3378, %v3570
      %v3572 = vpop.f32.mrf.mxu0
      %v3573 = vadd.f32 %v3380, %v3572
      %3574 = vmatprep.mubr.bf16.mxu0 %v2456
      %3575 = vmatmul.mubr.bf16.gmra.mxu0 %v2455
      %v3576 = vpop.f32.mrf.mxu0
      %v3577 = vadd.f32 %v3384, %v3576
      %v3578 = vpop.f32.mrf.mxu0
      %v3579 = vadd.f32 %v3386, %v3578
      %v3580 = vpop.f32.mrf.mxu0
      %v3581 = vadd.f32 %v3388, %v3580
      %v3582 = vpop.f32.mrf.mxu0
      %v3583 = vadd.f32 %v3390, %v3582
      %3584 = vmatprep.mubr.bf16.mxu0 %v2460
      %3585 = vmatmul.mubr.bf16.gmra.mxu0 %v2459
      %v3586 = vpop.f32.mrf.mxu0
      %v3587 = vadd.f32 %v3394, %v3586
      %v3588 = vpop.f32.mrf.mxu0
      %v3589 = vadd.f32 %v3396, %v3588
      %v3590 = vpop.f32.mrf.mxu0
      %v3591 = vadd.f32 %v3398, %v3590
      %v3592 = vpop.f32.mrf.mxu0
      %v3593 = vadd.f32 %v3400, %v3592
      %3594 = vmatprep.mubr.bf16.mxu0 %v2464
      %3595 = vmatmul.mubr.bf16.gmra.mxu0 %v2463
      %v3596 = vpop.f32.mrf.mxu0
      %v3597 = vadd.f32 %v3404, %v3596
      %v3598 = vpop.f32.mrf.mxu0
      %v3599 = vadd.f32 %v3406, %v3598
      %v3600 = vpop.f32.mrf.mxu0
      %v3601 = vadd.f32 %v3408, %v3600
      %v3602 = vpop.f32.mrf.mxu0
      %v3603 = vadd.f32 %v3410, %v3602
      %3604 = vmatprep.mubr.bf16.mxu0 %v2468
      %3605 = vmatmul.mubr.bf16.gmra.mxu0 %v2467
      %v3606 = vpop.f32.mrf.mxu0
      %v3607 = vadd.f32 %v3414, %v3606
      %v3608 = vpop.f32.mrf.mxu0
      %v3609 = vadd.f32 %v3416, %v3608
      %v3610 = vpop.f32.mrf.mxu0
      %v3611 = vadd.f32 %v3418, %v3610
      %v3612 = vpop.f32.mrf.mxu0
      %v3613 = vadd.f32 %v3420, %v3612
      %3614 = vmatprep.mubr.bf16.mxu0 %v2472
      %3615 = vmatmul.mubr.bf16.gmra.mxu0 %v2471
      %v3616 = vpop.f32.mrf.mxu0
      %v3617 = vadd.f32 %v3424, %v3616
      %v3618 = vpop.f32.mrf.mxu0
      %v3619 = vadd.f32 %v3426, %v3618
      %v3620 = vpop.f32.mrf.mxu0
      %v3621 = vadd.f32 %v3428, %v3620
      %v3622 = vpop.f32.mrf.mxu0
      %v3623 = vadd.f32 %v3430, %v3622
      %3624 = vmatprep.mubr.bf16.mxu0 %v2476
      %3625 = vmatmul.mubr.bf16.gmra.mxu0 %v2475
      %v3626 = vpop.f32.mrf.mxu0
      %v3627 = vadd.f32 %v3434, %v3626
      %v3628 = vpop.f32.mrf.mxu0
      %v3629 = vadd.f32 %v3436, %v3628
      %v3630 = vpop.f32.mrf.mxu0
      %v3631 = vadd.f32 %v3438, %v3630
      %v3632 = vpop.f32.mrf.mxu0
      %v3633 = vadd.f32 %v3440, %v3632
      %3634 = vmatprep.mubr.bf16.mxu0 %v2480
      %3635 = vmatmul.mubr.bf16.gmra.mxu0 %v2479
      %v3636 = vpop.f32.mrf.mxu0
      %v3637 = vadd.f32 %v3444, %v3636
      %v3638 = vpop.f32.mrf.mxu0
      %v3639 = vadd.f32 %v3446, %v3638
      %v3640 = vpop.f32.mrf.mxu0
      %v3641 = vadd.f32 %v3448, %v3640
      %v3642 = vpop.f32.mrf.mxu0
      %v3643 = vadd.f32 %v3450, %v3642
      %3644 = vmatprep.mubr.bf16.mxu0 %v2484
      %3645 = vmatmul.mubr.bf16.gmra.mxu0 %v2483
      %v3646 = vpop.f32.mrf.mxu0
      %v3647 = vadd.f32 %v3454, %v3646
      %v3648 = vpop.f32.mrf.mxu0
      %v3649 = vadd.f32 %v3456, %v3648
      %v3650 = vpop.f32.mrf.mxu0
      %v3651 = vadd.f32 %v3458, %v3650
      %v3652 = vpop.f32.mrf.mxu0
      %v3653 = vadd.f32 %v3460, %v3652
      %3654 = vmatprep.mubr.bf16.mxu0 %v2488
      %3655 = vmatmul.mubr.bf16.gmra.mxu0 %v2487
      %v3656 = vpop.f32.mrf.mxu0
      %v3657 = vadd.f32 %v3464, %v3656
      %v3658 = vpop.f32.mrf.mxu0
      %v3659 = vadd.f32 %v3466, %v3658
      %v3660 = vpop.f32.mrf.mxu0
      %v3661 = vadd.f32 %v3468, %v3660
      %v3662 = vpop.f32.mrf.mxu0
      %v3663 = vadd.f32 %v3470, %v3662
      %3664 = vdwg.mxu0
      %3665 = vmatprep.subr.bf16.mxu0 %v3116
      %3666 = vmatpush1.bf16.xpose.msra.mxu0 %v3115
      %3667 = vmatprep.subr.bf16.mxu0 %v3112
      %3668 = vmatpush1.bf16.xpose.msra.mxu0 %v3111
      %3669 = vmatprep.subr.bf16.mxu0 %v3108
      %3670 = vmatpush1.bf16.xpose.msra.mxu0 %v3107
      %3671 = vmatprep.subr.bf16.mxu0 %v3104
      %3672 = vmatpush1.bf16.xpose.msra.mxu0 %v3103
      %3673 = vmatprep.subr.bf16.mxu0 %v3100
      %3674 = vmatpush1.bf16.xpose.msra.mxu0 %v3099
      %3675 = vmatprep.subr.bf16.mxu0 %v3096
      %3676 = vmatpush1.bf16.xpose.msra.mxu0 %v3095
      %3677 = vmatprep.subr.bf16.mxu0 %v3092
      %3678 = vmatpush1.bf16.xpose.msra.mxu0 %v3091
      %3679 = vmatprep.subr.bf16.mxu0 %v3088
      %3680 = vmatpush1.bf16.xpose.msra.mxu0 %v3087
      %3681 = vmatprep.subr.bf16.mxu0 %v3148
      %3682 = vmatpush2.bf16.xpose.msra.mxu0 %v3147
      %3683 = vmatprep.subr.bf16.mxu0 %v3144
      %3684 = vmatpush2.bf16.xpose.msra.mxu0 %v3143
      %3685 = vmatprep.subr.bf16.mxu0 %v3140
      %3686 = vmatpush2.bf16.xpose.msra.mxu0 %v3139
      %3687 = vmatprep.subr.bf16.mxu0 %v3136
      %3688 = vmatpush2.bf16.xpose.msra.mxu0 %v3135
      %3689 = vmatprep.subr.bf16.mxu0 %v3132
      %3690 = vmatpush2.bf16.xpose.msra.mxu0 %v3131
      %3691 = vmatprep.subr.bf16.mxu0 %v3128
      %3692 = vmatpush2.bf16.xpose.msra.mxu0 %v3127
      %3693 = vmatprep.subr.bf16.mxu0 %v3124
      %3694 = vmatpush2.bf16.xpose.msra.mxu0 %v3123
      %3695 = vmatprep.subr.bf16.mxu0 %v3120
      %3696 = vmatpush2.bf16.xpose.msra.mxu0 %v3119
      %3697 = vmatprep.mubr.bf16.mxu0 %v2426
      %3698 = vmatmul.mubr.bf16.gmra.mxu0 %v2425
      %v3699 = vpop.f32.mrf.mxu0
      %v3700 = vadd.f32 %v2630, %v3699
      %v3701 = vpop.f32.mrf.mxu0
      %v3702 = vadd.f32 %v2634, %v3701
      %v3703 = vpop.f32.mrf.mxu0
      %v3704 = vadd.f32 %v2630, %v3703
      %v3705 = vpop.f32.mrf.mxu0
      %v3706 = vadd.f32 %v2634, %v3705
      %3707 = vmatprep.mubr.bf16.mxu0 %v2430
      %3708 = vmatmul.mubr.bf16.gmra.mxu0 %v2429
      %v3709 = vpop.f32.mrf.mxu0
      %v3710 = vadd.f32 %v2630, %v3709
      %v3711 = vpop.f32.mrf.mxu0
      %v3712 = vadd.f32 %v2634, %v3711
      %v3713 = vpop.f32.mrf.mxu0
      %v3714 = vadd.f32 %v2630, %v3713
      %v3715 = vpop.f32.mrf.mxu0
      %v3716 = vadd.f32 %v2634, %v3715
      %3717 = vmatprep.mubr.bf16.mxu0 %v2434
      %3718 = vmatmul.mubr.bf16.gmra.mxu0 %v2433
      %v3719 = vpop.f32.mrf.mxu0
      %v3720 = vadd.f32 %v2630, %v3719
      %v3721 = vpop.f32.mrf.mxu0
      %v3722 = vadd.f32 %v2634, %v3721
      %v3723 = vpop.f32.mrf.mxu0
      %v3724 = vadd.f32 %v2630, %v3723
      %v3725 = vpop.f32.mrf.mxu0
      %v3726 = vadd.f32 %v2634, %v3725
      %3727 = vmatprep.mubr.bf16.mxu0 %v2438
      %3728 = vmatmul.mubr.bf16.gmra.mxu0 %v2437
      %v3729 = vpop.f32.mrf.mxu0
      %v3730 = vadd.f32 %v2630, %v3729
      %v3731 = vpop.f32.mrf.mxu0
      %v3732 = vadd.f32 %v2634, %v3731
      %v3733 = vpop.f32.mrf.mxu0
      %v3734 = vadd.f32 %v2630, %v3733
      %v3735 = vpop.f32.mrf.mxu0
      %v3736 = vadd.f32 %v2634, %v3735
      %3737 = vmatprep.mubr.bf16.mxu0 %v2442
      %3738 = vmatmul.mubr.bf16.gmra.mxu0 %v2441
      %v3739 = vpop.f32.mrf.mxu0
      %v3740 = vadd.f32 %v2630, %v3739
      %v3741 = vpop.f32.mrf.mxu0
      %v3742 = vadd.f32 %v2634, %v3741
      %v3743 = vpop.f32.mrf.mxu0
      %v3744 = vadd.f32 %v2630, %v3743
      %v3745 = vpop.f32.mrf.mxu0
      %v3746 = vadd.f32 %v2634, %v3745
      %3747 = vmatprep.mubr.bf16.mxu0 %v2446
      %3748 = vmatmul.mubr.bf16.gmra.mxu0 %v2445
      %v3749 = vpop.f32.mrf.mxu0
      %v3750 = vadd.f32 %v2630, %v3749
      %v3751 = vpop.f32.mrf.mxu0
      %v3752 = vadd.f32 %v2634, %v3751
      %v3753 = vpop.f32.mrf.mxu0
      %v3754 = vadd.f32 %v2630, %v3753
      %v3755 = vpop.f32.mrf.mxu0
      %v3756 = vadd.f32 %v2634, %v3755
      %3757 = vmatprep.mubr.bf16.mxu0 %v2450
      %3758 = vmatmul.mubr.bf16.gmra.mxu0 %v2449
      %v3759 = vpop.f32.mrf.mxu0
      %v3760 = vadd.f32 %v2630, %v3759
      %v3761 = vpop.f32.mrf.mxu0
      %v3762 = vadd.f32 %v2634, %v3761
      %v3763 = vpop.f32.mrf.mxu0
      %v3764 = vadd.f32 %v2630, %v3763
      %v3765 = vpop.f32.mrf.mxu0
      %v3766 = vadd.f32 %v2634, %v3765
      %3767 = vmatprep.mubr.bf16.mxu0 %v2454
      %3768 = vmatmul.mubr.bf16.gmra.mxu0 %v2453
      %v3769 = vpop.f32.mrf.mxu0
      %v3770 = vadd.f32 %v2630, %v3769
      %v3771 = vpop.f32.mrf.mxu0
      %v3772 = vadd.f32 %v2634, %v3771
      %v3773 = vpop.f32.mrf.mxu0
      %v3774 = vadd.f32 %v2630, %v3773
      %v3775 = vpop.f32.mrf.mxu0
      %v3776 = vadd.f32 %v2634, %v3775
      %3777 = vmatprep.mubr.bf16.mxu0 %v2458
      %3778 = vmatmul.mubr.bf16.gmra.mxu0 %v2457
      %v3779 = vpop.f32.mrf.mxu0
      %v3780 = vadd.f32 %v2630, %v3779
      %v3781 = vpop.f32.mrf.mxu0
      %v3782 = vadd.f32 %v2634, %v3781
      %v3783 = vpop.f32.mrf.mxu0
      %v3784 = vadd.f32 %v2630, %v3783
      %v3785 = vpop.f32.mrf.mxu0
      %v3786 = vadd.f32 %v2634, %v3785
      %3787 = vmatprep.mubr.bf16.mxu0 %v2462
      %3788 = vmatmul.mubr.bf16.gmra.mxu0 %v2461
      %v3789 = vpop.f32.mrf.mxu0
      %v3790 = vadd.f32 %v2630, %v3789
      %v3791 = vpop.f32.mrf.mxu0
      %v3792 = vadd.f32 %v2634, %v3791
      %v3793 = vpop.f32.mrf.mxu0
      %v3794 = vadd.f32 %v2630, %v3793
      %v3795 = vpop.f32.mrf.mxu0
      %v3796 = vadd.f32 %v2634, %v3795
      %3797 = vmatprep.mubr.bf16.mxu0 %v2466
      %3798 = vmatmul.mubr.bf16.gmra.mxu0 %v2465
      %v3799 = vpop.f32.mrf.mxu0
      %v3800 = vadd.f32 %v2630, %v3799
      %v3801 = vpop.f32.mrf.mxu0
      %v3802 = vadd.f32 %v2634, %v3801
      %v3803 = vpop.f32.mrf.mxu0
      %v3804 = vadd.f32 %v2630, %v3803
      %v3805 = vpop.f32.mrf.mxu0
      %v3806 = vadd.f32 %v2634, %v3805
      %3807 = vmatprep.mubr.bf16.mxu0 %v2470
      %3808 = vmatmul.mubr.bf16.gmra.mxu0 %v2469
      %v3809 = vpop.f32.mrf.mxu0
      %v3810 = vadd.f32 %v2630, %v3809
      %v3811 = vpop.f32.mrf.mxu0
      %v3812 = vadd.f32 %v2634, %v3811
      %v3813 = vpop.f32.mrf.mxu0
      %v3814 = vadd.f32 %v2630, %v3813
      %v3815 = vpop.f32.mrf.mxu0
      %v3816 = vadd.f32 %v2634, %v3815
      %3817 = vmatprep.mubr.bf16.mxu0 %v2474
      %3818 = vmatmul.mubr.bf16.gmra.mxu0 %v2473
      %v3819 = vpop.f32.mrf.mxu0
      %v3820 = vadd.f32 %v2630, %v3819
      %v3821 = vpop.f32.mrf.mxu0
      %v3822 = vadd.f32 %v2634, %v3821
      %v3823 = vpop.f32.mrf.mxu0
      %v3824 = vadd.f32 %v2630, %v3823
      %v3825 = vpop.f32.mrf.mxu0
      %v3826 = vadd.f32 %v2634, %v3825
      %3827 = vmatprep.mubr.bf16.mxu0 %v2478
      %3828 = vmatmul.mubr.bf16.gmra.mxu0 %v2477
      %v3829 = vpop.f32.mrf.mxu0
      %v3830 = vadd.f32 %v2630, %v3829
      %v3831 = vpop.f32.mrf.mxu0
      %v3832 = vadd.f32 %v2634, %v3831
      %v3833 = vpop.f32.mrf.mxu0
      %v3834 = vadd.f32 %v2630, %v3833
      %v3835 = vpop.f32.mrf.mxu0
      %v3836 = vadd.f32 %v2634, %v3835
      %3837 = vmatprep.mubr.bf16.mxu0 %v2482
      %3838 = vmatmul.mubr.bf16.gmra.mxu0 %v2481
      %v3839 = vpop.f32.mrf.mxu0
      %v3840 = vadd.f32 %v2630, %v3839
      %v3841 = vpop.f32.mrf.mxu0
      %v3842 = vadd.f32 %v2634, %v3841
      %v3843 = vpop.f32.mrf.mxu0
      %v3844 = vadd.f32 %v2630, %v3843
      %v3845 = vpop.f32.mrf.mxu0
      %v3846 = vadd.f32 %v2634, %v3845
      %3847 = vmatprep.mubr.bf16.mxu0 %v2486
      %3848 = vmatmul.mubr.bf16.gmra.mxu0 %v2485
      %v3849 = vpop.f32.mrf.mxu0
      %v3850 = vadd.f32 %v2630, %v3849
      %v3851 = vpop.f32.mrf.mxu0
      %v3852 = vadd.f32 %v2634, %v3851
      %v3853 = vpop.f32.mrf.mxu0
      %v3854 = vadd.f32 %v2630, %v3853
      %v3855 = vpop.f32.mrf.mxu0
      %v3856 = vadd.f32 %v2634, %v3855
      %3857 = vdwg.mxu0
      %3858 = vmatprep.subr.bf16.mxu0 %v3118
      %3859 = vmatpush1.bf16.xpose.msra.mxu0 %v3117
      %3860 = vmatprep.subr.bf16.mxu0 %v3114
      %3861 = vmatpush1.bf16.xpose.msra.mxu0 %v3113
      %3862 = vmatprep.subr.bf16.mxu0 %v3110
      %3863 = vmatpush1.bf16.xpose.msra.mxu0 %v3109
      %3864 = vmatprep.subr.bf16.mxu0 %v3106
      %3865 = vmatpush1.bf16.xpose.msra.mxu0 %v3105
      %3866 = vmatprep.subr.bf16.mxu0 %v3102
      %3867 = vmatpush1.bf16.xpose.msra.mxu0 %v3101
      %3868 = vmatprep.subr.bf16.mxu0 %v3098
      %3869 = vmatpush1.bf16.xpose.msra.mxu0 %v3097
      %3870 = vmatprep.subr.bf16.mxu0 %v3094
      %3871 = vmatpush1.bf16.xpose.msra.mxu0 %v3093
      %3872 = vmatprep.subr.bf16.mxu0 %v3090
      %3873 = vmatpush1.bf16.xpose.msra.mxu0 %v3089
      %3874 = vmatprep.subr.bf16.mxu0 %v3150
      %3875 = vmatpush2.bf16.xpose.msra.mxu0 %v3149
      %3876 = vmatprep.subr.bf16.mxu0 %v3146
      %3877 = vmatpush2.bf16.xpose.msra.mxu0 %v3145
      %3878 = vmatprep.subr.bf16.mxu0 %v3142
      %3879 = vmatpush2.bf16.xpose.msra.mxu0 %v3141
      %3880 = vmatprep.subr.bf16.mxu0 %v3138
      %3881 = vmatpush2.bf16.xpose.msra.mxu0 %v3137
      %3882 = vmatprep.subr.bf16.mxu0 %v3134
      %3883 = vmatpush2.bf16.xpose.msra.mxu0 %v3133
      %3884 = vmatprep.subr.bf16.mxu0 %v3130
      %3885 = vmatpush2.bf16.xpose.msra.mxu0 %v3129
      %3886 = vmatprep.subr.bf16.mxu0 %v3126
      %3887 = vmatpush2.bf16.xpose.msra.mxu0 %v3125
      %3888 = vmatprep.subr.bf16.mxu0 %v3122
      %3889 = vmatpush2.bf16.xpose.msra.mxu0 %v3121
      %3890 = vmatprep.mubr.bf16.mxu0 %v2428
      %3891 = vmatmul.mubr.bf16.gmra.mxu0 %v2427
      %v3892 = vpop.f32.mrf.mxu0
      %v3893 = vadd.f32 %v3700, %v3892
      %v3894 = vpop.f32.mrf.mxu0
      %v3895 = vadd.f32 %v3702, %v3894
      %v3896 = vpop.f32.mrf.mxu0
      %v3897 = vadd.f32 %v3704, %v3896
      %v3898 = vpop.f32.mrf.mxu0
      %v3899 = vadd.f32 %v3706, %v3898
      %3900 = vmatprep.mubr.bf16.mxu0 %v2432
      %3901 = vmatmul.mubr.bf16.gmra.mxu0 %v2431
      %v3902 = vpop.f32.mrf.mxu0
      %v3903 = vadd.f32 %v3710, %v3902
      %v3904 = vpop.f32.mrf.mxu0
      %v3905 = vadd.f32 %v3712, %v3904
      %v3906 = vpop.f32.mrf.mxu0
      %v3907 = vadd.f32 %v3714, %v3906
      %v3908 = vpop.f32.mrf.mxu0
      %v3909 = vadd.f32 %v3716, %v3908
      %3910 = vmatprep.mubr.bf16.mxu0 %v2436
      %3911 = vmatmul.mubr.bf16.gmra.mxu0 %v2435
      %v3912 = vpop.f32.mrf.mxu0
      %v3913 = vadd.f32 %v3720, %v3912
      %v3914 = vpop.f32.mrf.mxu0
      %v3915 = vadd.f32 %v3722, %v3914
      %v3916 = vpop.f32.mrf.mxu0
      %v3917 = vadd.f32 %v3724, %v3916
      %v3918 = vpop.f32.mrf.mxu0
      %v3919 = vadd.f32 %v3726, %v3918
      %3920 = vmatprep.mubr.bf16.mxu0 %v2440
      %3921 = vmatmul.mubr.bf16.gmra.mxu0 %v2439
      %v3922 = vpop.f32.mrf.mxu0
      %v3923 = vadd.f32 %v3730, %v3922
      %v3924 = vpop.f32.mrf.mxu0
      %v3925 = vadd.f32 %v3732, %v3924
      %v3926 = vpop.f32.mrf.mxu0
      %v3927 = vadd.f32 %v3734, %v3926
      %v3928 = vpop.f32.mrf.mxu0
      %v3929 = vadd.f32 %v3736, %v3928
      %3930 = vmatprep.mubr.bf16.mxu0 %v2444
      %3931 = vmatmul.mubr.bf16.gmra.mxu0 %v2443
      %v3932 = vpop.f32.mrf.mxu0
      %v3933 = vadd.f32 %v3740, %v3932
      %v3934 = vpop.f32.mrf.mxu0
      %v3935 = vadd.f32 %v3742, %v3934
      %v3936 = vpop.f32.mrf.mxu0
      %v3937 = vadd.f32 %v3744, %v3936
      %v3938 = vpop.f32.mrf.mxu0
      %v3939 = vadd.f32 %v3746, %v3938
      %3940 = vmatprep.mubr.bf16.mxu0 %v2448
      %3941 = vmatmul.mubr.bf16.gmra.mxu0 %v2447
      %v3942 = vpop.f32.mrf.mxu0
      %v3943 = vadd.f32 %v3750, %v3942
      %v3944 = vpop.f32.mrf.mxu0
      %v3945 = vadd.f32 %v3752, %v3944
      %v3946 = vpop.f32.mrf.mxu0
      %v3947 = vadd.f32 %v3754, %v3946
      %v3948 = vpop.f32.mrf.mxu0
      %v3949 = vadd.f32 %v3756, %v3948
      %3950 = vmatprep.mubr.bf16.mxu0 %v2452
      %3951 = vmatmul.mubr.bf16.gmra.mxu0 %v2451
      %v3952 = vpop.f32.mrf.mxu0
      %v3953 = vadd.f32 %v3760, %v3952
      %v3954 = vpop.f32.mrf.mxu0
      %v3955 = vadd.f32 %v3762, %v3954
      %v3956 = vpop.f32.mrf.mxu0
      %v3957 = vadd.f32 %v3764, %v3956
      %v3958 = vpop.f32.mrf.mxu0
      %v3959 = vadd.f32 %v3766, %v3958
      %3960 = vmatprep.mubr.bf16.mxu0 %v2456
      %3961 = vmatmul.mubr.bf16.gmra.mxu0 %v2455
      %v3962 = vpop.f32.mrf.mxu0
      %v3963 = vadd.f32 %v3770, %v3962
      %v3964 = vpop.f32.mrf.mxu0
      %v3965 = vadd.f32 %v3772, %v3964
      %v3966 = vpop.f32.mrf.mxu0
      %v3967 = vadd.f32 %v3774, %v3966
      %v3968 = vpop.f32.mrf.mxu0
      %v3969 = vadd.f32 %v3776, %v3968
      %3970 = vmatprep.mubr.bf16.mxu0 %v2460
      %3971 = vmatmul.mubr.bf16.gmra.mxu0 %v2459
      %v3972 = vpop.f32.mrf.mxu0
      %v3973 = vadd.f32 %v3780, %v3972
      %v3974 = vpop.f32.mrf.mxu0
      %v3975 = vadd.f32 %v3782, %v3974
      %v3976 = vpop.f32.mrf.mxu0
      %v3977 = vadd.f32 %v3784, %v3976
      %v3978 = vpop.f32.mrf.mxu0
      %v3979 = vadd.f32 %v3786, %v3978
      %3980 = vmatprep.mubr.bf16.mxu0 %v2464
      %3981 = vmatmul.mubr.bf16.gmra.mxu0 %v2463
      %v3982 = vpop.f32.mrf.mxu0
      %v3983 = vadd.f32 %v3790, %v3982
      %v3984 = vpop.f32.mrf.mxu0
      %v3985 = vadd.f32 %v3792, %v3984
      %v3986 = vpop.f32.mrf.mxu0
      %v3987 = vadd.f32 %v3794, %v3986
      %v3988 = vpop.f32.mrf.mxu0
      %v3989 = vadd.f32 %v3796, %v3988
      %3990 = vmatprep.mubr.bf16.mxu0 %v2468
      %3991 = vmatmul.mubr.bf16.gmra.mxu0 %v2467
      %v3992 = vpop.f32.mrf.mxu0
      %v3993 = vadd.f32 %v3800, %v3992
      %v3994 = vpop.f32.mrf.mxu0
      %v3995 = vadd.f32 %v3802, %v3994
      %v3996 = vpop.f32.mrf.mxu0
      %v3997 = vadd.f32 %v3804, %v3996
      %v3998 = vpop.f32.mrf.mxu0
      %v3999 = vadd.f32 %v3806, %v3998
      %4000 = vmatprep.mubr.bf16.mxu0 %v2472
      %4001 = vmatmul.mubr.bf16.gmra.mxu0 %v2471
      %v4002 = vpop.f32.mrf.mxu0
      %v4003 = vadd.f32 %v3810, %v4002
      %v4004 = vpop.f32.mrf.mxu0
      %v4005 = vadd.f32 %v3812, %v4004
      %v4006 = vpop.f32.mrf.mxu0
      %v4007 = vadd.f32 %v3814, %v4006
      %v4008 = vpop.f32.mrf.mxu0
      %v4009 = vadd.f32 %v3816, %v4008
      %4010 = vmatprep.mubr.bf16.mxu0 %v2476
      %4011 = vmatmul.mubr.bf16.gmra.mxu0 %v2475
      %v4012 = vpop.f32.mrf.mxu0
      %v4013 = vadd.f32 %v3820, %v4012
      %v4014 = vpop.f32.mrf.mxu0
      %v4015 = vadd.f32 %v3822, %v4014
      %v4016 = vpop.f32.mrf.mxu0
      %v4017 = vadd.f32 %v3824, %v4016
      %v4018 = vpop.f32.mrf.mxu0
      %v4019 = vadd.f32 %v3826, %v4018
      %4020 = vmatprep.mubr.bf16.mxu0 %v2480
      %4021 = vmatmul.mubr.bf16.gmra.mxu0 %v2479
      %v4022 = vpop.f32.mrf.mxu0
      %v4023 = vadd.f32 %v3830, %v4022
      %v4024 = vpop.f32.mrf.mxu0
      %v4025 = vadd.f32 %v3832, %v4024
      %v4026 = vpop.f32.mrf.mxu0
      %v4027 = vadd.f32 %v3834, %v4026
      %v4028 = vpop.f32.mrf.mxu0
      %v4029 = vadd.f32 %v3836, %v4028
      %4030 = vmatprep.mubr.bf16.mxu0 %v2484
      %4031 = vmatmul.mubr.bf16.gmra.mxu0 %v2483
      %v4032 = vpop.f32.mrf.mxu0
      %v4033 = vadd.f32 %v3840, %v4032
      %v4034 = vpop.f32.mrf.mxu0
      %v4035 = vadd.f32 %v3842, %v4034
      %v4036 = vpop.f32.mrf.mxu0
      %v4037 = vadd.f32 %v3844, %v4036
      %v4038 = vpop.f32.mrf.mxu0
      %v4039 = vadd.f32 %v3846, %v4038
      %4040 = vmatprep.mubr.bf16.mxu0 %v2488
      %4041 = vmatmul.mubr.bf16.gmra.mxu0 %v2487
      %v4042 = vpop.f32.mrf.mxu0
      %v4043 = vadd.f32 %v3850, %v4042
      %v4044 = vpop.f32.mrf.mxu0
      %v4045 = vadd.f32 %v3852, %v4044
      %v4046 = vpop.f32.mrf.mxu0
      %v4047 = vadd.f32 %v3854, %v4046
      %v4048 = vpop.f32.mrf.mxu0
      %v4049 = vadd.f32 %v3856, %v4048
      %4050 = vdwg.mxu0
      %vm4051 = vcmp.gt.f32.partialorder %v3507, 0.0
      %vm4052 = vcmp.gt.f32.partialorder %v3509, 0.0
      %vm4053 = vcmp.gt.f32.partialorder %v3893, 0.0
      %vm4054 = vcmp.gt.f32.partialorder %v3895, 0.0
      %vm4055 = vcmp.gt.f32.partialorder %v3511, 0.0
      %vm4056 = vcmp.gt.f32.partialorder %v3513, 0.0
      %vm4057 = vcmp.gt.f32.partialorder %v3897, 0.0
      %vm4058 = vcmp.gt.f32.partialorder %v3899, 0.0
      %vm4059 = vcmp.gt.f32.partialorder %v3517, 0.0
      %vm4060 = vcmp.gt.f32.partialorder %v3519, 0.0
      %vm4061 = vcmp.gt.f32.partialorder %v3903, 0.0
      %vm4062 = vcmp.gt.f32.partialorder %v3905, 0.0
      %vm4063 = vcmp.gt.f32.partialorder %v3521, 0.0
      %vm4064 = vcmp.gt.f32.partialorder %v3523, 0.0
      %vm4065 = vcmp.gt.f32.partialorder %v3907, 0.0
      %vm4066 = vcmp.gt.f32.partialorder %v3909, 0.0
      %vm4067 = vcmp.gt.f32.partialorder %v3527, 0.0
      %vm4068 = vcmp.gt.f32.partialorder %v3529, 0.0
      %vm4069 = vcmp.gt.f32.partialorder %v3913, 0.0
      %vm4070 = vcmp.gt.f32.partialorder %v3915, 0.0
      %vm4071 = vcmp.gt.f32.partialorder %v3531, 0.0
      %vm4072 = vcmp.gt.f32.partialorder %v3533, 0.0
      %vm4073 = vcmp.gt.f32.partialorder %v3917, 0.0
      %vm4074 = vcmp.gt.f32.partialorder %v3919, 0.0
      %vm4075 = vcmp.gt.f32.partialorder %v3537, 0.0
      %vm4076 = vcmp.gt.f32.partialorder %v3539, 0.0
      %vm4077 = vcmp.gt.f32.partialorder %v3923, 0.0
      %vm4078 = vcmp.gt.f32.partialorder %v3925, 0.0
      %vm4079 = vcmp.gt.f32.partialorder %v3541, 0.0
      %vm4080 = vcmp.gt.f32.partialorder %v3543, 0.0
      %vm4081 = vcmp.gt.f32.partialorder %v3927, 0.0
      %vm4082 = vcmp.gt.f32.partialorder %v3929, 0.0
      %vm4083 = vcmp.gt.f32.partialorder %v3547, 0.0
      %vm4084 = vcmp.gt.f32.partialorder %v3549, 0.0
      %vm4085 = vcmp.gt.f32.partialorder %v3933, 0.0
      %vm4086 = vcmp.gt.f32.partialorder %v3935, 0.0
      %vm4087 = vcmp.gt.f32.partialorder %v3551, 0.0
      %vm4088 = vcmp.gt.f32.partialorder %v3553, 0.0
      %vm4089 = vcmp.gt.f32.partialorder %v3937, 0.0
      %vm4090 = vcmp.gt.f32.partialorder %v3939, 0.0
      %vm4091 = vcmp.gt.f32.partialorder %v3557, 0.0
      %vm4092 = vcmp.gt.f32.partialorder %v3559, 0.0
      %vm4093 = vcmp.gt.f32.partialorder %v3943, 0.0
      %vm4094 = vcmp.gt.f32.partialorder %v3945, 0.0
      %vm4095 = vcmp.gt.f32.partialorder %v3561, 0.0
      %vm4096 = vcmp.gt.f32.partialorder %v3563, 0.0
      %vm4097 = vcmp.gt.f32.partialorder %v3947, 0.0
      %vm4098 = vcmp.gt.f32.partialorder %v3949, 0.0
      %vm4099 = vcmp.gt.f32.partialorder %v3567, 0.0
      %vm4100 = vcmp.gt.f32.partialorder %v3569, 0.0
      %vm4101 = vcmp.gt.f32.partialorder %v3953, 0.0
      %vm4102 = vcmp.gt.f32.partialorder %v3955, 0.0
      %vm4103 = vcmp.gt.f32.partialorder %v3571, 0.0
      %vm4104 = vcmp.gt.f32.partialorder %v3573, 0.0
      %vm4105 = vcmp.gt.f32.partialorder %v3957, 0.0
      %vm4106 = vcmp.gt.f32.partialorder %v3959, 0.0
      %vm4107 = vcmp.gt.f32.partialorder %v3577, 0.0
      %vm4108 = vcmp.gt.f32.partialorder %v3579, 0.0
      %vm4109 = vcmp.gt.f32.partialorder %v3963, 0.0
      %vm4110 = vcmp.gt.f32.partialorder %v3965, 0.0
      %vm4111 = vcmp.gt.f32.partialorder %v3581, 0.0
      %vm4112 = vcmp.gt.f32.partialorder %v3583, 0.0
      %vm4113 = vcmp.gt.f32.partialorder %v3967, 0.0
      %vm4114 = vcmp.gt.f32.partialorder %v3969, 0.0
      %vm4115 = vcmp.gt.f32.partialorder %v3587, 0.0
      %vm4116 = vcmp.gt.f32.partialorder %v3589, 0.0
      %vm4117 = vcmp.gt.f32.partialorder %v3973, 0.0
      %vm4118 = vcmp.gt.f32.partialorder %v3975, 0.0
      %vm4119 = vcmp.gt.f32.partialorder %v3591, 0.0
      %vm4120 = vcmp.gt.f32.partialorder %v3593, 0.0
      %vm4121 = vcmp.gt.f32.partialorder %v3977, 0.0
      %vm4122 = vcmp.gt.f32.partialorder %v3979, 0.0
      %vm4123 = vcmp.gt.f32.partialorder %v3597, 0.0
      %vm4124 = vcmp.gt.f32.partialorder %v3599, 0.0
      %vm4125 = vcmp.gt.f32.partialorder %v3983, 0.0
      %vm4126 = vcmp.gt.f32.partialorder %v3985, 0.0
      %vm4127 = vcmp.gt.f32.partialorder %v3601, 0.0
      %vm4128 = vcmp.gt.f32.partialorder %v3603, 0.0
      %vm4129 = vcmp.gt.f32.partialorder %v3987, 0.0
      %vm4130 = vcmp.gt.f32.partialorder %v3989, 0.0
      %vm4131 = vcmp.gt.f32.partialorder %v3607, 0.0
      %vm4132 = vcmp.gt.f32.partialorder %v3609, 0.0
      %vm4133 = vcmp.gt.f32.partialorder %v3993, 0.0
      %vm4134 = vcmp.gt.f32.partialorder %v3995, 0.0
      %vm4135 = vcmp.gt.f32.partialorder %v3611, 0.0
      %vm4136 = vcmp.gt.f32.partialorder %v3613, 0.0
      %vm4137 = vcmp.gt.f32.partialorder %v3997, 0.0
      %vm4138 = vcmp.gt.f32.partialorder %v3999, 0.0
      %vm4139 = vcmp.gt.f32.partialorder %v3617, 0.0
      %vm4140 = vcmp.gt.f32.partialorder %v3619, 0.0
      %vm4141 = vcmp.gt.f32.partialorder %v4003, 0.0
      %vm4142 = vcmp.gt.f32.partialorder %v4005, 0.0
      %vm4143 = vcmp.gt.f32.partialorder %v3621, 0.0
      %vm4144 = vcmp.gt.f32.partialorder %v3623, 0.0
      %vm4145 = vcmp.gt.f32.partialorder %v4007, 0.0
      %vm4146 = vcmp.gt.f32.partialorder %v4009, 0.0
      %vm4147 = vcmp.gt.f32.partialorder %v3627, 0.0
      %vm4148 = vcmp.gt.f32.partialorder %v3629, 0.0
      %vm4149 = vcmp.gt.f32.partialorder %v4013, 0.0
      %vm4150 = vcmp.gt.f32.partialorder %v4015, 0.0
      %vm4151 = vcmp.gt.f32.partialorder %v3631, 0.0
      %vm4152 = vcmp.gt.f32.partialorder %v3633, 0.0
      %vm4153 = vcmp.gt.f32.partialorder %v4017, 0.0
      %vm4154 = vcmp.gt.f32.partialorder %v4019, 0.0
      %vm4155 = vcmp.gt.f32.partialorder %v3637, 0.0
      %vm4156 = vcmp.gt.f32.partialorder %v3639, 0.0
      %vm4157 = vcmp.gt.f32.partialorder %v4023, 0.0
      %vm4158 = vcmp.gt.f32.partialorder %v4025, 0.0
      %vm4159 = vcmp.gt.f32.partialorder %v3641, 0.0
      %vm4160 = vcmp.gt.f32.partialorder %v3643, 0.0
      %vm4161 = vcmp.gt.f32.partialorder %v4027, 0.0
      %vm4162 = vcmp.gt.f32.partialorder %v4029, 0.0
      %vm4163 = vcmp.gt.f32.partialorder %v3647, 0.0
      %vm4164 = vcmp.gt.f32.partialorder %v3649, 0.0
      %vm4165 = vcmp.gt.f32.partialorder %v4033, 0.0
      %vm4166 = vcmp.gt.f32.partialorder %v4035, 0.0
      %vm4167 = vcmp.gt.f32.partialorder %v3651, 0.0
      %vm4168 = vcmp.gt.f32.partialorder %v3653, 0.0
      %vm4169 = vcmp.gt.f32.partialorder %v4037, 0.0
      %vm4170 = vcmp.gt.f32.partialorder %v4039, 0.0
      %vm4171 = vcmp.gt.f32.partialorder %v3657, 0.0
      %vm4172 = vcmp.gt.f32.partialorder %v3659, 0.0
      %vm4173 = vcmp.gt.f32.partialorder %v4043, 0.0
      %vm4174 = vcmp.gt.f32.partialorder %v4045, 0.0
      %vm4175 = vcmp.gt.f32.partialorder %v3661, 0.0
      %vm4176 = vcmp.gt.f32.partialorder %v3663, 0.0
      %vm4177 = vcmp.gt.f32.partialorder %v4047, 0.0
      %vm4178 = vcmp.gt.f32.partialorder %v4049, 0.0
      %v4179 = vmul.f32 %v3507, 0.2
      %v4180 = vmul.f32 %v3509, 0.2
      %v4181 = vmul.f32 %v3893, 0.2
      %v4182 = vmul.f32 %v3895, 0.2
      %v4183 = vmul.f32 %v3511, 0.2
      %v4184 = vmul.f32 %v3513, 0.2
      %v4185 = vmul.f32 %v3897, 0.2
      %v4186 = vmul.f32 %v3899, 0.2
      %v4187 = vmul.f32 %v3517, 0.2
      %v4188 = vmul.f32 %v3519, 0.2
      %v4189 = vmul.f32 %v3903, 0.2
      %v4190 = vmul.f32 %v3905, 0.2
      %v4191 = vmul.f32 %v3521, 0.2
      %v4192 = vmul.f32 %v3523, 0.2
      %v4193 = vmul.f32 %v3907, 0.2
      %v4194 = vmul.f32 %v3909, 0.2
      %v4195 = vmul.f32 %v3527, 0.2
      %v4196 = vmul.f32 %v3529, 0.2
      %v4197 = vmul.f32 %v3913, 0.2
      %v4198 = vmul.f32 %v3915, 0.2
      %v4199 = vmul.f32 %v3531, 0.2
      %v4200 = vmul.f32 %v3533, 0.2
      %v4201 = vmul.f32 %v3917, 0.2
      %v4202 = vmul.f32 %v3919, 0.2
      %v4203 = vmul.f32 %v3537, 0.2
      %v4204 = vmul.f32 %v3539, 0.2
      %v4205 = vmul.f32 %v3923, 0.2
      %v4206 = vmul.f32 %v3925, 0.2
      %v4207 = vmul.f32 %v3541, 0.2
      %v4208 = vmul.f32 %v3543, 0.2
      %v4209 = vmul.f32 %v3927, 0.2
      %v4210 = vmul.f32 %v3929, 0.2
      %v4211 = vmul.f32 %v3547, 0.2
      %v4212 = vmul.f32 %v3549, 0.2
      %v4213 = vmul.f32 %v3933, 0.2
      %v4214 = vmul.f32 %v3935, 0.2
      %v4215 = vmul.f32 %v3551, 0.2
      %v4216 = vmul.f32 %v3553, 0.2
      %v4217 = vmul.f32 %v3937, 0.2
      %v4218 = vmul.f32 %v3939, 0.2
      %v4219 = vmul.f32 %v3557, 0.2
      %v4220 = vmul.f32 %v3559, 0.2
      %v4221 = vmul.f32 %v3943, 0.2
      %v4222 = vmul.f32 %v3945, 0.2
      %v4223 = vmul.f32 %v3561, 0.2
      %v4224 = vmul.f32 %v3563, 0.2
      %v4225 = vmul.f32 %v3947, 0.2
      %v4226 = vmul.f32 %v3949, 0.2
      %v4227 = vmul.f32 %v3567, 0.2
      %v4228 = vmul.f32 %v3569, 0.2
      %v4229 = vmul.f32 %v3953, 0.2
      %v4230 = vmul.f32 %v3955, 0.2
      %v4231 = vmul.f32 %v3571, 0.2
      %v4232 = vmul.f32 %v3573, 0.2
      %v4233 = vmul.f32 %v3957, 0.2
      %v4234 = vmul.f32 %v3959, 0.2
      %v4235 = vmul.f32 %v3577, 0.2
      %v4236 = vmul.f32 %v3579, 0.2
      %v4237 = vmul.f32 %v3963, 0.2
      %v4238 = vmul.f32 %v3965, 0.2
      %v4239 = vmul.f32 %v3581, 0.2
      %v4240 = vmul.f32 %v3583, 0.2
      %v4241 = vmul.f32 %v3967, 0.2
      %v4242 = vmul.f32 %v3969, 0.2
      %v4243 = vmul.f32 %v3587, 0.2
      %v4244 = vmul.f32 %v3589, 0.2
      %v4245 = vmul.f32 %v3973, 0.2
      %v4246 = vmul.f32 %v3975, 0.2
      %v4247 = vmul.f32 %v3591, 0.2
      %v4248 = vmul.f32 %v3593, 0.2
      %v4249 = vmul.f32 %v3977, 0.2
      %v4250 = vmul.f32 %v3979, 0.2
      %v4251 = vmul.f32 %v3597, 0.2
      %v4252 = vmul.f32 %v3599, 0.2
      %v4253 = vmul.f32 %v3983, 0.2
      %v4254 = vmul.f32 %v3985, 0.2
      %v4255 = vmul.f32 %v3601, 0.2
      %v4256 = vmul.f32 %v3603, 0.2
      %v4257 = vmul.f32 %v3987, 0.2
      %v4258 = vmul.f32 %v3989, 0.2
      %v4259 = vmul.f32 %v3607, 0.2
      %v4260 = vmul.f32 %v3609, 0.2
      %v4261 = vmul.f32 %v3993, 0.2
      %v4262 = vmul.f32 %v3995, 0.2
      %v4263 = vmul.f32 %v3611, 0.2
      %v4264 = vmul.f32 %v3613, 0.2
      %v4265 = vmul.f32 %v3997, 0.2
      %v4266 = vmul.f32 %v3999, 0.2
      %v4267 = vmul.f32 %v3617, 0.2
      %v4268 = vmul.f32 %v3619, 0.2
      %v4269 = vmul.f32 %v4003, 0.2
      %v4270 = vmul.f32 %v4005, 0.2
      %v4271 = vmul.f32 %v3621, 0.2
      %v4272 = vmul.f32 %v3623, 0.2
      %v4273 = vmul.f32 %v4007, 0.2
      %v4274 = vmul.f32 %v4009, 0.2
      %v4275 = vmul.f32 %v3627, 0.2
      %v4276 = vmul.f32 %v3629, 0.2
      %v4277 = vmul.f32 %v4013, 0.2
      %v4278 = vmul.f32 %v4015, 0.2
      %v4279 = vmul.f32 %v3631, 0.2
      %v4280 = vmul.f32 %v3633, 0.2
      %v4281 = vmul.f32 %v4017, 0.2
      %v4282 = vmul.f32 %v4019, 0.2
      %v4283 = vmul.f32 %v3637, 0.2
      %v4284 = vmul.f32 %v3639, 0.2
      %v4285 = vmul.f32 %v4023, 0.2
      %v4286 = vmul.f32 %v4025, 0.2
      %v4287 = vmul.f32 %v3641, 0.2
      %v4288 = vmul.f32 %v3643, 0.2
      %v4289 = vmul.f32 %v4027, 0.2
      %v4290 = vmul.f32 %v4029, 0.2
      %v4291 = vmul.f32 %v3647, 0.2
      %v4292 = vmul.f32 %v3649, 0.2
      %v4293 = vmul.f32 %v4033, 0.2
      %v4294 = vmul.f32 %v4035, 0.2
      %v4295 = vmul.f32 %v3651, 0.2
      %v4296 = vmul.f32 %v3653, 0.2
      %v4297 = vmul.f32 %v4037, 0.2
      %v4298 = vmul.f32 %v4039, 0.2
      %v4299 = vmul.f32 %v3657, 0.2
      %v4300 = vmul.f32 %v3659, 0.2
      %v4301 = vmul.f32 %v4043, 0.2
      %v4302 = vmul.f32 %v4045, 0.2
      %v4303 = vmul.f32 %v3661, 0.2
      %v4304 = vmul.f32 %v3663, 0.2
      %v4305 = vmul.f32 %v4047, 0.2
      %v4306 = vmul.f32 %v4049, 0.2
      %v4307 = vsel %vm4051, %v3507, %v4179
      %v4308 = vsel %vm4052, %v3509, %v4180
      %v4309 = vsel %vm4053, %v3893, %v4181
      %v4310 = vsel %vm4054, %v3895, %v4182
      %v4311 = vsel %vm4055, %v3511, %v4183
      %v4312 = vsel %vm4056, %v3513, %v4184
      %v4313 = vsel %vm4057, %v3897, %v4185
      %v4314 = vsel %vm4058, %v3899, %v4186
      %v4315 = vsel %vm4059, %v3517, %v4187
      %v4316 = vsel %vm4060, %v3519, %v4188
      %v4317 = vsel %vm4061, %v3903, %v4189
      %v4318 = vsel %vm4062, %v3905, %v4190
      %v4319 = vsel %vm4063, %v3521, %v4191
      %v4320 = vsel %vm4064, %v3523, %v4192
      %v4321 = vsel %vm4065, %v3907, %v4193
      %v4322 = vsel %vm4066, %v3909, %v4194
      %v4323 = vsel %vm4067, %v3527, %v4195
      %v4324 = vsel %vm4068, %v3529, %v4196
      %v4325 = vsel %vm4069, %v3913, %v4197
      %v4326 = vsel %vm4070, %v3915, %v4198
      %v4327 = vsel %vm4071, %v3531, %v4199
      %v4328 = vsel %vm4072, %v3533, %v4200
      %v4329 = vsel %vm4073, %v3917, %v4201
      %v4330 = vsel %vm4074, %v3919, %v4202
      %v4331 = vsel %vm4075, %v3537, %v4203
      %v4332 = vsel %vm4076, %v3539, %v4204
      %v4333 = vsel %vm4077, %v3923, %v4205
      %v4334 = vsel %vm4078, %v3925, %v4206
      %v4335 = vsel %vm4079, %v3541, %v4207
      %v4336 = vsel %vm4080, %v3543, %v4208
      %v4337 = vsel %vm4081, %v3927, %v4209
      %v4338 = vsel %vm4082, %v3929, %v4210
      %v4339 = vsel %vm4083, %v3547, %v4211
      %v4340 = vsel %vm4084, %v3549, %v4212
      %v4341 = vsel %vm4085, %v3933, %v4213
      %v4342 = vsel %vm4086, %v3935, %v4214
      %v4343 = vsel %vm4087, %v3551, %v4215
      %v4344 = vsel %vm4088, %v3553, %v4216
      %v4345 = vsel %vm4089, %v3937, %v4217
      %v4346 = vsel %vm4090, %v3939, %v4218
      %v4347 = vsel %vm4091, %v3557, %v4219
      %v4348 = vsel %vm4092, %v3559, %v4220
      %v4349 = vsel %vm4093, %v3943, %v4221
      %v4350 = vsel %vm4094, %v3945, %v4222
      %v4351 = vsel %vm4095, %v3561, %v4223
      %v4352 = vsel %vm4096, %v3563, %v4224
      %v4353 = vsel %vm4097, %v3947, %v4225
      %v4354 = vsel %vm4098, %v3949, %v4226
      %v4355 = vsel %vm4099, %v3567, %v4227
      %v4356 = vsel %vm4100, %v3569, %v4228
      %v4357 = vsel %vm4101, %v3953, %v4229
      %v4358 = vsel %vm4102, %v3955, %v4230
      %v4359 = vsel %vm4103, %v3571, %v4231
      %v4360 = vsel %vm4104, %v3573, %v4232
      %v4361 = vsel %vm4105, %v3957, %v4233
      %v4362 = vsel %vm4106, %v3959, %v4234
      %v4363 = vsel %vm4107, %v3577, %v4235
      %v4364 = vsel %vm4108, %v3579, %v4236
      %v4365 = vsel %vm4109, %v3963, %v4237
      %v4366 = vsel %vm4110, %v3965, %v4238
      %v4367 = vsel %vm4111, %v3581, %v4239
      %v4368 = vsel %vm4112, %v3583, %v4240
      %v4369 = vsel %vm4113, %v3967, %v4241
      %v4370 = vsel %vm4114, %v3969, %v4242
      %v4371 = vsel %vm4115, %v3587, %v4243
      %v4372 = vsel %vm4116, %v3589, %v4244
      %v4373 = vsel %vm4117, %v3973, %v4245
      %v4374 = vsel %vm4118, %v3975, %v4246
      %v4375 = vsel %vm4119, %v3591, %v4247
      %v4376 = vsel %vm4120, %v3593, %v4248
      %v4377 = vsel %vm4121, %v3977, %v4249
      %v4378 = vsel %vm4122, %v3979, %v4250
      %v4379 = vsel %vm4123, %v3597, %v4251
      %v4380 = vsel %vm4124, %v3599, %v4252
      %v4381 = vsel %vm4125, %v3983, %v4253
      %v4382 = vsel %vm4126, %v3985, %v4254
      %v4383 = vsel %vm4127, %v3601, %v4255
      %v4384 = vsel %vm4128, %v3603, %v4256
      %v4385 = vsel %vm4129, %v3987, %v4257
      %v4386 = vsel %vm4130, %v3989, %v4258
      %v4387 = vsel %vm4131, %v3607, %v4259
      %v4388 = vsel %vm4132, %v3609, %v4260
      %v4389 = vsel %vm4133, %v3993, %v4261
      %v4390 = vsel %vm4134, %v3995, %v4262
      %v4391 = vsel %vm4135, %v3611, %v4263
      %v4392 = vsel %vm4136, %v3613, %v4264
      %v4393 = vsel %vm4137, %v3997, %v4265
      %v4394 = vsel %vm4138, %v3999, %v4266
      %v4395 = vsel %vm4139, %v3617, %v4267
      %v4396 = vsel %vm4140, %v3619, %v4268
      %v4397 = vsel %vm4141, %v4003, %v4269
      %v4398 = vsel %vm4142, %v4005, %v4270
      %v4399 = vsel %vm4143, %v3621, %v4271
      %v4400 = vsel %vm4144, %v3623, %v4272
      %v4401 = vsel %vm4145, %v4007, %v4273
      %v4402 = vsel %vm4146, %v4009, %v4274
      %v4403 = vsel %vm4147, %v3627, %v4275
      %v4404 = vsel %vm4148, %v3629, %v4276
      %v4405 = vsel %vm4149, %v4013, %v4277
      %v4406 = vsel %vm4150, %v4015, %v4278
      %v4407 = vsel %vm4151, %v3631, %v4279
      %v4408 = vsel %vm4152, %v3633, %v4280
      %v4409 = vsel %vm4153, %v4017, %v4281
      %v4410 = vsel %vm4154, %v4019, %v4282
      %v4411 = vsel %vm4155, %v3637, %v4283
      %v4412 = vsel %vm4156, %v3639, %v4284
      %v4413 = vsel %vm4157, %v4023, %v4285
      %v4414 = vsel %vm4158, %v4025, %v4286
      %v4415 = vsel %vm4159, %v3641, %v4287
      %v4416 = vsel %vm4160, %v3643, %v4288
      %v4417 = vsel %vm4161, %v4027, %v4289
      %v4418 = vsel %vm4162, %v4029, %v4290
      %v4419 = vsel %vm4163, %v3647, %v4291
      %v4420 = vsel %vm4164, %v3649, %v4292
      %v4421 = vsel %vm4165, %v4033, %v4293
      %v4422 = vsel %vm4166, %v4035, %v4294
      %v4423 = vsel %vm4167, %v3651, %v4295
      %v4424 = vsel %vm4168, %v3653, %v4296
      %v4425 = vsel %vm4169, %v4037, %v4297
      %v4426 = vsel %vm4170, %v4039, %v4298
      %v4427 = vsel %vm4171, %v3657, %v4299
      %v4428 = vsel %vm4172, %v3659, %v4300
      %v4429 = vsel %vm4173, %v4043, %v4301
      %v4430 = vsel %vm4174, %v4045, %v4302
      %v4431 = vsel %vm4175, %v3661, %v4303
      %v4432 = vsel %vm4176, %v3663, %v4304
      %v4433 = vsel %vm4177, %v4047, %v4305
      %v4434 = vsel %vm4178, %v4049, %v4306
      %v4435 = vpack.c.bf16 %v4311, %v4307
      %v4436 = vpack.c.bf16 %v4312, %v4308
      %v4437 = vpack.c.bf16 %v4313, %v4309
      %v4438 = vpack.c.bf16 %v4314, %v4310
      %v4439 = vpack.c.bf16 %v4319, %v4315
      %v4440 = vpack.c.bf16 %v4320, %v4316
      %v4441 = vpack.c.bf16 %v4321, %v4317
      %v4442 = vpack.c.bf16 %v4322, %v4318
      %v4443 = vpack.c.bf16 %v4327, %v4323
      %v4444 = vpack.c.bf16 %v4328, %v4324
      %v4445 = vpack.c.bf16 %v4329, %v4325
      %v4446 = vpack.c.bf16 %v4330, %v4326
      %v4447 = vpack.c.bf16 %v4335, %v4331
      %v4448 = vpack.c.bf16 %v4336, %v4332
      %v4449 = vpack.c.bf16 %v4337, %v4333
      %v4450 = vpack.c.bf16 %v4338, %v4334
      %v4451 = vpack.c.bf16 %v4343, %v4339
      %v4452 = vpack.c.bf16 %v4344, %v4340
      %v4453 = vpack.c.bf16 %v4345, %v4341
      %v4454 = vpack.c.bf16 %v4346, %v4342
      %v4455 = vpack.c.bf16 %v4351, %v4347
      %v4456 = vpack.c.bf16 %v4352, %v4348
      %v4457 = vpack.c.bf16 %v4353, %v4349
      %v4458 = vpack.c.bf16 %v4354, %v4350
      %v4459 = vpack.c.bf16 %v4359, %v4355
      %v4460 = vpack.c.bf16 %v4360, %v4356
      %v4461 = vpack.c.bf16 %v4361, %v4357
      %v4462 = vpack.c.bf16 %v4362, %v4358
      %v4463 = vpack.c.bf16 %v4367, %v4363
      %v4464 = vpack.c.bf16 %v4368, %v4364
      %v4465 = vpack.c.bf16 %v4369, %v4365
      %v4466 = vpack.c.bf16 %v4370, %v4366
      %v4467 = vpack.c.bf16 %v4375, %v4371
      %v4468 = vpack.c.bf16 %v4376, %v4372
      %v4469 = vpack.c.bf16 %v4377, %v4373
      %v4470 = vpack.c.bf16 %v4378, %v4374
      %v4471 = vpack.c.bf16 %v4383, %v4379
      %v4472 = vpack.c.bf16 %v4384, %v4380
      %v4473 = vpack.c.bf16 %v4385, %v4381
      %v4474 = vpack.c.bf16 %v4386, %v4382
      %v4475 = vpack.c.bf16 %v4391, %v4387
      %v4476 = vpack.c.bf16 %v4392, %v4388
      %v4477 = vpack.c.bf16 %v4393, %v4389
      %v4478 = vpack.c.bf16 %v4394, %v4390
      %v4479 = vpack.c.bf16 %v4399, %v4395
      %v4480 = vpack.c.bf16 %v4400, %v4396
      %v4481 = vpack.c.bf16 %v4401, %v4397
      %v4482 = vpack.c.bf16 %v4402, %v4398
      %v4483 = vpack.c.bf16 %v4407, %v4403
      %v4484 = vpack.c.bf16 %v4408, %v4404
      %v4485 = vpack.c.bf16 %v4409, %v4405
      %v4486 = vpack.c.bf16 %v4410, %v4406
      %v4487 = vpack.c.bf16 %v4415, %v4411
      %v4488 = vpack.c.bf16 %v4416, %v4412
      %v4489 = vpack.c.bf16 %v4417, %v4413
      %v4490 = vpack.c.bf16 %v4418, %v4414
      %v4491 = vpack.c.bf16 %v4423, %v4419
      %v4492 = vpack.c.bf16 %v4424, %v4420
      %v4493 = vpack.c.bf16 %v4425, %v4421
      %v4494 = vpack.c.bf16 %v4426, %v4422
      %v4495 = vpack.c.bf16 %v4431, %v4427
      %v4496 = vpack.c.bf16 %v4432, %v4428
      %v4497 = vpack.c.bf16 %v4433, %v4429
      %v4498 = vpack.c.bf16 %v4434, %v4430
      %v4499 = vld [vmem:[%s5] sm:$0xff]
      %v4500 = vld [vmem:[%s5 + $0x8] sm:$0xff]
      %v4501 = vld [vmem:[%s5 + $0x10] sm:$0xff]
      %v4502 = vld [vmem:[%s5 + $0x18] sm:$0xff]
      %v4503 = vld [vmem:[%s5 + $0x20] sm:$0xff]
      %v4504 = vld [vmem:[%s5 + $0x28] sm:$0xff]
      %v4505 = vld [vmem:[%s5 + $0x30] sm:$0xff]
      %v4506 = vld [vmem:[%s5 + $0x38] sm:$0xff]
      %v4507 = vld [vmem:[%s5 + $0x40] sm:$0xff]
      %v4508 = vld [vmem:[%s5 + $0x48] sm:$0xff]
      %v4509 = vld [vmem:[%s5 + $0x50] sm:$0xff]
      %v4510 = vld [vmem:[%s5 + $0x58] sm:$0xff]
      %v4511 = vld [vmem:[%s5 + $0x60] sm:$0xff]
      %v4512 = vld [vmem:[%s5 + $0x68] sm:$0xff]
      %v4513 = vld [vmem:[%s5 + $0x70] sm:$0xff]
      %v4514 = vld [vmem:[%s5 + $0x78] sm:$0xff]
      %v4515 = vld [vmem:[%s5 + $0x80] sm:$0xff]
      %v4516 = vld [vmem:[%s5 + $0x88] sm:$0xff]
      %v4517 = vld [vmem:[%s5 + $0x90] sm:$0xff]
      %v4518 = vld [vmem:[%s5 + $0x98] sm:$0xff]
      %v4519 = vld [vmem:[%s5 + $0xa0] sm:$0xff]
      %v4520 = vld [vmem:[%s5 + $0xa8] sm:$0xff]
      %v4521 = vld [vmem:[%s5 + $0xb0] sm:$0xff]
      %v4522 = vld [vmem:[%s5 + $0xb8] sm:$0xff]
      %v4523 = vld [vmem:[%s5 + $0xc0] sm:$0xff]
      %v4524 = vld [vmem:[%s5 + $0xc8] sm:$0xff]
      %v4525 = vld [vmem:[%s5 + $0xd0] sm:$0xff]
      %v4526 = vld [vmem:[%s5 + $0xd8] sm:$0xff]
      %v4527 = vld [vmem:[%s5 + $0xe0] sm:$0xff]
      %v4528 = vld [vmem:[%s5 + $0xe8] sm:$0xff]
      %v4529 = vld [vmem:[%s5 + $0xf0] sm:$0xff]
      %v4530 = vld [vmem:[%s5 + $0xf8] sm:$0xff]
      %v4531 = vld [vmem:[%s5 + $0x100] sm:$0xff]
      %v4532 = vld [vmem:[%s5 + $0x108] sm:$0xff]
      %v4533 = vld [vmem:[%s5 + $0x110] sm:$0xff]
      %v4534 = vld [vmem:[%s5 + $0x118] sm:$0xff]
      %v4535 = vld [vmem:[%s5 + $0x120] sm:$0xff]
      %v4536 = vld [vmem:[%s5 + $0x128] sm:$0xff]
      %v4537 = vld [vmem:[%s5 + $0x130] sm:$0xff]
      %v4538 = vld [vmem:[%s5 + $0x138] sm:$0xff]
      %v4539 = vld [vmem:[%s5 + $0x140] sm:$0xff]
      %v4540 = vld [vmem:[%s5 + $0x148] sm:$0xff]
      %v4541 = vld [vmem:[%s5 + $0x150] sm:$0xff]
      %v4542 = vld [vmem:[%s5 + $0x158] sm:$0xff]
      %v4543 = vld [vmem:[%s5 + $0x160] sm:$0xff]
      %v4544 = vld [vmem:[%s5 + $0x168] sm:$0xff]
      %v4545 = vld [vmem:[%s5 + $0x170] sm:$0xff]
      %v4546 = vld [vmem:[%s5 + $0x178] sm:$0xff]
      %v4547 = vld [vmem:[%s5 + $0x180] sm:$0xff]
      %v4548 = vld [vmem:[%s5 + $0x188] sm:$0xff]
      %v4549 = vld [vmem:[%s5 + $0x190] sm:$0xff]
      %v4550 = vld [vmem:[%s5 + $0x198] sm:$0xff]
      %v4551 = vld [vmem:[%s5 + $0x1a0] sm:$0xff]
      %v4552 = vld [vmem:[%s5 + $0x1a8] sm:$0xff]
      %v4553 = vld [vmem:[%s5 + $0x1b0] sm:$0xff]
      %v4554 = vld [vmem:[%s5 + $0x1b8] sm:$0xff]
      %v4555 = vld [vmem:[%s5 + $0x1c0] sm:$0xff]
      %v4556 = vld [vmem:[%s5 + $0x1c8] sm:$0xff]
      %v4557 = vld [vmem:[%s5 + $0x1d0] sm:$0xff]
      %v4558 = vld [vmem:[%s5 + $0x1d8] sm:$0xff]
      %v4559 = vld [vmem:[%s5 + $0x1e0] sm:$0xff]
      %v4560 = vld [vmem:[%s5 + $0x1e8] sm:$0xff]
      %v4561 = vld [vmem:[%s5 + $0x1f0] sm:$0xff]
      %v4562 = vld [vmem:[%s5 + $0x1f8] sm:$0xff]
      %v4563 = vld [vmem:[%s5 + $0x200] sm:$0xff]
      %v4564 = vld [vmem:[%s5 + $0x208] sm:$0xff]
      %v4565 = vld [vmem:[%s5 + $0x210] sm:$0xff]
      %v4566 = vld [vmem:[%s5 + $0x218] sm:$0xff]
      %v4567 = vld [vmem:[%s5 + $0x220] sm:$0xff]
      %v4568 = vld [vmem:[%s5 + $0x228] sm:$0xff]
      %v4569 = vld [vmem:[%s5 + $0x230] sm:$0xff]
      %v4570 = vld [vmem:[%s5 + $0x238] sm:$0xff]
      %v4571 = vld [vmem:[%s5 + $0x240] sm:$0xff]
      %v4572 = vld [vmem:[%s5 + $0x248] sm:$0xff]
      %v4573 = vld [vmem:[%s5 + $0x250] sm:$0xff]
      %v4574 = vld [vmem:[%s5 + $0x258] sm:$0xff]
      %v4575 = vld [vmem:[%s5 + $0x260] sm:$0xff]
      %v4576 = vld [vmem:[%s5 + $0x268] sm:$0xff]
      %v4577 = vld [vmem:[%s5 + $0x270] sm:$0xff]
      %v4578 = vld [vmem:[%s5 + $0x278] sm:$0xff]
      %v4579 = vld [vmem:[%s5 + $0x280] sm:$0xff]
      %v4580 = vld [vmem:[%s5 + $0x288] sm:$0xff]
      %v4581 = vld [vmem:[%s5 + $0x290] sm:$0xff]
      %v4582 = vld [vmem:[%s5 + $0x298] sm:$0xff]
      %v4583 = vld [vmem:[%s5 + $0x2a0] sm:$0xff]
      %v4584 = vld [vmem:[%s5 + $0x2a8] sm:$0xff]
      %v4585 = vld [vmem:[%s5 + $0x2b0] sm:$0xff]
      %v4586 = vld [vmem:[%s5 + $0x2b8] sm:$0xff]
      %v4587 = vld [vmem:[%s5 + $0x2c0] sm:$0xff]
      %v4588 = vld [vmem:[%s5 + $0x2c8] sm:$0xff]
      %v4589 = vld [vmem:[%s5 + $0x2d0] sm:$0xff]
      %v4590 = vld [vmem:[%s5 + $0x2d8] sm:$0xff]
      %v4591 = vld [vmem:[%s5 + $0x2e0] sm:$0xff]
      %v4592 = vld [vmem:[%s5 + $0x2e8] sm:$0xff]
      %v4593 = vld [vmem:[%s5 + $0x2f0] sm:$0xff]
      %v4594 = vld [vmem:[%s5 + $0x2f8] sm:$0xff]
      %v4595 = vld [vmem:[%s5 + $0x300] sm:$0xff]
      %v4596 = vld [vmem:[%s5 + $0x308] sm:$0xff]
      %v4597 = vld [vmem:[%s5 + $0x310] sm:$0xff]
      %v4598 = vld [vmem:[%s5 + $0x318] sm:$0xff]
      %v4599 = vld [vmem:[%s5 + $0x320] sm:$0xff]
      %v4600 = vld [vmem:[%s5 + $0x328] sm:$0xff]
      %v4601 = vld [vmem:[%s5 + $0x330] sm:$0xff]
      %v4602 = vld [vmem:[%s5 + $0x338] sm:$0xff]
      %v4603 = vld [vmem:[%s5 + $0x340] sm:$0xff]
      %v4604 = vld [vmem:[%s5 + $0x348] sm:$0xff]
      %v4605 = vld [vmem:[%s5 + $0x350] sm:$0xff]
      %v4606 = vld [vmem:[%s5 + $0x358] sm:$0xff]
      %v4607 = vld [vmem:[%s5 + $0x360] sm:$0xff]
      %v4608 = vld [vmem:[%s5 + $0x368] sm:$0xff]
      %v4609 = vld [vmem:[%s5 + $0x370] sm:$0xff]
      %v4610 = vld [vmem:[%s5 + $0x378] sm:$0xff]
      %v4611 = vld [vmem:[%s5 + $0x380] sm:$0xff]
      %v4612 = vld [vmem:[%s5 + $0x388] sm:$0xff]
      %v4613 = vld [vmem:[%s5 + $0x390] sm:$0xff]
      %v4614 = vld [vmem:[%s5 + $0x398] sm:$0xff]
      %v4615 = vld [vmem:[%s5 + $0x3a0] sm:$0xff]
      %v4616 = vld [vmem:[%s5 + $0x3a8] sm:$0xff]
      %v4617 = vld [vmem:[%s5 + $0x3b0] sm:$0xff]
      %v4618 = vld [vmem:[%s5 + $0x3b8] sm:$0xff]
      %v4619 = vld [vmem:[%s5 + $0x3c0] sm:$0xff]
      %v4620 = vld [vmem:[%s5 + $0x3c8] sm:$0xff]
      %v4621 = vld [vmem:[%s5 + $0x3d0] sm:$0xff]
      %v4622 = vld [vmem:[%s5 + $0x3d8] sm:$0xff]
      %v4623 = vld [vmem:[%s5 + $0x3e0] sm:$0xff]
      %v4624 = vld [vmem:[%s5 + $0x3e8] sm:$0xff]
      %v4625 = vld [vmem:[%s5 + $0x3f0] sm:$0xff]
      %v4626 = vld [vmem:[%s5 + $0x3f8] sm:$0xff]
      %v4627 = vld [vmem:[%s6] sm:$0xf]
      %v4629 = vlaneseq
      %v4630 = vshrl.u32 %v4629, 7
      %v4631 = vsub.s32 0, %v4630
      %v4632 = vrot.slane %v4627, %v4631
      %v4633 = vlaneseq
      %v4634 = vshrl.u32 %v4633, 7
      %v4635 = vsub.s32 1, %v4634
      %v4636 = vrot.slane %v4627, %v4635
      %v4637 = vlaneseq
      %v4638 = vshrl.u32 %v4637, 7
      %v4639 = vsub.s32 2, %v4638
      %v4640 = vrot.slane %v4627, %v4639
      %v4641 = vlaneseq
      %v4642 = vshrl.u32 %v4641, 7
      %v4643 = vsub.s32 3, %v4642
      %v4644 = vrot.slane %v4627, %v4643
      %v4777 = vunpack.c.l.b16 %v4499
      %v4778 = vunpack.c.h.b16 %v4499
      %v4779 = vunpack.c.l.b16 %v4500
      %v4780 = vunpack.c.h.b16 %v4500
      %v4781 = vunpack.c.l.b16 %v4501
      %v4782 = vunpack.c.h.b16 %v4501
      %v4783 = vunpack.c.l.b16 %v4502
      %v4784 = vunpack.c.h.b16 %v4502
      %v4785 = vunpack.c.l.b16 %v4503
      %v4786 = vunpack.c.h.b16 %v4503
      %v4787 = vunpack.c.l.b16 %v4504
      %v4788 = vunpack.c.h.b16 %v4504
      %v4789 = vunpack.c.l.b16 %v4505
      %v4790 = vunpack.c.h.b16 %v4505
      %v4791 = vunpack.c.l.b16 %v4506
      %v4792 = vunpack.c.h.b16 %v4506
      %v4793 = vunpack.c.l.b16 %v4507
      %v4794 = vunpack.c.h.b16 %v4507
      %v4795 = vunpack.c.l.b16 %v4508
      %v4796 = vunpack.c.h.b16 %v4508
      %v4797 = vunpack.c.l.b16 %v4509
      %v4798 = vunpack.c.h.b16 %v4509
      %v4799 = vunpack.c.l.b16 %v4510
      %v4800 = vunpack.c.h.b16 %v4510
      %v4801 = vunpack.c.l.b16 %v4511
      %v4802 = vunpack.c.h.b16 %v4511
      %v4803 = vunpack.c.l.b16 %v4512
      %v4804 = vunpack.c.h.b16 %v4512
      %v4805 = vunpack.c.l.b16 %v4513
      %v4806 = vunpack.c.h.b16 %v4513
      %v4807 = vunpack.c.l.b16 %v4514
      %v4808 = vunpack.c.h.b16 %v4514
      %v4809 = vunpack.c.l.b16 %v4515
      %v4810 = vunpack.c.h.b16 %v4515
      %v4811 = vunpack.c.l.b16 %v4516
      %v4812 = vunpack.c.h.b16 %v4516
      %v4813 = vunpack.c.l.b16 %v4517
      %v4814 = vunpack.c.h.b16 %v4517
      %v4815 = vunpack.c.l.b16 %v4518
      %v4816 = vunpack.c.h.b16 %v4518
      %v4817 = vunpack.c.l.b16 %v4519
      %v4818 = vunpack.c.h.b16 %v4519
      %v4819 = vunpack.c.l.b16 %v4520
      %v4820 = vunpack.c.h.b16 %v4520
      %v4821 = vunpack.c.l.b16 %v4521
      %v4822 = vunpack.c.h.b16 %v4521
      %v4823 = vunpack.c.l.b16 %v4522
      %v4824 = vunpack.c.h.b16 %v4522
      %v4825 = vunpack.c.l.b16 %v4523
      %v4826 = vunpack.c.h.b16 %v4523
      %v4827 = vunpack.c.l.b16 %v4524
      %v4828 = vunpack.c.h.b16 %v4524
      %v4829 = vunpack.c.l.b16 %v4525
      %v4830 = vunpack.c.h.b16 %v4525
      %v4831 = vunpack.c.l.b16 %v4526
      %v4832 = vunpack.c.h.b16 %v4526
      %v4833 = vunpack.c.l.b16 %v4527
      %v4834 = vunpack.c.h.b16 %v4527
      %v4835 = vunpack.c.l.b16 %v4528
      %v4836 = vunpack.c.h.b16 %v4528
      %v4837 = vunpack.c.l.b16 %v4529
      %v4838 = vunpack.c.h.b16 %v4529
      %v4839 = vunpack.c.l.b16 %v4530
      %v4840 = vunpack.c.h.b16 %v4530
      %v4841 = vunpack.c.l.b16 %v4531
      %v4842 = vunpack.c.h.b16 %v4531
      %v4843 = vunpack.c.l.b16 %v4532
      %v4844 = vunpack.c.h.b16 %v4532
      %v4845 = vunpack.c.l.b16 %v4533
      %v4846 = vunpack.c.h.b16 %v4533
      %v4847 = vunpack.c.l.b16 %v4534
      %v4848 = vunpack.c.h.b16 %v4534
      %v4849 = vunpack.c.l.b16 %v4535
      %v4850 = vunpack.c.h.b16 %v4535
      %v4851 = vunpack.c.l.b16 %v4536
      %v4852 = vunpack.c.h.b16 %v4536
      %v4853 = vunpack.c.l.b16 %v4537
      %v4854 = vunpack.c.h.b16 %v4537
      %v4855 = vunpack.c.l.b16 %v4538
      %v4856 = vunpack.c.h.b16 %v4538
      %v4857 = vunpack.c.l.b16 %v4539
      %v4858 = vunpack.c.h.b16 %v4539
      %v4859 = vunpack.c.l.b16 %v4540
      %v4860 = vunpack.c.h.b16 %v4540
      %v4861 = vunpack.c.l.b16 %v4541
      %v4862 = vunpack.c.h.b16 %v4541
      %v4863 = vunpack.c.l.b16 %v4542
      %v4864 = vunpack.c.h.b16 %v4542
      %v4865 = vunpack.c.l.b16 %v4543
      %v4866 = vunpack.c.h.b16 %v4543
      %v4867 = vunpack.c.l.b16 %v4544
      %v4868 = vunpack.c.h.b16 %v4544
      %v4869 = vunpack.c.l.b16 %v4545
      %v4870 = vunpack.c.h.b16 %v4545
      %v4871 = vunpack.c.l.b16 %v4546
      %v4872 = vunpack.c.h.b16 %v4546
      %v4873 = vunpack.c.l.b16 %v4547
      %v4874 = vunpack.c.h.b16 %v4547
      %v4875 = vunpack.c.l.b16 %v4548
      %v4876 = vunpack.c.h.b16 %v4548
      %v4877 = vunpack.c.l.b16 %v4549
      %v4878 = vunpack.c.h.b16 %v4549
      %v4879 = vunpack.c.l.b16 %v4550
      %v4880 = vunpack.c.h.b16 %v4550
      %v4881 = vunpack.c.l.b16 %v4551
      %v4882 = vunpack.c.h.b16 %v4551
      %v4883 = vunpack.c.l.b16 %v4552
      %v4884 = vunpack.c.h.b16 %v4552
      %v4885 = vunpack.c.l.b16 %v4553
      %v4886 = vunpack.c.h.b16 %v4553
      %v4887 = vunpack.c.l.b16 %v4554
      %v4888 = vunpack.c.h.b16 %v4554
      %v4889 = vunpack.c.l.b16 %v4555
      %v4890 = vunpack.c.h.b16 %v4555
      %v4891 = vunpack.c.l.b16 %v4556
      %v4892 = vunpack.c.h.b16 %v4556
      %v4893 = vunpack.c.l.b16 %v4557
      %v4894 = vunpack.c.h.b16 %v4557
      %v4895 = vunpack.c.l.b16 %v4558
      %v4896 = vunpack.c.h.b16 %v4558
      %v4897 = vunpack.c.l.b16 %v4559
      %v4898 = vunpack.c.h.b16 %v4559
      %v4899 = vunpack.c.l.b16 %v4560
      %v4900 = vunpack.c.h.b16 %v4560
      %v4901 = vunpack.c.l.b16 %v4561
      %v4902 = vunpack.c.h.b16 %v4561
      %v4903 = vunpack.c.l.b16 %v4562
      %v4904 = vunpack.c.h.b16 %v4562
      %v4905 = vunpack.c.l.b16 %v4563
      %v4906 = vunpack.c.h.b16 %v4563
      %v4907 = vunpack.c.l.b16 %v4564
      %v4908 = vunpack.c.h.b16 %v4564
      %v4909 = vunpack.c.l.b16 %v4565
      %v4910 = vunpack.c.h.b16 %v4565
      %v4911 = vunpack.c.l.b16 %v4566
      %v4912 = vunpack.c.h.b16 %v4566
      %v4913 = vunpack.c.l.b16 %v4567
      %v4914 = vunpack.c.h.b16 %v4567
      %v4915 = vunpack.c.l.b16 %v4568
      %v4916 = vunpack.c.h.b16 %v4568
      %v4917 = vunpack.c.l.b16 %v4569
      %v4918 = vunpack.c.h.b16 %v4569
      %v4919 = vunpack.c.l.b16 %v4570
      %v4920 = vunpack.c.h.b16 %v4570
      %v4921 = vunpack.c.l.b16 %v4571
      %v4922 = vunpack.c.h.b16 %v4571
      %v4923 = vunpack.c.l.b16 %v4572
      %v4924 = vunpack.c.h.b16 %v4572
      %v4925 = vunpack.c.l.b16 %v4573
      %v4926 = vunpack.c.h.b16 %v4573
      %v4927 = vunpack.c.l.b16 %v4574
      %v4928 = vunpack.c.h.b16 %v4574
      %v4929 = vunpack.c.l.b16 %v4575
      %v4930 = vunpack.c.h.b16 %v4575
      %v4931 = vunpack.c.l.b16 %v4576
      %v4932 = vunpack.c.h.b16 %v4576
      %v4933 = vunpack.c.l.b16 %v4577
      %v4934 = vunpack.c.h.b16 %v4577
      %v4935 = vunpack.c.l.b16 %v4578
      %v4936 = vunpack.c.h.b16 %v4578
      %v4937 = vunpack.c.l.b16 %v4579
      %v4938 = vunpack.c.h.b16 %v4579
      %v4939 = vunpack.c.l.b16 %v4580
      %v4940 = vunpack.c.h.b16 %v4580
      %v4941 = vunpack.c.l.b16 %v4581
      %v4942 = vunpack.c.h.b16 %v4581
      %v4943 = vunpack.c.l.b16 %v4582
      %v4944 = vunpack.c.h.b16 %v4582
      %v4945 = vunpack.c.l.b16 %v4583
      %v4946 = vunpack.c.h.b16 %v4583
      %v4947 = vunpack.c.l.b16 %v4584
      %v4948 = vunpack.c.h.b16 %v4584
      %v4949 = vunpack.c.l.b16 %v4585
      %v4950 = vunpack.c.h.b16 %v4585
      %v4951 = vunpack.c.l.b16 %v4586
      %v4952 = vunpack.c.h.b16 %v4586
      %v4953 = vunpack.c.l.b16 %v4587
      %v4954 = vunpack.c.h.b16 %v4587
      %v4955 = vunpack.c.l.b16 %v4588
      %v4956 = vunpack.c.h.b16 %v4588
      %v4957 = vunpack.c.l.b16 %v4589
      %v4958 = vunpack.c.h.b16 %v4589
      %v4959 = vunpack.c.l.b16 %v4590
      %v4960 = vunpack.c.h.b16 %v4590
      %v4961 = vunpack.c.l.b16 %v4591
      %v4962 = vunpack.c.h.b16 %v4591
      %v4963 = vunpack.c.l.b16 %v4592
      %v4964 = vunpack.c.h.b16 %v4592
      %v4965 = vunpack.c.l.b16 %v4593
      %v4966 = vunpack.c.h.b16 %v4593
      %v4967 = vunpack.c.l.b16 %v4594
      %v4968 = vunpack.c.h.b16 %v4594
      %v4969 = vunpack.c.l.b16 %v4595
      %v4970 = vunpack.c.h.b16 %v4595
      %v4971 = vunpack.c.l.b16 %v4596
      %v4972 = vunpack.c.h.b16 %v4596
      %v4973 = vunpack.c.l.b16 %v4597
      %v4974 = vunpack.c.h.b16 %v4597
      %v4975 = vunpack.c.l.b16 %v4598
      %v4976 = vunpack.c.h.b16 %v4598
      %v4977 = vunpack.c.l.b16 %v4599
      %v4978 = vunpack.c.h.b16 %v4599
      %v4979 = vunpack.c.l.b16 %v4600
      %v4980 = vunpack.c.h.b16 %v4600
      %v4981 = vunpack.c.l.b16 %v4601
      %v4982 = vunpack.c.h.b16 %v4601
      %v4983 = vunpack.c.l.b16 %v4602
      %v4984 = vunpack.c.h.b16 %v4602
      %v4985 = vunpack.c.l.b16 %v4603
      %v4986 = vunpack.c.h.b16 %v4603
      %v4987 = vunpack.c.l.b16 %v4604
      %v4988 = vunpack.c.h.b16 %v4604
      %v4989 = vunpack.c.l.b16 %v4605
      %v4990 = vunpack.c.h.b16 %v4605
      %v4991 = vunpack.c.l.b16 %v4606
      %v4992 = vunpack.c.h.b16 %v4606
      %v4993 = vunpack.c.l.b16 %v4607
      %v4994 = vunpack.c.h.b16 %v4607
      %v4995 = vunpack.c.l.b16 %v4608
      %v4996 = vunpack.c.h.b16 %v4608
      %v4997 = vunpack.c.l.b16 %v4609
      %v4998 = vunpack.c.h.b16 %v4609
      %v4999 = vunpack.c.l.b16 %v4610
      %v5000 = vunpack.c.h.b16 %v4610
      %v5001 = vunpack.c.l.b16 %v4611
      %v5002 = vunpack.c.h.b16 %v4611
      %v5003 = vunpack.c.l.b16 %v4612
      %v5004 = vunpack.c.h.b16 %v4612
      %v5005 = vunpack.c.l.b16 %v4613
      %v5006 = vunpack.c.h.b16 %v4613
      %v5007 = vunpack.c.l.b16 %v4614
      %v5008 = vunpack.c.h.b16 %v4614
      %v5009 = vunpack.c.l.b16 %v4615
      %v5010 = vunpack.c.h.b16 %v4615
      %v5011 = vunpack.c.l.b16 %v4616
      %v5012 = vunpack.c.h.b16 %v4616
      %v5013 = vunpack.c.l.b16 %v4617
      %v5014 = vunpack.c.h.b16 %v4617
      %v5015 = vunpack.c.l.b16 %v4618
      %v5016 = vunpack.c.h.b16 %v4618
      %v5017 = vunpack.c.l.b16 %v4619
      %v5018 = vunpack.c.h.b16 %v4619
      %v5019 = vunpack.c.l.b16 %v4620
      %v5020 = vunpack.c.h.b16 %v4620
      %v5021 = vunpack.c.l.b16 %v4621
      %v5022 = vunpack.c.h.b16 %v4621
      %v5023 = vunpack.c.l.b16 %v4622
      %v5024 = vunpack.c.h.b16 %v4622
      %v5025 = vunpack.c.l.b16 %v4623
      %v5026 = vunpack.c.h.b16 %v4623
      %v5027 = vunpack.c.l.b16 %v4624
      %v5028 = vunpack.c.h.b16 %v4624
      %v5029 = vunpack.c.l.b16 %v4625
      %v5030 = vunpack.c.h.b16 %v4625
      %v5031 = vunpack.c.l.b16 %v4626
      %v5032 = vunpack.c.h.b16 %v4626
      %v5033 = vpack.c.b16 %v4781, %v4777
      %v5034 = vpack.c.b16 %v4782, %v4778
      %v5035 = vpack.c.b16 %v4783, %v4779
      %v5036 = vpack.c.b16 %v4784, %v4780
      %v5037 = vpack.c.b16 %v4789, %v4785
      %v5038 = vpack.c.b16 %v4790, %v4786
      %v5039 = vpack.c.b16 %v4791, %v4787
      %v5040 = vpack.c.b16 %v4792, %v4788
      %v5041 = vpack.c.b16 %v4797, %v4793
      %v5042 = vpack.c.b16 %v4798, %v4794
      %v5043 = vpack.c.b16 %v4799, %v4795
      %v5044 = vpack.c.b16 %v4800, %v4796
      %v5045 = vpack.c.b16 %v4805, %v4801
      %v5046 = vpack.c.b16 %v4806, %v4802
      %v5047 = vpack.c.b16 %v4807, %v4803
      %v5048 = vpack.c.b16 %v4808, %v4804
      %v5049 = vpack.c.b16 %v4813, %v4809
      %v5050 = vpack.c.b16 %v4814, %v4810
      %v5051 = vpack.c.b16 %v4815, %v4811
      %v5052 = vpack.c.b16 %v4816, %v4812
      %v5053 = vpack.c.b16 %v4821, %v4817
      %v5054 = vpack.c.b16 %v4822, %v4818
      %v5055 = vpack.c.b16 %v4823, %v4819
      %v5056 = vpack.c.b16 %v4824, %v4820
      %v5057 = vpack.c.b16 %v4829, %v4825
      %v5058 = vpack.c.b16 %v4830, %v4826
      %v5059 = vpack.c.b16 %v4831, %v4827
      %v5060 = vpack.c.b16 %v4832, %v4828
      %v5061 = vpack.c.b16 %v4837, %v4833
      %v5062 = vpack.c.b16 %v4838, %v4834
      %v5063 = vpack.c.b16 %v4839, %v4835
      %v5064 = vpack.c.b16 %v4840, %v4836
      %v5065 = vpack.c.b16 %v4845, %v4841
      %v5066 = vpack.c.b16 %v4846, %v4842
      %v5067 = vpack.c.b16 %v4847, %v4843
      %v5068 = vpack.c.b16 %v4848, %v4844
      %v5069 = vpack.c.b16 %v4853, %v4849
      %v5070 = vpack.c.b16 %v4854, %v4850
      %v5071 = vpack.c.b16 %v4855, %v4851
      %v5072 = vpack.c.b16 %v4856, %v4852
      %v5073 = vpack.c.b16 %v4861, %v4857
      %v5074 = vpack.c.b16 %v4862, %v4858
      %v5075 = vpack.c.b16 %v4863, %v4859
      %v5076 = vpack.c.b16 %v4864, %v4860
      %v5077 = vpack.c.b16 %v4869, %v4865
      %v5078 = vpack.c.b16 %v4870, %v4866
      %v5079 = vpack.c.b16 %v4871, %v4867
      %v5080 = vpack.c.b16 %v4872, %v4868
      %v5081 = vpack.c.b16 %v4877, %v4873
      %v5082 = vpack.c.b16 %v4878, %v4874
      %v5083 = vpack.c.b16 %v4879, %v4875
      %v5084 = vpack.c.b16 %v4880, %v4876
      %v5085 = vpack.c.b16 %v4885, %v4881
      %v5086 = vpack.c.b16 %v4886, %v4882
      %v5087 = vpack.c.b16 %v4887, %v4883
      %v5088 = vpack.c.b16 %v4888, %v4884
      %v5089 = vpack.c.b16 %v4893, %v4889
      %v5090 = vpack.c.b16 %v4894, %v4890
      %v5091 = vpack.c.b16 %v4895, %v4891
      %v5092 = vpack.c.b16 %v4896, %v4892
      %v5093 = vpack.c.b16 %v4901, %v4897
      %v5094 = vpack.c.b16 %v4902, %v4898
      %v5095 = vpack.c.b16 %v4903, %v4899
      %v5096 = vpack.c.b16 %v4904, %v4900
      %v5097 = vpack.c.b16 %v4909, %v4905
      %v5098 = vpack.c.b16 %v4910, %v4906
      %v5099 = vpack.c.b16 %v4911, %v4907
      %v5100 = vpack.c.b16 %v4912, %v4908
      %v5101 = vpack.c.b16 %v4917, %v4913
      %v5102 = vpack.c.b16 %v4918, %v4914
      %v5103 = vpack.c.b16 %v4919, %v4915
      %v5104 = vpack.c.b16 %v4920, %v4916
      %v5105 = vpack.c.b16 %v4925, %v4921
      %v5106 = vpack.c.b16 %v4926, %v4922
      %v5107 = vpack.c.b16 %v4927, %v4923
      %v5108 = vpack.c.b16 %v4928, %v4924
      %v5109 = vpack.c.b16 %v4933, %v4929
      %v5110 = vpack.c.b16 %v4934, %v4930
      %v5111 = vpack.c.b16 %v4935, %v4931
      %v5112 = vpack.c.b16 %v4936, %v4932
      %v5113 = vpack.c.b16 %v4941, %v4937
      %v5114 = vpack.c.b16 %v4942, %v4938
      %v5115 = vpack.c.b16 %v4943, %v4939
      %v5116 = vpack.c.b16 %v4944, %v4940
      %v5117 = vpack.c.b16 %v4949, %v4945
      %v5118 = vpack.c.b16 %v4950, %v4946
      %v5119 = vpack.c.b16 %v4951, %v4947
      %v5120 = vpack.c.b16 %v4952, %v4948
      %v5121 = vpack.c.b16 %v4957, %v4953
      %v5122 = vpack.c.b16 %v4958, %v4954
      %v5123 = vpack.c.b16 %v4959, %v4955
      %v5124 = vpack.c.b16 %v4960, %v4956
      %v5125 = vpack.c.b16 %v4965, %v4961
      %v5126 = vpack.c.b16 %v4966, %v4962
      %v5127 = vpack.c.b16 %v4967, %v4963
      %v5128 = vpack.c.b16 %v4968, %v4964
      %v5129 = vpack.c.b16 %v4973, %v4969
      %v5130 = vpack.c.b16 %v4974, %v4970
      %v5131 = vpack.c.b16 %v4975, %v4971
      %v5132 = vpack.c.b16 %v4976, %v4972
      %v5133 = vpack.c.b16 %v4981, %v4977
      %v5134 = vpack.c.b16 %v4982, %v4978
      %v5135 = vpack.c.b16 %v4983, %v4979
      %v5136 = vpack.c.b16 %v4984, %v4980
      %v5137 = vpack.c.b16 %v4989, %v4985
      %v5138 = vpack.c.b16 %v4990, %v4986
      %v5139 = vpack.c.b16 %v4991, %v4987
      %v5140 = vpack.c.b16 %v4992, %v4988
      %v5141 = vpack.c.b16 %v4997, %v4993
      %v5142 = vpack.c.b16 %v4998, %v4994
      %v5143 = vpack.c.b16 %v4999, %v4995
      %v5144 = vpack.c.b16 %v5000, %v4996
      %v5145 = vpack.c.b16 %v5005, %v5001
      %v5146 = vpack.c.b16 %v5006, %v5002
      %v5147 = vpack.c.b16 %v5007, %v5003
      %v5148 = vpack.c.b16 %v5008, %v5004
      %v5149 = vpack.c.b16 %v5013, %v5009
      %v5150 = vpack.c.b16 %v5014, %v5010
      %v5151 = vpack.c.b16 %v5015, %v5011
      %v5152 = vpack.c.b16 %v5016, %v5012
      %v5153 = vpack.c.b16 %v5021, %v5017
      %v5154 = vpack.c.b16 %v5022, %v5018
      %v5155 = vpack.c.b16 %v5023, %v5019
      %v5156 = vpack.c.b16 %v5024, %v5020
      %v5157 = vpack.c.b16 %v5029, %v5025
      %v5158 = vpack.c.b16 %v5030, %v5026
      %v5159 = vpack.c.b16 %v5031, %v5027
      %v5160 = vpack.c.b16 %v5032, %v5028
      %5289 = vmatprep.subr.bf16.mxu0 %v5062
      %5290 = vmatpush1.bf16.xpose.msra.mxu0 %v5061
      %5291 = vmatprep.subr.bf16.mxu0 %v5058
      %5292 = vmatpush1.bf16.xpose.msra.mxu0 %v5057
      %5293 = vmatprep.subr.bf16.mxu0 %v5054
      %5294 = vmatpush1.bf16.xpose.msra.mxu0 %v5053
      %5295 = vmatprep.subr.bf16.mxu0 %v5050
      %5296 = vmatpush1.bf16.xpose.msra.mxu0 %v5049
      %5297 = vmatprep.subr.bf16.mxu0 %v5046
      %5298 = vmatpush1.bf16.xpose.msra.mxu0 %v5045
      %5299 = vmatprep.subr.bf16.mxu0 %v5042
      %5300 = vmatpush1.bf16.xpose.msra.mxu0 %v5041
      %5301 = vmatprep.subr.bf16.mxu0 %v5038
      %5302 = vmatpush1.bf16.xpose.msra.mxu0 %v5037
      %5303 = vmatprep.subr.bf16.mxu0 %v5034
      %5304 = vmatpush1.bf16.xpose.msra.mxu0 %v5033
      %5305 = vmatprep.subr.bf16.mxu0 %v5094
      %5306 = vmatpush2.bf16.xpose.msra.mxu0 %v5093
      %5307 = vmatprep.subr.bf16.mxu0 %v5090
      %5308 = vmatpush2.bf16.xpose.msra.mxu0 %v5089
      %5309 = vmatprep.subr.bf16.mxu0 %v5086
      %5310 = vmatpush2.bf16.xpose.msra.mxu0 %v5085
      %5311 = vmatprep.subr.bf16.mxu0 %v5082
      %5312 = vmatpush2.bf16.xpose.msra.mxu0 %v5081
      %5313 = vmatprep.subr.bf16.mxu0 %v5078
      %5314 = vmatpush2.bf16.xpose.msra.mxu0 %v5077
      %5315 = vmatprep.subr.bf16.mxu0 %v5074
      %5316 = vmatpush2.bf16.xpose.msra.mxu0 %v5073
      %5317 = vmatprep.subr.bf16.mxu0 %v5070
      %5318 = vmatpush2.bf16.xpose.msra.mxu0 %v5069
      %5319 = vmatprep.subr.bf16.mxu0 %v5066
      %5320 = vmatpush2.bf16.xpose.msra.mxu0 %v5065
      %5321 = vmatprep.mubr.bf16.mxu0 %v4436
      %5322 = vmatmul.mubr.bf16.gmra.mxu0 %v4435
      %v5323 = vpop.f32.mrf.mxu0
      %v5324 = vadd.f32 %v4632, %v5323
      %v5325 = vpop.f32.mrf.mxu0
      %v5326 = vadd.f32 %v4636, %v5325
      %v5327 = vpop.f32.mrf.mxu0
      %v5328 = vadd.f32 %v4632, %v5327
      %v5329 = vpop.f32.mrf.mxu0
      %v5330 = vadd.f32 %v4636, %v5329
      %5331 = vmatprep.mubr.bf16.mxu0 %v4440
      %5332 = vmatmul.mubr.bf16.gmra.mxu0 %v4439
      %v5333 = vpop.f32.mrf.mxu0
      %v5334 = vadd.f32 %v4632, %v5333
      %v5335 = vpop.f32.mrf.mxu0
      %v5336 = vadd.f32 %v4636, %v5335
      %v5337 = vpop.f32.mrf.mxu0
      %v5338 = vadd.f32 %v4632, %v5337
      %v5339 = vpop.f32.mrf.mxu0
      %v5340 = vadd.f32 %v4636, %v5339
      %5341 = vmatprep.mubr.bf16.mxu0 %v4444
      %5342 = vmatmul.mubr.bf16.gmra.mxu0 %v4443
      %v5343 = vpop.f32.mrf.mxu0
      %v5344 = vadd.f32 %v4632, %v5343
      %v5345 = vpop.f32.mrf.mxu0
      %v5346 = vadd.f32 %v4636, %v5345
      %v5347 = vpop.f32.mrf.mxu0
      %v5348 = vadd.f32 %v4632, %v5347
      %v5349 = vpop.f32.mrf.mxu0
      %v5350 = vadd.f32 %v4636, %v5349
      %5351 = vmatprep.mubr.bf16.mxu0 %v4448
      %5352 = vmatmul.mubr.bf16.gmra.mxu0 %v4447
      %v5353 = vpop.f32.mrf.mxu0
      %v5354 = vadd.f32 %v4632, %v5353
      %v5355 = vpop.f32.mrf.mxu0
      %v5356 = vadd.f32 %v4636, %v5355
      %v5357 = vpop.f32.mrf.mxu0
      %v5358 = vadd.f32 %v4632, %v5357
      %v5359 = vpop.f32.mrf.mxu0
      %v5360 = vadd.f32 %v4636, %v5359
      %5361 = vmatprep.mubr.bf16.mxu0 %v4452
      %5362 = vmatmul.mubr.bf16.gmra.mxu0 %v4451
      %v5363 = vpop.f32.mrf.mxu0
      %v5364 = vadd.f32 %v4632, %v5363
      %v5365 = vpop.f32.mrf.mxu0
      %v5366 = vadd.f32 %v4636, %v5365
      %v5367 = vpop.f32.mrf.mxu0
      %v5368 = vadd.f32 %v4632, %v5367
      %v5369 = vpop.f32.mrf.mxu0
      %v5370 = vadd.f32 %v4636, %v5369
      %5371 = vmatprep.mubr.bf16.mxu0 %v4456
      %5372 = vmatmul.mubr.bf16.gmra.mxu0 %v4455
      %v5373 = vpop.f32.mrf.mxu0
      %v5374 = vadd.f32 %v4632, %v5373
      %v5375 = vpop.f32.mrf.mxu0
      %v5376 = vadd.f32 %v4636, %v5375
      %v5377 = vpop.f32.mrf.mxu0
      %v5378 = vadd.f32 %v4632, %v5377
      %v5379 = vpop.f32.mrf.mxu0
      %v5380 = vadd.f32 %v4636, %v5379
      %5381 = vmatprep.mubr.bf16.mxu0 %v4460
      %5382 = vmatmul.mubr.bf16.gmra.mxu0 %v4459
      %v5383 = vpop.f32.mrf.mxu0
      %v5384 = vadd.f32 %v4632, %v5383
      %v5385 = vpop.f32.mrf.mxu0
      %v5386 = vadd.f32 %v4636, %v5385
      %v5387 = vpop.f32.mrf.mxu0
      %v5388 = vadd.f32 %v4632, %v5387
      %v5389 = vpop.f32.mrf.mxu0
      %v5390 = vadd.f32 %v4636, %v5389
      %5391 = vmatprep.mubr.bf16.mxu0 %v4464
      %5392 = vmatmul.mubr.bf16.gmra.mxu0 %v4463
      %v5393 = vpop.f32.mrf.mxu0
      %v5394 = vadd.f32 %v4632, %v5393
      %v5395 = vpop.f32.mrf.mxu0
      %v5396 = vadd.f32 %v4636, %v5395
      %v5397 = vpop.f32.mrf.mxu0
      %v5398 = vadd.f32 %v4632, %v5397
      %v5399 = vpop.f32.mrf.mxu0
      %v5400 = vadd.f32 %v4636, %v5399
      %5401 = vmatprep.mubr.bf16.mxu0 %v4468
      %5402 = vmatmul.mubr.bf16.gmra.mxu0 %v4467
      %v5403 = vpop.f32.mrf.mxu0
      %v5404 = vadd.f32 %v4632, %v5403
      %v5405 = vpop.f32.mrf.mxu0
      %v5406 = vadd.f32 %v4636, %v5405
      %v5407 = vpop.f32.mrf.mxu0
      %v5408 = vadd.f32 %v4632, %v5407
      %v5409 = vpop.f32.mrf.mxu0
      %v5410 = vadd.f32 %v4636, %v5409
      %5411 = vmatprep.mubr.bf16.mxu0 %v4472
      %5412 = vmatmul.mubr.bf16.gmra.mxu0 %v4471
      %v5413 = vpop.f32.mrf.mxu0
      %v5414 = vadd.f32 %v4632, %v5413
      %v5415 = vpop.f32.mrf.mxu0
      %v5416 = vadd.f32 %v4636, %v5415
      %v5417 = vpop.f32.mrf.mxu0
      %v5418 = vadd.f32 %v4632, %v5417
      %v5419 = vpop.f32.mrf.mxu0
      %v5420 = vadd.f32 %v4636, %v5419
      %5421 = vmatprep.mubr.bf16.mxu0 %v4476
      %5422 = vmatmul.mubr.bf16.gmra.mxu0 %v4475
      %v5423 = vpop.f32.mrf.mxu0
      %v5424 = vadd.f32 %v4632, %v5423
      %v5425 = vpop.f32.mrf.mxu0
      %v5426 = vadd.f32 %v4636, %v5425
      %v5427 = vpop.f32.mrf.mxu0
      %v5428 = vadd.f32 %v4632, %v5427
      %v5429 = vpop.f32.mrf.mxu0
      %v5430 = vadd.f32 %v4636, %v5429
      %5431 = vmatprep.mubr.bf16.mxu0 %v4480
      %5432 = vmatmul.mubr.bf16.gmra.mxu0 %v4479
      %v5433 = vpop.f32.mrf.mxu0
      %v5434 = vadd.f32 %v4632, %v5433
      %v5435 = vpop.f32.mrf.mxu0
      %v5436 = vadd.f32 %v4636, %v5435
      %v5437 = vpop.f32.mrf.mxu0
      %v5438 = vadd.f32 %v4632, %v5437
      %v5439 = vpop.f32.mrf.mxu0
      %v5440 = vadd.f32 %v4636, %v5439
      %5441 = vmatprep.mubr.bf16.mxu0 %v4484
      %5442 = vmatmul.mubr.bf16.gmra.mxu0 %v4483
      %v5443 = vpop.f32.mrf.mxu0
      %v5444 = vadd.f32 %v4632, %v5443
      %v5445 = vpop.f32.mrf.mxu0
      %v5446 = vadd.f32 %v4636, %v5445
      %v5447 = vpop.f32.mrf.mxu0
      %v5448 = vadd.f32 %v4632, %v5447
      %v5449 = vpop.f32.mrf.mxu0
      %v5450 = vadd.f32 %v4636, %v5449
      %5451 = vmatprep.mubr.bf16.mxu0 %v4488
      %5452 = vmatmul.mubr.bf16.gmra.mxu0 %v4487
      %v5453 = vpop.f32.mrf.mxu0
      %v5454 = vadd.f32 %v4632, %v5453
      %v5455 = vpop.f32.mrf.mxu0
      %v5456 = vadd.f32 %v4636, %v5455
      %v5457 = vpop.f32.mrf.mxu0
      %v5458 = vadd.f32 %v4632, %v5457
      %v5459 = vpop.f32.mrf.mxu0
      %v5460 = vadd.f32 %v4636, %v5459
      %5461 = vmatprep.mubr.bf16.mxu0 %v4492
      %5462 = vmatmul.mubr.bf16.gmra.mxu0 %v4491
      %v5463 = vpop.f32.mrf.mxu0
      %v5464 = vadd.f32 %v4632, %v5463
      %v5465 = vpop.f32.mrf.mxu0
      %v5466 = vadd.f32 %v4636, %v5465
      %v5467 = vpop.f32.mrf.mxu0
      %v5468 = vadd.f32 %v4632, %v5467
      %v5469 = vpop.f32.mrf.mxu0
      %v5470 = vadd.f32 %v4636, %v5469
      %5471 = vmatprep.mubr.bf16.mxu0 %v4496
      %5472 = vmatmul.mubr.bf16.gmra.mxu0 %v4495
      %v5473 = vpop.f32.mrf.mxu0
      %v5474 = vadd.f32 %v4632, %v5473
      %v5475 = vpop.f32.mrf.mxu0
      %v5476 = vadd.f32 %v4636, %v5475
      %v5477 = vpop.f32.mrf.mxu0
      %v5478 = vadd.f32 %v4632, %v5477
      %v5479 = vpop.f32.mrf.mxu0
      %v5480 = vadd.f32 %v4636, %v5479
      %5481 = vdwg.mxu0
      %5482 = vmatprep.subr.bf16.mxu0 %v5064
      %5483 = vmatpush1.bf16.xpose.msra.mxu0 %v5063
      %5484 = vmatprep.subr.bf16.mxu0 %v5060
      %5485 = vmatpush1.bf16.xpose.msra.mxu0 %v5059
      %5486 = vmatprep.subr.bf16.mxu0 %v5056
      %5487 = vmatpush1.bf16.xpose.msra.mxu0 %v5055
      %5488 = vmatprep.subr.bf16.mxu0 %v5052
      %5489 = vmatpush1.bf16.xpose.msra.mxu0 %v5051
      %5490 = vmatprep.subr.bf16.mxu0 %v5048
      %5491 = vmatpush1.bf16.xpose.msra.mxu0 %v5047
      %5492 = vmatprep.subr.bf16.mxu0 %v5044
      %5493 = vmatpush1.bf16.xpose.msra.mxu0 %v5043
      %5494 = vmatprep.subr.bf16.mxu0 %v5040
      %5495 = vmatpush1.bf16.xpose.msra.mxu0 %v5039
      %5496 = vmatprep.subr.bf16.mxu0 %v5036
      %5497 = vmatpush1.bf16.xpose.msra.mxu0 %v5035
      %5498 = vmatprep.subr.bf16.mxu0 %v5096
      %5499 = vmatpush2.bf16.xpose.msra.mxu0 %v5095
      %5500 = vmatprep.subr.bf16.mxu0 %v5092
      %5501 = vmatpush2.bf16.xpose.msra.mxu0 %v5091
      %5502 = vmatprep.subr.bf16.mxu0 %v5088
      %5503 = vmatpush2.bf16.xpose.msra.mxu0 %v5087
      %5504 = vmatprep.subr.bf16.mxu0 %v5084
      %5505 = vmatpush2.bf16.xpose.msra.mxu0 %v5083
      %5506 = vmatprep.subr.bf16.mxu0 %v5080
      %5507 = vmatpush2.bf16.xpose.msra.mxu0 %v5079
      %5508 = vmatprep.subr.bf16.mxu0 %v5076
      %5509 = vmatpush2.bf16.xpose.msra.mxu0 %v5075
      %5510 = vmatprep.subr.bf16.mxu0 %v5072
      %5511 = vmatpush2.bf16.xpose.msra.mxu0 %v5071
      %5512 = vmatprep.subr.bf16.mxu0 %v5068
      %5513 = vmatpush2.bf16.xpose.msra.mxu0 %v5067
      %5514 = vmatprep.mubr.bf16.mxu0 %v4438
      %5515 = vmatmul.mubr.bf16.gmra.mxu0 %v4437
      %v5516 = vpop.f32.mrf.mxu0
      %v5517 = vadd.f32 %v5324, %v5516
      %v5518 = vpop.f32.mrf.mxu0
      %v5519 = vadd.f32 %v5326, %v5518
      %v5520 = vpop.f32.mrf.mxu0
      %v5521 = vadd.f32 %v5328, %v5520
      %v5522 = vpop.f32.mrf.mxu0
      %v5523 = vadd.f32 %v5330, %v5522
      %5524 = vmatprep.mubr.bf16.mxu0 %v4442
      %5525 = vmatmul.mubr.bf16.gmra.mxu0 %v4441
      %v5526 = vpop.f32.mrf.mxu0
      %v5527 = vadd.f32 %v5334, %v5526
      %v5528 = vpop.f32.mrf.mxu0
      %v5529 = vadd.f32 %v5336, %v5528
      %v5530 = vpop.f32.mrf.mxu0
      %v5531 = vadd.f32 %v5338, %v5530
      %v5532 = vpop.f32.mrf.mxu0
      %v5533 = vadd.f32 %v5340, %v5532
      %5534 = vmatprep.mubr.bf16.mxu0 %v4446
      %5535 = vmatmul.mubr.bf16.gmra.mxu0 %v4445
      %v5536 = vpop.f32.mrf.mxu0
      %v5537 = vadd.f32 %v5344, %v5536
      %v5538 = vpop.f32.mrf.mxu0
      %v5539 = vadd.f32 %v5346, %v5538
      %v5540 = vpop.f32.mrf.mxu0
      %v5541 = vadd.f32 %v5348, %v5540
      %v5542 = vpop.f32.mrf.mxu0
      %v5543 = vadd.f32 %v5350, %v5542
      %5544 = vmatprep.mubr.bf16.mxu0 %v4450
      %5545 = vmatmul.mubr.bf16.gmra.mxu0 %v4449
      %v5546 = vpop.f32.mrf.mxu0
      %v5547 = vadd.f32 %v5354, %v5546
      %v5548 = vpop.f32.mrf.mxu0
      %v5549 = vadd.f32 %v5356, %v5548
      %v5550 = vpop.f32.mrf.mxu0
      %v5551 = vadd.f32 %v5358, %v5550
      %v5552 = vpop.f32.mrf.mxu0
      %v5553 = vadd.f32 %v5360, %v5552
      %5554 = vmatprep.mubr.bf16.mxu0 %v4454
      %5555 = vmatmul.mubr.bf16.gmra.mxu0 %v4453
      %v5556 = vpop.f32.mrf.mxu0
      %v5557 = vadd.f32 %v5364, %v5556
      %v5558 = vpop.f32.mrf.mxu0
      %v5559 = vadd.f32 %v5366, %v5558
      %v5560 = vpop.f32.mrf.mxu0
      %v5561 = vadd.f32 %v5368, %v5560
      %v5562 = vpop.f32.mrf.mxu0
      %v5563 = vadd.f32 %v5370, %v5562
      %5564 = vmatprep.mubr.bf16.mxu0 %v4458
      %5565 = vmatmul.mubr.bf16.gmra.mxu0 %v4457
      %v5566 = vpop.f32.mrf.mxu0
      %v5567 = vadd.f32 %v5374, %v5566
      %v5568 = vpop.f32.mrf.mxu0
      %v5569 = vadd.f32 %v5376, %v5568
      %v5570 = vpop.f32.mrf.mxu0
      %v5571 = vadd.f32 %v5378, %v5570
      %v5572 = vpop.f32.mrf.mxu0
      %v5573 = vadd.f32 %v5380, %v5572
      %5574 = vmatprep.mubr.bf16.mxu0 %v4462
      %5575 = vmatmul.mubr.bf16.gmra.mxu0 %v4461
      %v5576 = vpop.f32.mrf.mxu0
      %v5577 = vadd.f32 %v5384, %v5576
      %v5578 = vpop.f32.mrf.mxu0
      %v5579 = vadd.f32 %v5386, %v5578
      %v5580 = vpop.f32.mrf.mxu0
      %v5581 = vadd.f32 %v5388, %v5580
      %v5582 = vpop.f32.mrf.mxu0
      %v5583 = vadd.f32 %v5390, %v5582
      %5584 = vmatprep.mubr.bf16.mxu0 %v4466
      %5585 = vmatmul.mubr.bf16.gmra.mxu0 %v4465
      %v5586 = vpop.f32.mrf.mxu0
      %v5587 = vadd.f32 %v5394, %v5586
      %v5588 = vpop.f32.mrf.mxu0
      %v5589 = vadd.f32 %v5396, %v5588
      %v5590 = vpop.f32.mrf.mxu0
      %v5591 = vadd.f32 %v5398, %v5590
      %v5592 = vpop.f32.mrf.mxu0
      %v5593 = vadd.f32 %v5400, %v5592
      %5594 = vmatprep.mubr.bf16.mxu0 %v4470
      %5595 = vmatmul.mubr.bf16.gmra.mxu0 %v4469
      %v5596 = vpop.f32.mrf.mxu0
      %v5597 = vadd.f32 %v5404, %v5596
      %v5598 = vpop.f32.mrf.mxu0
      %v5599 = vadd.f32 %v5406, %v5598
      %v5600 = vpop.f32.mrf.mxu0
      %v5601 = vadd.f32 %v5408, %v5600
      %v5602 = vpop.f32.mrf.mxu0
      %v5603 = vadd.f32 %v5410, %v5602
      %5604 = vmatprep.mubr.bf16.mxu0 %v4474
      %5605 = vmatmul.mubr.bf16.gmra.mxu0 %v4473
      %v5606 = vpop.f32.mrf.mxu0
      %v5607 = vadd.f32 %v5414, %v5606
      %v5608 = vpop.f32.mrf.mxu0
      %v5609 = vadd.f32 %v5416, %v5608
      %v5610 = vpop.f32.mrf.mxu0
      %v5611 = vadd.f32 %v5418, %v5610
      %v5612 = vpop.f32.mrf.mxu0
      %v5613 = vadd.f32 %v5420, %v5612
      %5614 = vmatprep.mubr.bf16.mxu0 %v4478
      %5615 = vmatmul.mubr.bf16.gmra.mxu0 %v4477
      %v5616 = vpop.f32.mrf.mxu0
      %v5617 = vadd.f32 %v5424, %v5616
      %v5618 = vpop.f32.mrf.mxu0
      %v5619 = vadd.f32 %v5426, %v5618
      %v5620 = vpop.f32.mrf.mxu0
      %v5621 = vadd.f32 %v5428, %v5620
      %v5622 = vpop.f32.mrf.mxu0
      %v5623 = vadd.f32 %v5430, %v5622
      %5624 = vmatprep.mubr.bf16.mxu0 %v4482
      %5625 = vmatmul.mubr.bf16.gmra.mxu0 %v4481
      %v5626 = vpop.f32.mrf.mxu0
      %v5627 = vadd.f32 %v5434, %v5626
      %v5628 = vpop.f32.mrf.mxu0
      %v5629 = vadd.f32 %v5436, %v5628
      %v5630 = vpop.f32.mrf.mxu0
      %v5631 = vadd.f32 %v5438, %v5630
      %v5632 = vpop.f32.mrf.mxu0
      %v5633 = vadd.f32 %v5440, %v5632
      %5634 = vmatprep.mubr.bf16.mxu0 %v4486
      %5635 = vmatmul.mubr.bf16.gmra.mxu0 %v4485
      %v5636 = vpop.f32.mrf.mxu0
      %v5637 = vadd.f32 %v5444, %v5636
      %v5638 = vpop.f32.mrf.mxu0
      %v5639 = vadd.f32 %v5446, %v5638
      %v5640 = vpop.f32.mrf.mxu0
      %v5641 = vadd.f32 %v5448, %v5640
      %v5642 = vpop.f32.mrf.mxu0
      %v5643 = vadd.f32 %v5450, %v5642
      %5644 = vmatprep.mubr.bf16.mxu0 %v4490
      %5645 = vmatmul.mubr.bf16.gmra.mxu0 %v4489
      %v5646 = vpop.f32.mrf.mxu0
      %v5647 = vadd.f32 %v5454, %v5646
      %v5648 = vpop.f32.mrf.mxu0
      %v5649 = vadd.f32 %v5456, %v5648
      %v5650 = vpop.f32.mrf.mxu0
      %v5651 = vadd.f32 %v5458, %v5650
      %v5652 = vpop.f32.mrf.mxu0
      %v5653 = vadd.f32 %v5460, %v5652
      %5654 = vmatprep.mubr.bf16.mxu0 %v4494
      %5655 = vmatmul.mubr.bf16.gmra.mxu0 %v4493
      %v5656 = vpop.f32.mrf.mxu0
      %v5657 = vadd.f32 %v5464, %v5656
      %v5658 = vpop.f32.mrf.mxu0
      %v5659 = vadd.f32 %v5466, %v5658
      %v5660 = vpop.f32.mrf.mxu0
      %v5661 = vadd.f32 %v5468, %v5660
      %v5662 = vpop.f32.mrf.mxu0
      %v5663 = vadd.f32 %v5470, %v5662
      %5664 = vmatprep.mubr.bf16.mxu0 %v4498
      %5665 = vmatmul.mubr.bf16.gmra.mxu0 %v4497
      %v5666 = vpop.f32.mrf.mxu0
      %v5667 = vadd.f32 %v5474, %v5666
      %v5668 = vpop.f32.mrf.mxu0
      %v5669 = vadd.f32 %v5476, %v5668
      %v5670 = vpop.f32.mrf.mxu0
      %v5671 = vadd.f32 %v5478, %v5670
      %v5672 = vpop.f32.mrf.mxu0
      %v5673 = vadd.f32 %v5480, %v5672
      %5674 = vdwg.mxu0
      %5675 = vmatprep.subr.bf16.mxu0 %v5126
      %5676 = vmatpush1.bf16.xpose.msra.mxu0 %v5125
      %5677 = vmatprep.subr.bf16.mxu0 %v5122
      %5678 = vmatpush1.bf16.xpose.msra.mxu0 %v5121
      %5679 = vmatprep.subr.bf16.mxu0 %v5118
      %5680 = vmatpush1.bf16.xpose.msra.mxu0 %v5117
      %5681 = vmatprep.subr.bf16.mxu0 %v5114
      %5682 = vmatpush1.bf16.xpose.msra.mxu0 %v5113
      %5683 = vmatprep.subr.bf16.mxu0 %v5110
      %5684 = vmatpush1.bf16.xpose.msra.mxu0 %v5109
      %5685 = vmatprep.subr.bf16.mxu0 %v5106
      %5686 = vmatpush1.bf16.xpose.msra.mxu0 %v5105
      %5687 = vmatprep.subr.bf16.mxu0 %v5102
      %5688 = vmatpush1.bf16.xpose.msra.mxu0 %v5101
      %5689 = vmatprep.subr.bf16.mxu0 %v5098
      %5690 = vmatpush1.bf16.xpose.msra.mxu0 %v5097
      %5691 = vmatprep.subr.bf16.mxu0 %v5158
      %5692 = vmatpush2.bf16.xpose.msra.mxu0 %v5157
      %5693 = vmatprep.subr.bf16.mxu0 %v5154
      %5694 = vmatpush2.bf16.xpose.msra.mxu0 %v5153
      %5695 = vmatprep.subr.bf16.mxu0 %v5150
      %5696 = vmatpush2.bf16.xpose.msra.mxu0 %v5149
      %5697 = vmatprep.subr.bf16.mxu0 %v5146
      %5698 = vmatpush2.bf16.xpose.msra.mxu0 %v5145
      %5699 = vmatprep.subr.bf16.mxu0 %v5142
      %5700 = vmatpush2.bf16.xpose.msra.mxu0 %v5141
      %5701 = vmatprep.subr.bf16.mxu0 %v5138
      %5702 = vmatpush2.bf16.xpose.msra.mxu0 %v5137
      %5703 = vmatprep.subr.bf16.mxu0 %v5134
      %5704 = vmatpush2.bf16.xpose.msra.mxu0 %v5133
      %5705 = vmatprep.subr.bf16.mxu0 %v5130
      %5706 = vmatpush2.bf16.xpose.msra.mxu0 %v5129
      %5707 = vmatprep.mubr.bf16.mxu0 %v4436
      %5708 = vmatmul.mubr.bf16.gmra.mxu0 %v4435
      %v5709 = vpop.f32.mrf.mxu0
      %v5710 = vadd.f32 %v4640, %v5709
      %v5711 = vpop.f32.mrf.mxu0
      %v5712 = vadd.f32 %v4644, %v5711
      %v5713 = vpop.f32.mrf.mxu0
      %v5714 = vadd.f32 %v4640, %v5713
      %v5715 = vpop.f32.mrf.mxu0
      %v5716 = vadd.f32 %v4644, %v5715
      %5717 = vmatprep.mubr.bf16.mxu0 %v4440
      %5718 = vmatmul.mubr.bf16.gmra.mxu0 %v4439
      %v5719 = vpop.f32.mrf.mxu0
      %v5720 = vadd.f32 %v4640, %v5719
      %v5721 = vpop.f32.mrf.mxu0
      %v5722 = vadd.f32 %v4644, %v5721
      %v5723 = vpop.f32.mrf.mxu0
      %v5724 = vadd.f32 %v4640, %v5723
      %v5725 = vpop.f32.mrf.mxu0
      %v5726 = vadd.f32 %v4644, %v5725
      %5727 = vmatprep.mubr.bf16.mxu0 %v4444
      %5728 = vmatmul.mubr.bf16.gmra.mxu0 %v4443
      %v5729 = vpop.f32.mrf.mxu0
      %v5730 = vadd.f32 %v4640, %v5729
      %v5731 = vpop.f32.mrf.mxu0
      %v5732 = vadd.f32 %v4644, %v5731
      %v5733 = vpop.f32.mrf.mxu0
      %v5734 = vadd.f32 %v4640, %v5733
      %v5735 = vpop.f32.mrf.mxu0
      %v5736 = vadd.f32 %v4644, %v5735
      %5737 = vmatprep.mubr.bf16.mxu0 %v4448
      %5738 = vmatmul.mubr.bf16.gmra.mxu0 %v4447
      %v5739 = vpop.f32.mrf.mxu0
      %v5740 = vadd.f32 %v4640, %v5739
      %v5741 = vpop.f32.mrf.mxu0
      %v5742 = vadd.f32 %v4644, %v5741
      %v5743 = vpop.f32.mrf.mxu0
      %v5744 = vadd.f32 %v4640, %v5743
      %v5745 = vpop.f32.mrf.mxu0
      %v5746 = vadd.f32 %v4644, %v5745
      %5747 = vmatprep.mubr.bf16.mxu0 %v4452
      %5748 = vmatmul.mubr.bf16.gmra.mxu0 %v4451
      %v5749 = vpop.f32.mrf.mxu0
      %v5750 = vadd.f32 %v4640, %v5749
      %v5751 = vpop.f32.mrf.mxu0
      %v5752 = vadd.f32 %v4644, %v5751
      %v5753 = vpop.f32.mrf.mxu0
      %v5754 = vadd.f32 %v4640, %v5753
      %v5755 = vpop.f32.mrf.mxu0
      %v5756 = vadd.f32 %v4644, %v5755
      %5757 = vmatprep.mubr.bf16.mxu0 %v4456
      %5758 = vmatmul.mubr.bf16.gmra.mxu0 %v4455
      %v5759 = vpop.f32.mrf.mxu0
      %v5760 = vadd.f32 %v4640, %v5759
      %v5761 = vpop.f32.mrf.mxu0
      %v5762 = vadd.f32 %v4644, %v5761
      %v5763 = vpop.f32.mrf.mxu0
      %v5764 = vadd.f32 %v4640, %v5763
      %v5765 = vpop.f32.mrf.mxu0
      %v5766 = vadd.f32 %v4644, %v5765
      %5767 = vmatprep.mubr.bf16.mxu0 %v4460
      %5768 = vmatmul.mubr.bf16.gmra.mxu0 %v4459
      %v5769 = vpop.f32.mrf.mxu0
      %v5770 = vadd.f32 %v4640, %v5769
      %v5771 = vpop.f32.mrf.mxu0
      %v5772 = vadd.f32 %v4644, %v5771
      %v5773 = vpop.f32.mrf.mxu0
      %v5774 = vadd.f32 %v4640, %v5773
      %v5775 = vpop.f32.mrf.mxu0
      %v5776 = vadd.f32 %v4644, %v5775
      %5777 = vmatprep.mubr.bf16.mxu0 %v4464
      %5778 = vmatmul.mubr.bf16.gmra.mxu0 %v4463
      %v5779 = vpop.f32.mrf.mxu0
      %v5780 = vadd.f32 %v4640, %v5779
      %v5781 = vpop.f32.mrf.mxu0
      %v5782 = vadd.f32 %v4644, %v5781
      %v5783 = vpop.f32.mrf.mxu0
      %v5784 = vadd.f32 %v4640, %v5783
      %v5785 = vpop.f32.mrf.mxu0
      %v5786 = vadd.f32 %v4644, %v5785
      %5787 = vmatprep.mubr.bf16.mxu0 %v4468
      %5788 = vmatmul.mubr.bf16.gmra.mxu0 %v4467
      %v5789 = vpop.f32.mrf.mxu0
      %v5790 = vadd.f32 %v4640, %v5789
      %v5791 = vpop.f32.mrf.mxu0
      %v5792 = vadd.f32 %v4644, %v5791
      %v5793 = vpop.f32.mrf.mxu0
      %v5794 = vadd.f32 %v4640, %v5793
      %v5795 = vpop.f32.mrf.mxu0
      %v5796 = vadd.f32 %v4644, %v5795
      %5797 = vmatprep.mubr.bf16.mxu0 %v4472
      %5798 = vmatmul.mubr.bf16.gmra.mxu0 %v4471
      %v5799 = vpop.f32.mrf.mxu0
      %v5800 = vadd.f32 %v4640, %v5799
      %v5801 = vpop.f32.mrf.mxu0
      %v5802 = vadd.f32 %v4644, %v5801
      %v5803 = vpop.f32.mrf.mxu0
      %v5804 = vadd.f32 %v4640, %v5803
      %v5805 = vpop.f32.mrf.mxu0
      %v5806 = vadd.f32 %v4644, %v5805
      %5807 = vmatprep.mubr.bf16.mxu0 %v4476
      %5808 = vmatmul.mubr.bf16.gmra.mxu0 %v4475
      %v5809 = vpop.f32.mrf.mxu0
      %v5810 = vadd.f32 %v4640, %v5809
      %v5811 = vpop.f32.mrf.mxu0
      %v5812 = vadd.f32 %v4644, %v5811
      %v5813 = vpop.f32.mrf.mxu0
      %v5814 = vadd.f32 %v4640, %v5813
      %v5815 = vpop.f32.mrf.mxu0
      %v5816 = vadd.f32 %v4644, %v5815
      %5817 = vmatprep.mubr.bf16.mxu0 %v4480
      %5818 = vmatmul.mubr.bf16.gmra.mxu0 %v4479
      %v5819 = vpop.f32.mrf.mxu0
      %v5820 = vadd.f32 %v4640, %v5819
      %v5821 = vpop.f32.mrf.mxu0
      %v5822 = vadd.f32 %v4644, %v5821
      %v5823 = vpop.f32.mrf.mxu0
      %v5824 = vadd.f32 %v4640, %v5823
      %v5825 = vpop.f32.mrf.mxu0
      %v5826 = vadd.f32 %v4644, %v5825
      %5827 = vmatprep.mubr.bf16.mxu0 %v4484
      %5828 = vmatmul.mubr.bf16.gmra.mxu0 %v4483
      %v5829 = vpop.f32.mrf.mxu0
      %v5830 = vadd.f32 %v4640, %v5829
      %v5831 = vpop.f32.mrf.mxu0
      %v5832 = vadd.f32 %v4644, %v5831
      %v5833 = vpop.f32.mrf.mxu0
      %v5834 = vadd.f32 %v4640, %v5833
      %v5835 = vpop.f32.mrf.mxu0
      %v5836 = vadd.f32 %v4644, %v5835
      %5837 = vmatprep.mubr.bf16.mxu0 %v4488
      %5838 = vmatmul.mubr.bf16.gmra.mxu0 %v4487
      %v5839 = vpop.f32.mrf.mxu0
      %v5840 = vadd.f32 %v4640, %v5839
      %v5841 = vpop.f32.mrf.mxu0
      %v5842 = vadd.f32 %v4644, %v5841
      %v5843 = vpop.f32.mrf.mxu0
      %v5844 = vadd.f32 %v4640, %v5843
      %v5845 = vpop.f32.mrf.mxu0
      %v5846 = vadd.f32 %v4644, %v5845
      %5847 = vmatprep.mubr.bf16.mxu0 %v4492
      %5848 = vmatmul.mubr.bf16.gmra.mxu0 %v4491
      %v5849 = vpop.f32.mrf.mxu0
      %v5850 = vadd.f32 %v4640, %v5849
      %v5851 = vpop.f32.mrf.mxu0
      %v5852 = vadd.f32 %v4644, %v5851
      %v5853 = vpop.f32.mrf.mxu0
      %v5854 = vadd.f32 %v4640, %v5853
      %v5855 = vpop.f32.mrf.mxu0
      %v5856 = vadd.f32 %v4644, %v5855
      %5857 = vmatprep.mubr.bf16.mxu0 %v4496
      %5858 = vmatmul.mubr.bf16.gmra.mxu0 %v4495
      %v5859 = vpop.f32.mrf.mxu0
      %v5860 = vadd.f32 %v4640, %v5859
      %v5861 = vpop.f32.mrf.mxu0
      %v5862 = vadd.f32 %v4644, %v5861
      %v5863 = vpop.f32.mrf.mxu0
      %v5864 = vadd.f32 %v4640, %v5863
      %v5865 = vpop.f32.mrf.mxu0
      %v5866 = vadd.f32 %v4644, %v5865
      %5867 = vdwg.mxu0
      %5868 = vmatprep.subr.bf16.mxu0 %v5128
      %5869 = vmatpush1.bf16.xpose.msra.mxu0 %v5127
      %5870 = vmatprep.subr.bf16.mxu0 %v5124
      %5871 = vmatpush1.bf16.xpose.msra.mxu0 %v5123
      %5872 = vmatprep.subr.bf16.mxu0 %v5120
      %5873 = vmatpush1.bf16.xpose.msra.mxu0 %v5119
      %5874 = vmatprep.subr.bf16.mxu0 %v5116
      %5875 = vmatpush1.bf16.xpose.msra.mxu0 %v5115
      %5876 = vmatprep.subr.bf16.mxu0 %v5112
      %5877 = vmatpush1.bf16.xpose.msra.mxu0 %v5111
      %5878 = vmatprep.subr.bf16.mxu0 %v5108
      %5879 = vmatpush1.bf16.xpose.msra.mxu0 %v5107
      %5880 = vmatprep.subr.bf16.mxu0 %v5104
      %5881 = vmatpush1.bf16.xpose.msra.mxu0 %v5103
      %5882 = vmatprep.subr.bf16.mxu0 %v5100
      %5883 = vmatpush1.bf16.xpose.msra.mxu0 %v5099
      %5884 = vmatprep.subr.bf16.mxu0 %v5160
      %5885 = vmatpush2.bf16.xpose.msra.mxu0 %v5159
      %5886 = vmatprep.subr.bf16.mxu0 %v5156
      %5887 = vmatpush2.bf16.xpose.msra.mxu0 %v5155
      %5888 = vmatprep.subr.bf16.mxu0 %v5152
      %5889 = vmatpush2.bf16.xpose.msra.mxu0 %v5151
      %5890 = vmatprep.subr.bf16.mxu0 %v5148
      %5891 = vmatpush2.bf16.xpose.msra.mxu0 %v5147
      %5892 = vmatprep.subr.bf16.mxu0 %v5144
      %5893 = vmatpush2.bf16.xpose.msra.mxu0 %v5143
      %5894 = vmatprep.subr.bf16.mxu0 %v5140
      %5895 = vmatpush2.bf16.xpose.msra.mxu0 %v5139
      %5896 = vmatprep.subr.bf16.mxu0 %v5136
      %5897 = vmatpush2.bf16.xpose.msra.mxu0 %v5135
      %5898 = vmatprep.subr.bf16.mxu0 %v5132
      %5899 = vmatpush2.bf16.xpose.msra.mxu0 %v5131
      %5900 = vmatprep.mubr.bf16.mxu0 %v4438
      %5901 = vmatmul.mubr.bf16.gmra.mxu0 %v4437
      %v5902 = vpop.f32.mrf.mxu0
      %v5903 = vadd.f32 %v5710, %v5902
      %v5904 = vpop.f32.mrf.mxu0
      %v5905 = vadd.f32 %v5712, %v5904
      %v5906 = vpop.f32.mrf.mxu0
      %v5907 = vadd.f32 %v5714, %v5906
      %v5908 = vpop.f32.mrf.mxu0
      %v5909 = vadd.f32 %v5716, %v5908
      %5910 = vmatprep.mubr.bf16.mxu0 %v4442
      %5911 = vmatmul.mubr.bf16.gmra.mxu0 %v4441
      %v5912 = vpop.f32.mrf.mxu0
      %v5913 = vadd.f32 %v5720, %v5912
      %v5914 = vpop.f32.mrf.mxu0
      %v5915 = vadd.f32 %v5722, %v5914
      %v5916 = vpop.f32.mrf.mxu0
      %v5917 = vadd.f32 %v5724, %v5916
      %v5918 = vpop.f32.mrf.mxu0
      %v5919 = vadd.f32 %v5726, %v5918
      %5920 = vmatprep.mubr.bf16.mxu0 %v4446
      %5921 = vmatmul.mubr.bf16.gmra.mxu0 %v4445
      %v5922 = vpop.f32.mrf.mxu0
      %v5923 = vadd.f32 %v5730, %v5922
      %v5924 = vpop.f32.mrf.mxu0
      %v5925 = vadd.f32 %v5732, %v5924
      %v5926 = vpop.f32.mrf.mxu0
      %v5927 = vadd.f32 %v5734, %v5926
      %v5928 = vpop.f32.mrf.mxu0
      %v5929 = vadd.f32 %v5736, %v5928
      %5930 = vmatprep.mubr.bf16.mxu0 %v4450
      %5931 = vmatmul.mubr.bf16.gmra.mxu0 %v4449
      %v5932 = vpop.f32.mrf.mxu0
      %v5933 = vadd.f32 %v5740, %v5932
      %v5934 = vpop.f32.mrf.mxu0
      %v5935 = vadd.f32 %v5742, %v5934
      %v5936 = vpop.f32.mrf.mxu0
      %v5937 = vadd.f32 %v5744, %v5936
      %v5938 = vpop.f32.mrf.mxu0
      %v5939 = vadd.f32 %v5746, %v5938
      %5940 = vmatprep.mubr.bf16.mxu0 %v4454
      %5941 = vmatmul.mubr.bf16.gmra.mxu0 %v4453
      %v5942 = vpop.f32.mrf.mxu0
      %v5943 = vadd.f32 %v5750, %v5942
      %v5944 = vpop.f32.mrf.mxu0
      %v5945 = vadd.f32 %v5752, %v5944
      %v5946 = vpop.f32.mrf.mxu0
      %v5947 = vadd.f32 %v5754, %v5946
      %v5948 = vpop.f32.mrf.mxu0
      %v5949 = vadd.f32 %v5756, %v5948
      %5950 = vmatprep.mubr.bf16.mxu0 %v4458
      %5951 = vmatmul.mubr.bf16.gmra.mxu0 %v4457
      %v5952 = vpop.f32.mrf.mxu0
      %v5953 = vadd.f32 %v5760, %v5952
      %v5954 = vpop.f32.mrf.mxu0
      %v5955 = vadd.f32 %v5762, %v5954
      %v5956 = vpop.f32.mrf.mxu0
      %v5957 = vadd.f32 %v5764, %v5956
      %v5958 = vpop.f32.mrf.mxu0
      %v5959 = vadd.f32 %v5766, %v5958
      %5960 = vmatprep.mubr.bf16.mxu0 %v4462
      %5961 = vmatmul.mubr.bf16.gmra.mxu0 %v4461
      %v5962 = vpop.f32.mrf.mxu0
      %v5963 = vadd.f32 %v5770, %v5962
      %v5964 = vpop.f32.mrf.mxu0
      %v5965 = vadd.f32 %v5772, %v5964
      %v5966 = vpop.f32.mrf.mxu0
      %v5967 = vadd.f32 %v5774, %v5966
      %v5968 = vpop.f32.mrf.mxu0
      %v5969 = vadd.f32 %v5776, %v5968
      %5970 = vmatprep.mubr.bf16.mxu0 %v4466
      %5971 = vmatmul.mubr.bf16.gmra.mxu0 %v4465
      %v5972 = vpop.f32.mrf.mxu0
      %v5973 = vadd.f32 %v5780, %v5972
      %v5974 = vpop.f32.mrf.mxu0
      %v5975 = vadd.f32 %v5782, %v5974
      %v5976 = vpop.f32.mrf.mxu0
      %v5977 = vadd.f32 %v5784, %v5976
      %v5978 = vpop.f32.mrf.mxu0
      %v5979 = vadd.f32 %v5786, %v5978
      %5980 = vmatprep.mubr.bf16.mxu0 %v4470
      %5981 = vmatmul.mubr.bf16.gmra.mxu0 %v4469
      %v5982 = vpop.f32.mrf.mxu0
      %v5983 = vadd.f32 %v5790, %v5982
      %v5984 = vpop.f32.mrf.mxu0
      %v5985 = vadd.f32 %v5792, %v5984
      %v5986 = vpop.f32.mrf.mxu0
      %v5987 = vadd.f32 %v5794, %v5986
      %v5988 = vpop.f32.mrf.mxu0
      %v5989 = vadd.f32 %v5796, %v5988
      %5990 = vmatprep.mubr.bf16.mxu0 %v4474
      %5991 = vmatmul.mubr.bf16.gmra.mxu0 %v4473
      %v5992 = vpop.f32.mrf.mxu0
      %v5993 = vadd.f32 %v5800, %v5992
      %v5994 = vpop.f32.mrf.mxu0
      %v5995 = vadd.f32 %v5802, %v5994
      %v5996 = vpop.f32.mrf.mxu0
      %v5997 = vadd.f32 %v5804, %v5996
      %v5998 = vpop.f32.mrf.mxu0
      %v5999 = vadd.f32 %v5806, %v5998
      %6000 = vmatprep.mubr.bf16.mxu0 %v4478
      %6001 = vmatmul.mubr.bf16.gmra.mxu0 %v4477
      %v6002 = vpop.f32.mrf.mxu0
      %v6003 = vadd.f32 %v5810, %v6002
      %v6004 = vpop.f32.mrf.mxu0
      %v6005 = vadd.f32 %v5812, %v6004
      %v6006 = vpop.f32.mrf.mxu0
      %v6007 = vadd.f32 %v5814, %v6006
      %v6008 = vpop.f32.mrf.mxu0
      %v6009 = vadd.f32 %v5816, %v6008
      %6010 = vmatprep.mubr.bf16.mxu0 %v4482
      %6011 = vmatmul.mubr.bf16.gmra.mxu0 %v4481
      %v6012 = vpop.f32.mrf.mxu0
      %v6013 = vadd.f32 %v5820, %v6012
      %v6014 = vpop.f32.mrf.mxu0
      %v6015 = vadd.f32 %v5822, %v6014
      %v6016 = vpop.f32.mrf.mxu0
      %v6017 = vadd.f32 %v5824, %v6016
      %v6018 = vpop.f32.mrf.mxu0
      %v6019 = vadd.f32 %v5826, %v6018
      %6020 = vmatprep.mubr.bf16.mxu0 %v4486
      %6021 = vmatmul.mubr.bf16.gmra.mxu0 %v4485
      %v6022 = vpop.f32.mrf.mxu0
      %v6023 = vadd.f32 %v5830, %v6022
      %v6024 = vpop.f32.mrf.mxu0
      %v6025 = vadd.f32 %v5832, %v6024
      %v6026 = vpop.f32.mrf.mxu0
      %v6027 = vadd.f32 %v5834, %v6026
      %v6028 = vpop.f32.mrf.mxu0
      %v6029 = vadd.f32 %v5836, %v6028
      %6030 = vmatprep.mubr.bf16.mxu0 %v4490
      %6031 = vmatmul.mubr.bf16.gmra.mxu0 %v4489
      %v6032 = vpop.f32.mrf.mxu0
      %v6033 = vadd.f32 %v5840, %v6032
      %v6034 = vpop.f32.mrf.mxu0
      %v6035 = vadd.f32 %v5842, %v6034
      %v6036 = vpop.f32.mrf.mxu0
      %v6037 = vadd.f32 %v5844, %v6036
      %v6038 = vpop.f32.mrf.mxu0
      %v6039 = vadd.f32 %v5846, %v6038
      %6040 = vmatprep.mubr.bf16.mxu0 %v4494
      %6041 = vmatmul.mubr.bf16.gmra.mxu0 %v4493
      %v6042 = vpop.f32.mrf.mxu0
      %v6043 = vadd.f32 %v5850, %v6042
      %v6044 = vpop.f32.mrf.mxu0
      %v6045 = vadd.f32 %v5852, %v6044
      %v6046 = vpop.f32.mrf.mxu0
      %v6047 = vadd.f32 %v5854, %v6046
      %v6048 = vpop.f32.mrf.mxu0
      %v6049 = vadd.f32 %v5856, %v6048
      %6050 = vmatprep.mubr.bf16.mxu0 %v4498
      %6051 = vmatmul.mubr.bf16.gmra.mxu0 %v4497
      %v6052 = vpop.f32.mrf.mxu0
      %v6053 = vadd.f32 %v5860, %v6052
      %v6054 = vpop.f32.mrf.mxu0
      %v6055 = vadd.f32 %v5862, %v6054
      %v6056 = vpop.f32.mrf.mxu0
      %v6057 = vadd.f32 %v5864, %v6056
      %v6058 = vpop.f32.mrf.mxu0
      %v6059 = vadd.f32 %v5866, %v6058
      %6060 = vdwg.mxu0
      %vm6061 = vcmp.gt.f32.partialorder %v5517, 0.0
      %vm6062 = vcmp.gt.f32.partialorder %v5519, 0.0
      %vm6063 = vcmp.gt.f32.partialorder %v5903, 0.0
      %vm6064 = vcmp.gt.f32.partialorder %v5905, 0.0
      %vm6065 = vcmp.gt.f32.partialorder %v5521, 0.0
      %vm6066 = vcmp.gt.f32.partialorder %v5523, 0.0
      %vm6067 = vcmp.gt.f32.partialorder %v5907, 0.0
      %vm6068 = vcmp.gt.f32.partialorder %v5909, 0.0
      %vm6069 = vcmp.gt.f32.partialorder %v5527, 0.0
      %vm6070 = vcmp.gt.f32.partialorder %v5529, 0.0
      %vm6071 = vcmp.gt.f32.partialorder %v5913, 0.0
      %vm6072 = vcmp.gt.f32.partialorder %v5915, 0.0
      %vm6073 = vcmp.gt.f32.partialorder %v5531, 0.0
      %vm6074 = vcmp.gt.f32.partialorder %v5533, 0.0
      %vm6075 = vcmp.gt.f32.partialorder %v5917, 0.0
      %vm6076 = vcmp.gt.f32.partialorder %v5919, 0.0
      %vm6077 = vcmp.gt.f32.partialorder %v5537, 0.0
      %vm6078 = vcmp.gt.f32.partialorder %v5539, 0.0
      %vm6079 = vcmp.gt.f32.partialorder %v5923, 0.0
      %vm6080 = vcmp.gt.f32.partialorder %v5925, 0.0
      %vm6081 = vcmp.gt.f32.partialorder %v5541, 0.0
      %vm6082 = vcmp.gt.f32.partialorder %v5543, 0.0
      %vm6083 = vcmp.gt.f32.partialorder %v5927, 0.0
      %vm6084 = vcmp.gt.f32.partialorder %v5929, 0.0
      %vm6085 = vcmp.gt.f32.partialorder %v5547, 0.0
      %vm6086 = vcmp.gt.f32.partialorder %v5549, 0.0
      %vm6087 = vcmp.gt.f32.partialorder %v5933, 0.0
      %vm6088 = vcmp.gt.f32.partialorder %v5935, 0.0
      %vm6089 = vcmp.gt.f32.partialorder %v5551, 0.0
      %vm6090 = vcmp.gt.f32.partialorder %v5553, 0.0
      %vm6091 = vcmp.gt.f32.partialorder %v5937, 0.0
      %vm6092 = vcmp.gt.f32.partialorder %v5939, 0.0
      %vm6093 = vcmp.gt.f32.partialorder %v5557, 0.0
      %vm6094 = vcmp.gt.f32.partialorder %v5559, 0.0
      %vm6095 = vcmp.gt.f32.partialorder %v5943, 0.0
      %vm6096 = vcmp.gt.f32.partialorder %v5945, 0.0
      %vm6097 = vcmp.gt.f32.partialorder %v5561, 0.0
      %vm6098 = vcmp.gt.f32.partialorder %v5563, 0.0
      %vm6099 = vcmp.gt.f32.partialorder %v5947, 0.0
      %vm6100 = vcmp.gt.f32.partialorder %v5949, 0.0
      %vm6101 = vcmp.gt.f32.partialorder %v5567, 0.0
      %vm6102 = vcmp.gt.f32.partialorder %v5569, 0.0
      %vm6103 = vcmp.gt.f32.partialorder %v5953, 0.0
      %vm6104 = vcmp.gt.f32.partialorder %v5955, 0.0
      %vm6105 = vcmp.gt.f32.partialorder %v5571, 0.0
      %vm6106 = vcmp.gt.f32.partialorder %v5573, 0.0
      %vm6107 = vcmp.gt.f32.partialorder %v5957, 0.0
      %vm6108 = vcmp.gt.f32.partialorder %v5959, 0.0
      %vm6109 = vcmp.gt.f32.partialorder %v5577, 0.0
      %vm6110 = vcmp.gt.f32.partialorder %v5579, 0.0
      %vm6111 = vcmp.gt.f32.partialorder %v5963, 0.0
      %vm6112 = vcmp.gt.f32.partialorder %v5965, 0.0
      %vm6113 = vcmp.gt.f32.partialorder %v5581, 0.0
      %vm6114 = vcmp.gt.f32.partialorder %v5583, 0.0
      %vm6115 = vcmp.gt.f32.partialorder %v5967, 0.0
      %vm6116 = vcmp.gt.f32.partialorder %v5969, 0.0
      %vm6117 = vcmp.gt.f32.partialorder %v5587, 0.0
      %vm6118 = vcmp.gt.f32.partialorder %v5589, 0.0
      %vm6119 = vcmp.gt.f32.partialorder %v5973, 0.0
      %vm6120 = vcmp.gt.f32.partialorder %v5975, 0.0
      %vm6121 = vcmp.gt.f32.partialorder %v5591, 0.0
      %vm6122 = vcmp.gt.f32.partialorder %v5593, 0.0
      %vm6123 = vcmp.gt.f32.partialorder %v5977, 0.0
      %vm6124 = vcmp.gt.f32.partialorder %v5979, 0.0
      %vm6125 = vcmp.gt.f32.partialorder %v5597, 0.0
      %vm6126 = vcmp.gt.f32.partialorder %v5599, 0.0
      %vm6127 = vcmp.gt.f32.partialorder %v5983, 0.0
      %vm6128 = vcmp.gt.f32.partialorder %v5985, 0.0
      %vm6129 = vcmp.gt.f32.partialorder %v5601, 0.0
      %vm6130 = vcmp.gt.f32.partialorder %v5603, 0.0
      %vm6131 = vcmp.gt.f32.partialorder %v5987, 0.0
      %vm6132 = vcmp.gt.f32.partialorder %v5989, 0.0
      %vm6133 = vcmp.gt.f32.partialorder %v5607, 0.0
      %vm6134 = vcmp.gt.f32.partialorder %v5609, 0.0
      %vm6135 = vcmp.gt.f32.partialorder %v5993, 0.0
      %vm6136 = vcmp.gt.f32.partialorder %v5995, 0.0
      %vm6137 = vcmp.gt.f32.partialorder %v5611, 0.0
      %vm6138 = vcmp.gt.f32.partialorder %v5613, 0.0
      %vm6139 = vcmp.gt.f32.partialorder %v5997, 0.0
      %vm6140 = vcmp.gt.f32.partialorder %v5999, 0.0
      %vm6141 = vcmp.gt.f32.partialorder %v5617, 0.0
      %vm6142 = vcmp.gt.f32.partialorder %v5619, 0.0
      %vm6143 = vcmp.gt.f32.partialorder %v6003, 0.0
      %vm6144 = vcmp.gt.f32.partialorder %v6005, 0.0
      %vm6145 = vcmp.gt.f32.partialorder %v5621, 0.0
      %vm6146 = vcmp.gt.f32.partialorder %v5623, 0.0
      %vm6147 = vcmp.gt.f32.partialorder %v6007, 0.0
      %vm6148 = vcmp.gt.f32.partialorder %v6009, 0.0
      %vm6149 = vcmp.gt.f32.partialorder %v5627, 0.0
      %vm6150 = vcmp.gt.f32.partialorder %v5629, 0.0
      %vm6151 = vcmp.gt.f32.partialorder %v6013, 0.0
      %vm6152 = vcmp.gt.f32.partialorder %v6015, 0.0
      %vm6153 = vcmp.gt.f32.partialorder %v5631, 0.0
      %vm6154 = vcmp.gt.f32.partialorder %v5633, 0.0
      %vm6155 = vcmp.gt.f32.partialorder %v6017, 0.0
      %vm6156 = vcmp.gt.f32.partialorder %v6019, 0.0
      %vm6157 = vcmp.gt.f32.partialorder %v5637, 0.0
      %vm6158 = vcmp.gt.f32.partialorder %v5639, 0.0
      %vm6159 = vcmp.gt.f32.partialorder %v6023, 0.0
      %vm6160 = vcmp.gt.f32.partialorder %v6025, 0.0
      %vm6161 = vcmp.gt.f32.partialorder %v5641, 0.0
      %vm6162 = vcmp.gt.f32.partialorder %v5643, 0.0
      %vm6163 = vcmp.gt.f32.partialorder %v6027, 0.0
      %vm6164 = vcmp.gt.f32.partialorder %v6029, 0.0
      %vm6165 = vcmp.gt.f32.partialorder %v5647, 0.0
      %vm6166 = vcmp.gt.f32.partialorder %v5649, 0.0
      %vm6167 = vcmp.gt.f32.partialorder %v6033, 0.0
      %vm6168 = vcmp.gt.f32.partialorder %v6035, 0.0
      %vm6169 = vcmp.gt.f32.partialorder %v5651, 0.0
      %vm6170 = vcmp.gt.f32.partialorder %v5653, 0.0
      %vm6171 = vcmp.gt.f32.partialorder %v6037, 0.0
      %vm6172 = vcmp.gt.f32.partialorder %v6039, 0.0
      %vm6173 = vcmp.gt.f32.partialorder %v5657, 0.0
      %vm6174 = vcmp.gt.f32.partialorder %v5659, 0.0
      %vm6175 = vcmp.gt.f32.partialorder %v6043, 0.0
      %vm6176 = vcmp.gt.f32.partialorder %v6045, 0.0
      %vm6177 = vcmp.gt.f32.partialorder %v5661, 0.0
      %vm6178 = vcmp.gt.f32.partialorder %v5663, 0.0
      %vm6179 = vcmp.gt.f32.partialorder %v6047, 0.0
      %vm6180 = vcmp.gt.f32.partialorder %v6049, 0.0
      %vm6181 = vcmp.gt.f32.partialorder %v5667, 0.0
      %vm6182 = vcmp.gt.f32.partialorder %v5669, 0.0
      %vm6183 = vcmp.gt.f32.partialorder %v6053, 0.0
      %vm6184 = vcmp.gt.f32.partialorder %v6055, 0.0
      %vm6185 = vcmp.gt.f32.partialorder %v5671, 0.0
      %vm6186 = vcmp.gt.f32.partialorder %v5673, 0.0
      %vm6187 = vcmp.gt.f32.partialorder %v6057, 0.0
      %vm6188 = vcmp.gt.f32.partialorder %v6059, 0.0
      %v6189 = vmul.f32 %v5517, 0.2
      %v6190 = vmul.f32 %v5519, 0.2
      %v6191 = vmul.f32 %v5903, 0.2
      %v6192 = vmul.f32 %v5905, 0.2
      %v6193 = vmul.f32 %v5521, 0.2
      %v6194 = vmul.f32 %v5523, 0.2
      %v6195 = vmul.f32 %v5907, 0.2
      %v6196 = vmul.f32 %v5909, 0.2
      %v6197 = vmul.f32 %v5527, 0.2
      %v6198 = vmul.f32 %v5529, 0.2
      %v6199 = vmul.f32 %v5913, 0.2
      %v6200 = vmul.f32 %v5915, 0.2
      %v6201 = vmul.f32 %v5531, 0.2
      %v6202 = vmul.f32 %v5533, 0.2
      %v6203 = vmul.f32 %v5917, 0.2
      %v6204 = vmul.f32 %v5919, 0.2
      %v6205 = vmul.f32 %v5537, 0.2
      %v6206 = vmul.f32 %v5539, 0.2
      %v6207 = vmul.f32 %v5923, 0.2
      %v6208 = vmul.f32 %v5925, 0.2
      %v6209 = vmul.f32 %v5541, 0.2
      %v6210 = vmul.f32 %v5543, 0.2
      %v6211 = vmul.f32 %v5927, 0.2
      %v6212 = vmul.f32 %v5929, 0.2
      %v6213 = vmul.f32 %v5547, 0.2
      %v6214 = vmul.f32 %v5549, 0.2
      %v6215 = vmul.f32 %v5933, 0.2
      %v6216 = vmul.f32 %v5935, 0.2
      %v6217 = vmul.f32 %v5551, 0.2
      %v6218 = vmul.f32 %v5553, 0.2
      %v6219 = vmul.f32 %v5937, 0.2
      %v6220 = vmul.f32 %v5939, 0.2
      %v6221 = vmul.f32 %v5557, 0.2
      %v6222 = vmul.f32 %v5559, 0.2
      %v6223 = vmul.f32 %v5943, 0.2
      %v6224 = vmul.f32 %v5945, 0.2
      %v6225 = vmul.f32 %v5561, 0.2
      %v6226 = vmul.f32 %v5563, 0.2
      %v6227 = vmul.f32 %v5947, 0.2
      %v6228 = vmul.f32 %v5949, 0.2
      %v6229 = vmul.f32 %v5567, 0.2
      %v6230 = vmul.f32 %v5569, 0.2
      %v6231 = vmul.f32 %v5953, 0.2
      %v6232 = vmul.f32 %v5955, 0.2
      %v6233 = vmul.f32 %v5571, 0.2
      %v6234 = vmul.f32 %v5573, 0.2
      %v6235 = vmul.f32 %v5957, 0.2
      %v6236 = vmul.f32 %v5959, 0.2
      %v6237 = vmul.f32 %v5577, 0.2
      %v6238 = vmul.f32 %v5579, 0.2
      %v6239 = vmul.f32 %v5963, 0.2
      %v6240 = vmul.f32 %v5965, 0.2
      %v6241 = vmul.f32 %v5581, 0.2
      %v6242 = vmul.f32 %v5583, 0.2
      %v6243 = vmul.f32 %v5967, 0.2
      %v6244 = vmul.f32 %v5969, 0.2
      %v6245 = vmul.f32 %v5587, 0.2
      %v6246 = vmul.f32 %v5589, 0.2
      %v6247 = vmul.f32 %v5973, 0.2
      %v6248 = vmul.f32 %v5975, 0.2
      %v6249 = vmul.f32 %v5591, 0.2
      %v6250 = vmul.f32 %v5593, 0.2
      %v6251 = vmul.f32 %v5977, 0.2
      %v6252 = vmul.f32 %v5979, 0.2
      %v6253 = vmul.f32 %v5597, 0.2
      %v6254 = vmul.f32 %v5599, 0.2
      %v6255 = vmul.f32 %v5983, 0.2
      %v6256 = vmul.f32 %v5985, 0.2
      %v6257 = vmul.f32 %v5601, 0.2
      %v6258 = vmul.f32 %v5603, 0.2
      %v6259 = vmul.f32 %v5987, 0.2
      %v6260 = vmul.f32 %v5989, 0.2
      %v6261 = vmul.f32 %v5607, 0.2
      %v6262 = vmul.f32 %v5609, 0.2
      %v6263 = vmul.f32 %v5993, 0.2
      %v6264 = vmul.f32 %v5995, 0.2
      %v6265 = vmul.f32 %v5611, 0.2
      %v6266 = vmul.f32 %v5613, 0.2
      %v6267 = vmul.f32 %v5997, 0.2
      %v6268 = vmul.f32 %v5999, 0.2
      %v6269 = vmul.f32 %v5617, 0.2
      %v6270 = vmul.f32 %v5619, 0.2
      %v6271 = vmul.f32 %v6003, 0.2
      %v6272 = vmul.f32 %v6005, 0.2
      %v6273 = vmul.f32 %v5621, 0.2
      %v6274 = vmul.f32 %v5623, 0.2
      %v6275 = vmul.f32 %v6007, 0.2
      %v6276 = vmul.f32 %v6009, 0.2
      %v6277 = vmul.f32 %v5627, 0.2
      %v6278 = vmul.f32 %v5629, 0.2
      %v6279 = vmul.f32 %v6013, 0.2
      %v6280 = vmul.f32 %v6015, 0.2
      %v6281 = vmul.f32 %v5631, 0.2
      %v6282 = vmul.f32 %v5633, 0.2
      %v6283 = vmul.f32 %v6017, 0.2
      %v6284 = vmul.f32 %v6019, 0.2
      %v6285 = vmul.f32 %v5637, 0.2
      %v6286 = vmul.f32 %v5639, 0.2
      %v6287 = vmul.f32 %v6023, 0.2
      %v6288 = vmul.f32 %v6025, 0.2
      %v6289 = vmul.f32 %v5641, 0.2
      %v6290 = vmul.f32 %v5643, 0.2
      %v6291 = vmul.f32 %v6027, 0.2
      %v6292 = vmul.f32 %v6029, 0.2
      %v6293 = vmul.f32 %v5647, 0.2
      %v6294 = vmul.f32 %v5649, 0.2
      %v6295 = vmul.f32 %v6033, 0.2
      %v6296 = vmul.f32 %v6035, 0.2
      %v6297 = vmul.f32 %v5651, 0.2
      %v6298 = vmul.f32 %v5653, 0.2
      %v6299 = vmul.f32 %v6037, 0.2
      %v6300 = vmul.f32 %v6039, 0.2
      %v6301 = vmul.f32 %v5657, 0.2
      %v6302 = vmul.f32 %v5659, 0.2
      %v6303 = vmul.f32 %v6043, 0.2
      %v6304 = vmul.f32 %v6045, 0.2
      %v6305 = vmul.f32 %v5661, 0.2
      %v6306 = vmul.f32 %v5663, 0.2
      %v6307 = vmul.f32 %v6047, 0.2
      %v6308 = vmul.f32 %v6049, 0.2
      %v6309 = vmul.f32 %v5667, 0.2
      %v6310 = vmul.f32 %v5669, 0.2
      %v6311 = vmul.f32 %v6053, 0.2
      %v6312 = vmul.f32 %v6055, 0.2
      %v6313 = vmul.f32 %v5671, 0.2
      %v6314 = vmul.f32 %v5673, 0.2
      %v6315 = vmul.f32 %v6057, 0.2
      %v6316 = vmul.f32 %v6059, 0.2
      %v6317 = vsel %vm6061, %v5517, %v6189
      %v6318 = vsel %vm6062, %v5519, %v6190
      %v6319 = vsel %vm6063, %v5903, %v6191
      %v6320 = vsel %vm6064, %v5905, %v6192
      %v6321 = vsel %vm6065, %v5521, %v6193
      %v6322 = vsel %vm6066, %v5523, %v6194
      %v6323 = vsel %vm6067, %v5907, %v6195
      %v6324 = vsel %vm6068, %v5909, %v6196
      %v6325 = vsel %vm6069, %v5527, %v6197
      %v6326 = vsel %vm6070, %v5529, %v6198
      %v6327 = vsel %vm6071, %v5913, %v6199
      %v6328 = vsel %vm6072, %v5915, %v6200
      %v6329 = vsel %vm6073, %v5531, %v6201
      %v6330 = vsel %vm6074, %v5533, %v6202
      %v6331 = vsel %vm6075, %v5917, %v6203
      %v6332 = vsel %vm6076, %v5919, %v6204
      %v6333 = vsel %vm6077, %v5537, %v6205
      %v6334 = vsel %vm6078, %v5539, %v6206
      %v6335 = vsel %vm6079, %v5923, %v6207
      %v6336 = vsel %vm6080, %v5925, %v6208
      %v6337 = vsel %vm6081, %v5541, %v6209
      %v6338 = vsel %vm6082, %v5543, %v6210
      %v6339 = vsel %vm6083, %v5927, %v6211
      %v6340 = vsel %vm6084, %v5929, %v6212
      %v6341 = vsel %vm6085, %v5547, %v6213
      %v6342 = vsel %vm6086, %v5549, %v6214
      %v6343 = vsel %vm6087, %v5933, %v6215
      %v6344 = vsel %vm6088, %v5935, %v6216
      %v6345 = vsel %vm6089, %v5551, %v6217
      %v6346 = vsel %vm6090, %v5553, %v6218
      %v6347 = vsel %vm6091, %v5937, %v6219
      %v6348 = vsel %vm6092, %v5939, %v6220
      %v6349 = vsel %vm6093, %v5557, %v6221
      %v6350 = vsel %vm6094, %v5559, %v6222
      %v6351 = vsel %vm6095, %v5943, %v6223
      %v6352 = vsel %vm6096, %v5945, %v6224
      %v6353 = vsel %vm6097, %v5561, %v6225
      %v6354 = vsel %vm6098, %v5563, %v6226
      %v6355 = vsel %vm6099, %v5947, %v6227
      %v6356 = vsel %vm6100, %v5949, %v6228
      %v6357 = vsel %vm6101, %v5567, %v6229
      %v6358 = vsel %vm6102, %v5569, %v6230
      %v6359 = vsel %vm6103, %v5953, %v6231
      %v6360 = vsel %vm6104, %v5955, %v6232
      %v6361 = vsel %vm6105, %v5571, %v6233
      %v6362 = vsel %vm6106, %v5573, %v6234
      %v6363 = vsel %vm6107, %v5957, %v6235
      %v6364 = vsel %vm6108, %v5959, %v6236
      %v6365 = vsel %vm6109, %v5577, %v6237
      %v6366 = vsel %vm6110, %v5579, %v6238
      %v6367 = vsel %vm6111, %v5963, %v6239
      %v6368 = vsel %vm6112, %v5965, %v6240
      %v6369 = vsel %vm6113, %v5581, %v6241
      %v6370 = vsel %vm6114, %v5583, %v6242
      %v6371 = vsel %vm6115, %v5967, %v6243
      %v6372 = vsel %vm6116, %v5969, %v6244
      %v6373 = vsel %vm6117, %v5587, %v6245
      %v6374 = vsel %vm6118, %v5589, %v6246
      %v6375 = vsel %vm6119, %v5973, %v6247
      %v6376 = vsel %vm6120, %v5975, %v6248
      %v6377 = vsel %vm6121, %v5591, %v6249
      %v6378 = vsel %vm6122, %v5593, %v6250
      %v6379 = vsel %vm6123, %v5977, %v6251
      %v6380 = vsel %vm6124, %v5979, %v6252
      %v6381 = vsel %vm6125, %v5597, %v6253
      %v6382 = vsel %vm6126, %v5599, %v6254
      %v6383 = vsel %vm6127, %v5983, %v6255
      %v6384 = vsel %vm6128, %v5985, %v6256
      %v6385 = vsel %vm6129, %v5601, %v6257
      %v6386 = vsel %vm6130, %v5603, %v6258
      %v6387 = vsel %vm6131, %v5987, %v6259
      %v6388 = vsel %vm6132, %v5989, %v6260
      %v6389 = vsel %vm6133, %v5607, %v6261
      %v6390 = vsel %vm6134, %v5609, %v6262
      %v6391 = vsel %vm6135, %v5993, %v6263
      %v6392 = vsel %vm6136, %v5995, %v6264
      %v6393 = vsel %vm6137, %v5611, %v6265
      %v6394 = vsel %vm6138, %v5613, %v6266
      %v6395 = vsel %vm6139, %v5997, %v6267
      %v6396 = vsel %vm6140, %v5999, %v6268
      %v6397 = vsel %vm6141, %v5617, %v6269
      %v6398 = vsel %vm6142, %v5619, %v6270
      %v6399 = vsel %vm6143, %v6003, %v6271
      %v6400 = vsel %vm6144, %v6005, %v6272
      %v6401 = vsel %vm6145, %v5621, %v6273
      %v6402 = vsel %vm6146, %v5623, %v6274
      %v6403 = vsel %vm6147, %v6007, %v6275
      %v6404 = vsel %vm6148, %v6009, %v6276
      %v6405 = vsel %vm6149, %v5627, %v6277
      %v6406 = vsel %vm6150, %v5629, %v6278
      %v6407 = vsel %vm6151, %v6013, %v6279
      %v6408 = vsel %vm6152, %v6015, %v6280
      %v6409 = vsel %vm6153, %v5631, %v6281
      %v6410 = vsel %vm6154, %v5633, %v6282
      %v6411 = vsel %vm6155, %v6017, %v6283
      %v6412 = vsel %vm6156, %v6019, %v6284
      %v6413 = vsel %vm6157, %v5637, %v6285
      %v6414 = vsel %vm6158, %v5639, %v6286
      %v6415 = vsel %vm6159, %v6023, %v6287
      %v6416 = vsel %vm6160, %v6025, %v6288
      %v6417 = vsel %vm6161, %v5641, %v6289
      %v6418 = vsel %vm6162, %v5643, %v6290
      %v6419 = vsel %vm6163, %v6027, %v6291
      %v6420 = vsel %vm6164, %v6029, %v6292
      %v6421 = vsel %vm6165, %v5647, %v6293
      %v6422 = vsel %vm6166, %v5649, %v6294
      %v6423 = vsel %vm6167, %v6033, %v6295
      %v6424 = vsel %vm6168, %v6035, %v6296
      %v6425 = vsel %vm6169, %v5651, %v6297
      %v6426 = vsel %vm6170, %v5653, %v6298
      %v6427 = vsel %vm6171, %v6037, %v6299
      %v6428 = vsel %vm6172, %v6039, %v6300
      %v6429 = vsel %vm6173, %v5657, %v6301
      %v6430 = vsel %vm6174, %v5659, %v6302
      %v6431 = vsel %vm6175, %v6043, %v6303
      %v6432 = vsel %vm6176, %v6045, %v6304
      %v6433 = vsel %vm6177, %v5661, %v6305
      %v6434 = vsel %vm6178, %v5663, %v6306
      %v6435 = vsel %vm6179, %v6047, %v6307
      %v6436 = vsel %vm6180, %v6049, %v6308
      %v6437 = vsel %vm6181, %v5667, %v6309
      %v6438 = vsel %vm6182, %v5669, %v6310
      %v6439 = vsel %vm6183, %v6053, %v6311
      %v6440 = vsel %vm6184, %v6055, %v6312
      %v6441 = vsel %vm6185, %v5671, %v6313
      %v6442 = vsel %vm6186, %v5673, %v6314
      %v6443 = vsel %vm6187, %v6057, %v6315
      %v6444 = vsel %vm6188, %v6059, %v6316
      %6445 = vst [vmem:[%s285] sm:$0xff] %v6317
      %6446 = vst [vmem:[%s285 + $0x8] sm:$0xff] %v6318
      %6447 = vst [vmem:[%s285 + $0x10] sm:$0xff] %v6319
      %6448 = vst [vmem:[%s285 + $0x18] sm:$0xff] %v6320
      %6449 = vst [vmem:[%s285 + $0x20] sm:$0xff] %v6321
      %6450 = vst [vmem:[%s285 + $0x28] sm:$0xff] %v6322
      %6451 = vst [vmem:[%s285 + $0x30] sm:$0xff] %v6323
      %6452 = vst [vmem:[%s285 + $0x38] sm:$0xff] %v6324
      %6453 = vst [vmem:[%s285 + $0x40] sm:$0xff] %v6325
      %6454 = vst [vmem:[%s285 + $0x48] sm:$0xff] %v6326
      %6455 = vst [vmem:[%s285 + $0x50] sm:$0xff] %v6327
      %6456 = vst [vmem:[%s285 + $0x58] sm:$0xff] %v6328
      %6457 = vst [vmem:[%s285 + $0x60] sm:$0xff] %v6329
      %6458 = vst [vmem:[%s285 + $0x68] sm:$0xff] %v6330
      %6459 = vst [vmem:[%s285 + $0x70] sm:$0xff] %v6331
      %6460 = vst [vmem:[%s285 + $0x78] sm:$0xff] %v6332
      %6461 = vst [vmem:[%s285 + $0x80] sm:$0xff] %v6333
      %6462 = vst [vmem:[%s285 + $0x88] sm:$0xff] %v6334
      %6463 = vst [vmem:[%s285 + $0x90] sm:$0xff] %v6335
      %6464 = vst [vmem:[%s285 + $0x98] sm:$0xff] %v6336
      %6465 = vst [vmem:[%s285 + $0xa0] sm:$0xff] %v6337
      %6466 = vst [vmem:[%s285 + $0xa8] sm:$0xff] %v6338
      %6467 = vst [vmem:[%s285 + $0xb0] sm:$0xff] %v6339
      %6468 = vst [vmem:[%s285 + $0xb8] sm:$0xff] %v6340
      %6469 = vst [vmem:[%s285 + $0xc0] sm:$0xff] %v6341
      %6470 = vst [vmem:[%s285 + $0xc8] sm:$0xff] %v6342
      %6471 = vst [vmem:[%s285 + $0xd0] sm:$0xff] %v6343
      %6472 = vst [vmem:[%s285 + $0xd8] sm:$0xff] %v6344
      %6473 = vst [vmem:[%s285 + $0xe0] sm:$0xff] %v6345
      %6474 = vst [vmem:[%s285 + $0xe8] sm:$0xff] %v6346
      %6475 = vst [vmem:[%s285 + $0xf0] sm:$0xff] %v6347
      %6476 = vst [vmem:[%s285 + $0xf8] sm:$0xff] %v6348
      %6477 = vst [vmem:[%s285 + $0x100] sm:$0xff] %v6349
      %6478 = vst [vmem:[%s285 + $0x108] sm:$0xff] %v6350
      %6479 = vst [vmem:[%s285 + $0x110] sm:$0xff] %v6351
      %6480 = vst [vmem:[%s285 + $0x118] sm:$0xff] %v6352
      %6481 = vst [vmem:[%s285 + $0x120] sm:$0xff] %v6353
      %6482 = vst [vmem:[%s285 + $0x128] sm:$0xff] %v6354
      %6483 = vst [vmem:[%s285 + $0x130] sm:$0xff] %v6355
      %6484 = vst [vmem:[%s285 + $0x138] sm:$0xff] %v6356
      %6485 = vst [vmem:[%s285 + $0x140] sm:$0xff] %v6357
      %6486 = vst [vmem:[%s285 + $0x148] sm:$0xff] %v6358
      %6487 = vst [vmem:[%s285 + $0x150] sm:$0xff] %v6359
      %6488 = vst [vmem:[%s285 + $0x158] sm:$0xff] %v6360
      %6489 = vst [vmem:[%s285 + $0x160] sm:$0xff] %v6361
      %6490 = vst [vmem:[%s285 + $0x168] sm:$0xff] %v6362
      %6491 = vst [vmem:[%s285 + $0x170] sm:$0xff] %v6363
      %6492 = vst [vmem:[%s285 + $0x178] sm:$0xff] %v6364
      %6493 = vst [vmem:[%s285 + $0x180] sm:$0xff] %v6365
      %6494 = vst [vmem:[%s285 + $0x188] sm:$0xff] %v6366
      %6495 = vst [vmem:[%s285 + $0x190] sm:$0xff] %v6367
      %6496 = vst [vmem:[%s285 + $0x198] sm:$0xff] %v6368
      %6497 = vst [vmem:[%s285 + $0x1a0] sm:$0xff] %v6369
      %6498 = vst [vmem:[%s285 + $0x1a8] sm:$0xff] %v6370
      %6499 = vst [vmem:[%s285 + $0x1b0] sm:$0xff] %v6371
      %6500 = vst [vmem:[%s285 + $0x1b8] sm:$0xff] %v6372
      %6501 = vst [vmem:[%s285 + $0x1c0] sm:$0xff] %v6373
      %6502 = vst [vmem:[%s285 + $0x1c8] sm:$0xff] %v6374
      %6503 = vst [vmem:[%s285 + $0x1d0] sm:$0xff] %v6375
      %6504 = vst [vmem:[%s285 + $0x1d8] sm:$0xff] %v6376
      %6505 = vst [vmem:[%s285 + $0x1e0] sm:$0xff] %v6377
      %6506 = vst [vmem:[%s285 + $0x1e8] sm:$0xff] %v6378
      %6507 = vst [vmem:[%s285 + $0x1f0] sm:$0xff] %v6379
      %6508 = vst [vmem:[%s285 + $0x1f8] sm:$0xff] %v6380
      %6509 = vst [vmem:[%s285 + $0x200] sm:$0xff] %v6381
      %6510 = vst [vmem:[%s285 + $0x208] sm:$0xff] %v6382
      %6511 = vst [vmem:[%s285 + $0x210] sm:$0xff] %v6383
      %6512 = vst [vmem:[%s285 + $0x218] sm:$0xff] %v6384
      %6513 = vst [vmem:[%s285 + $0x220] sm:$0xff] %v6385
      %6514 = vst [vmem:[%s285 + $0x228] sm:$0xff] %v6386
      %6515 = vst [vmem:[%s285 + $0x230] sm:$0xff] %v6387
      %6516 = vst [vmem:[%s285 + $0x238] sm:$0xff] %v6388
      %6517 = vst [vmem:[%s285 + $0x240] sm:$0xff] %v6389
      %6518 = vst [vmem:[%s285 + $0x248] sm:$0xff] %v6390
      %6519 = vst [vmem:[%s285 + $0x250] sm:$0xff] %v6391
      %6520 = vst [vmem:[%s285 + $0x258] sm:$0xff] %v6392
      %6521 = vst [vmem:[%s285 + $0x260] sm:$0xff] %v6393
      %6522 = vst [vmem:[%s285 + $0x268] sm:$0xff] %v6394
      %6523 = vst [vmem:[%s285 + $0x270] sm:$0xff] %v6395
      %6524 = vst [vmem:[%s285 + $0x278] sm:$0xff] %v6396
      %6525 = vst [vmem:[%s285 + $0x280] sm:$0xff] %v6397
      %6526 = vst [vmem:[%s285 + $0x288] sm:$0xff] %v6398
      %6527 = vst [vmem:[%s285 + $0x290] sm:$0xff] %v6399
      %6528 = vst [vmem:[%s285 + $0x298] sm:$0xff] %v6400
      %6529 = vst [vmem:[%s285 + $0x2a0] sm:$0xff] %v6401
      %6530 = vst [vmem:[%s285 + $0x2a8] sm:$0xff] %v6402
      %6531 = vst [vmem:[%s285 + $0x2b0] sm:$0xff] %v6403
      %6532 = vst [vmem:[%s285 + $0x2b8] sm:$0xff] %v6404
      %6533 = vst [vmem:[%s285 + $0x2c0] sm:$0xff] %v6405
      %6534 = vst [vmem:[%s285 + $0x2c8] sm:$0xff] %v6406
      %6535 = vst [vmem:[%s285 + $0x2d0] sm:$0xff] %v6407
      %6536 = vst [vmem:[%s285 + $0x2d8] sm:$0xff] %v6408
      %6537 = vst [vmem:[%s285 + $0x2e0] sm:$0xff] %v6409
      %6538 = vst [vmem:[%s285 + $0x2e8] sm:$0xff] %v6410
      %6539 = vst [vmem:[%s285 + $0x2f0] sm:$0xff] %v6411
      %6540 = vst [vmem:[%s285 + $0x2f8] sm:$0xff] %v6412
      %6541 = vst [vmem:[%s285 + $0x300] sm:$0xff] %v6413
      %6542 = vst [vmem:[%s285 + $0x308] sm:$0xff] %v6414
      %6543 = vst [vmem:[%s285 + $0x310] sm:$0xff] %v6415
      %6544 = vst [vmem:[%s285 + $0x318] sm:$0xff] %v6416
      %6545 = vst [vmem:[%s285 + $0x320] sm:$0xff] %v6417
      %6546 = vst [vmem:[%s285 + $0x328] sm:$0xff] %v6418
      %6547 = vst [vmem:[%s285 + $0x330] sm:$0xff] %v6419
      %6548 = vst [vmem:[%s285 + $0x338] sm:$0xff] %v6420
      %6549 = vst [vmem:[%s285 + $0x340] sm:$0xff] %v6421
      %6550 = vst [vmem:[%s285 + $0x348] sm:$0xff] %v6422
      %6551 = vst [vmem:[%s285 + $0x350] sm:$0xff] %v6423
      %6552 = vst [vmem:[%s285 + $0x358] sm:$0xff] %v6424
      %6553 = vst [vmem:[%s285 + $0x360] sm:$0xff] %v6425
      %6554 = vst [vmem:[%s285 + $0x368] sm:$0xff] %v6426
      %6555 = vst [vmem:[%s285 + $0x370] sm:$0xff] %v6427
      %6556 = vst [vmem:[%s285 + $0x378] sm:$0xff] %v6428
      %6557 = vst [vmem:[%s285 + $0x380] sm:$0xff] %v6429
      %6558 = vst [vmem:[%s285 + $0x388] sm:$0xff] %v6430
      %6559 = vst [vmem:[%s285 + $0x390] sm:$0xff] %v6431
      %6560 = vst [vmem:[%s285 + $0x398] sm:$0xff] %v6432
      %6561 = vst [vmem:[%s285 + $0x3a0] sm:$0xff] %v6433
      %6562 = vst [vmem:[%s285 + $0x3a8] sm:$0xff] %v6434
      %6563 = vst [vmem:[%s285 + $0x3b0] sm:$0xff] %v6435
      %6564 = vst [vmem:[%s285 + $0x3b8] sm:$0xff] %v6436
      %6565 = vst [vmem:[%s285 + $0x3c0] sm:$0xff] %v6437
      %6566 = vst [vmem:[%s285 + $0x3c8] sm:$0xff] %v6438
      %6567 = vst [vmem:[%s285 + $0x3d0] sm:$0xff] %v6439
      %6568 = vst [vmem:[%s285 + $0x3d8] sm:$0xff] %v6440
      %6569 = vst [vmem:[%s285 + $0x3e0] sm:$0xff] %v6441
      %6570 = vst [vmem:[%s285 + $0x3e8] sm:$0xff] %v6442
      %6571 = vst [vmem:[%s285 + $0x3f0] sm:$0xff] %v6443
      %6572 = vst [vmem:[%s285 + $0x3f8] sm:$0xff] %v6444
      %s6573 = smul.u32 32, %s18
      %p6574 = scmp.lt.s32.totalorder %s6573, 63
      %s6575 = scalar_select %p6574, %s6573, 63
      %s6576 = smul.addr %s6575, 4
      %s6577 = smul.addr %s6576, 8
      %s6578 = scalar_lea.vmem %s7, %s6577
      // Predicated region
      $region49: #{style_vectorizer.1} parent=47 // pred_check
        %p6579 = pneg %p188
      $region50: #{style_vectorizer.1} parent=47 // pred_check_branch
        %6581 = sbr.rel (%p6579) target = $region52
      $region51: #{style_vectorizer.1} parent=47 // pred_region
        %s6582 = smul.u32 32, %s18
      $region52: #{style_vectorizer.1} parent=47 // pred_fallthru
        _
    $region48: #{style_vectorizer.1} parent=5 // pred_fallthru
      _
    %p6583 = scmp.le.s32.totalorder 2, %s13
    // Predicated region
    $region53: #{style_vectorizer.1} parent=5 // pred_check
      %p6584 = pneg %p6583
    $region54: #{style_vectorizer.1} parent=5 // pred_check_branch
      %6586 = sbr.rel (%p6584) target = $region56
    $region55: #{style_vectorizer.1} parent=5 // pred_region
      %s6587 = ssub.s32 %s13, 2
      // Predicated region
      $region57: #{style_vectorizer.1} parent=55 // pred_check
        %p6588 = pneg %p194
      $region58: #{style_vectorizer.1} parent=55 // pred_check_branch
        %6590 = sbr.rel (%p6588) target = $region60
      $region59: #{style_vectorizer.1} parent=55 // pred_region
        %s6591 = smul.u32 32, %s19
        %p6592 = scmp.lt.s32.totalorder %s6591, 63
        %s6593 = scalar_select %p6592, %s6591, 63
        %s6594 = smul.addr %s6593, 4
        %s6595 = smul.addr %s6594, 8
        %s6596 = scalar_lea.vmem %s7, %s6595
      $region60: #{style_vectorizer.1} parent=55 // pred_fallthru
        _
    $region56: #{style_vectorizer.1} parent=5 // pred_fallthru
      _
  $region6: #{style_vectorizer.1} parent=0 // loop_footer
    %s17 = sadd.s32 1, %s13
  $region7: #{style_vectorizer.1} parent=0 // loop_footer_branch
    %12 = sbr.rel target = $region3
  $region8: #{style_vectorizer.1} parent=0 // loop_exit
    _

</llo_original>
